<compile_context>
chip_gen: v5e
topology: v5e:2x2
jax: 0.10.0
libtpu: 0.0.40
codegen_flags: <defaults>
</compile_context>

<pallas_src>
import functools

import jax
import jax.numpy as jnp
from jax.experimental import pallas as pl
from jax.experimental.pallas import tpu as pltpu


# ---------------------------------------------------------------------------
# helpers
# ---------------------------------------------------------------------------
def _round_up(x, m):
    return ((x + m - 1) // m) * m


def _tile_and_pad(dim, align, max_tile):
    """Largest tile <= max_tile that is a multiple of `align` and divides the
    aligned (padded) dim; returns (tile, padded_dim)."""
    padded = _round_up(dim, align)
    tile = align
    t = align
    while t <= min(max_tile, padded):
        if padded % t == 0:
            tile = t
        t += align
    return tile, padded


def _pad2d(a, rows, cols):
    r, c = a.shape
    if r == rows and c == cols:
        return a
    return jnp.pad(a, ((0, rows - r), (0, cols - c)))


_VMEM_LIMIT = 48 * 1024 * 1024  # explicit scoped-VMEM budget (safe on v7x 64 MiB)


# ---------------------------------------------------------------------------
# Pallas kernel 1: tiled matmul + bias (+ optional ReLU), f32 accumulator
# ---------------------------------------------------------------------------
def _linear_kernel(x_ref, w_ref, b_ref, o_ref, acc_ref, *, activation):
    k = pl.program_id(2)

    @pl.when(k == 0)
    def _():
        acc_ref[...] = jnp.zeros_like(acc_ref)

    acc_ref[...] += jnp.dot(x_ref[...], w_ref[...],
                            preferred_element_type=jnp.float32)

    @pl.when(k == pl.num_programs(2) - 1)
    def _():
        out = acc_ref[...] + b_ref[...]          # bias only in the epilogue
        if activation == "relu":
            out = jnp.maximum(out, 0.0)
        o_ref[...] = out.astype(o_ref.dtype)


def pallas_linear(x, w, b=None, activation=None, *, max_tm=256, max_tn=512,
                  max_tk=1024):
    """y = x @ w + b (optionally ReLU).  x:(M,K) w:(K,N) b:(N,) -> (M,N) f32."""
    M, K = x.shape
    K2, N = w.shape
    assert K == K2, (K, K2)
    if b is None:
        b = jnp.zeros((N,), jnp.float32)

    tm, Mp = _tile_and_pad(M, 16, max_tm)       # 16: bf16 sublane packing
    tk, Kp = _tile_and_pad(K, 128, max_tk)
    tn, Np = _tile_and_pad(N, 128, max_tn)

    xp = _pad2d(x, Mp, Kp).astype(jnp.bfloat16)
    wp = _pad2d(w, Kp, Np).astype(jnp.bfloat16)
    bp = _pad2d(b.astype(jnp.float32).reshape(1, N), 1, Np)

    grid = (Mp // tm, Np // tn, Kp // tk)
    cost = pl.CostEstimate(
        flops=2 * Mp * Np * Kp,
        transcendentals=0,
        bytes_accessed=(Mp * Kp + Kp * Np) * 2 + Mp * Np * 4)

    out = pl.pallas_call(
        functools.partial(_linear_kernel, activation=activation),
        out_shape=jax.ShapeDtypeStruct((Mp, Np), jnp.float32),
        grid=grid,
        in_specs=[
            pl.BlockSpec((tm, tk), lambda i, j, k: (i, k)),
            pl.BlockSpec((tk, tn), lambda i, j, k: (k, j)),
            pl.BlockSpec((1, tn), lambda i, j, k: (0, j)),
        ],
        out_specs=pl.BlockSpec((tm, tn), lambda i, j, k: (i, j)),
        scratch_shapes=[pltpu.VMEM((tm, tn), jnp.float32)],
        compiler_params=pltpu.CompilerParams(
            dimension_semantics=("parallel", "parallel", "arbitrary"),
            vmem_limit_bytes=_VMEM_LIMIT),
        cost_estimate=cost,
    )(xp, wp, bp)
    return out[:M, :N]


# ---------------------------------------------------------------------------
# Pallas kernel 2: fused head
#   logits = relu((h0 + agg) @ W_out + b_out) @ W_lin + b_lin
# Intermediate (tm, H//5) stays in a VMEM scratch accumulator; no HBM trip.
# ---------------------------------------------------------------------------
def _fused_head_kernel(h0_ref, agg_ref, w1_ref, b1_ref, w2_ref, b2_ref,
                       o_ref, acc_ref):
    k = pl.program_id(1)

    @pl.when(k == 0)
    def _():
        acc_ref[...] = jnp.zeros_like(acc_ref)

    h = h0_ref[...] + agg_ref[...]               # bf16 VPU add, fused in-kernel
    acc_ref[...] += jnp.dot(h, w1_ref[...],
                            preferred_element_type=jnp.float32)

    @pl.when(k == pl.num_programs(1) - 1)
    def _():
        z = jnp.maximum(acc_ref[...] + b1_ref[...], 0.0).astype(jnp.bfloat16)
        out = jnp.dot(z, w2_ref[...], preferred_element_type=jnp.float32)
        o_ref[...] = (out + b2_ref[...]).astype(o_ref.dtype)


def pallas_fused_head(h0, agg, w1, b1, w2, b2, *, max_tm=256, max_tk=1024):
    M, K = h0.shape                 # K = hidden_size
    K1, H5 = w1.shape               # H5 = hidden_size // 5
    H5b, V = w2.shape
    assert K == K1 and H5 == H5b

    tm, Mp = _tile_and_pad(M, 16, max_tm)
    tk, Kp = _tile_and_pad(K, 128, max_tk)
    H5p = _round_up(H5, 128)
    Vp = _round_up(V, 128)

    h0p = _pad2d(h0, Mp, Kp).astype(jnp.bfloat16)
    aggp = _pad2d(agg, Mp, Kp).astype(jnp.bfloat16)
    w1p = _pad2d(w1, Kp, H5p).astype(jnp.bfloat16)
    b1p = _pad2d(b1.astype(jnp.float32).reshape(1, H5), 1, H5p)
    w2p = _pad2d(w2, H5p, Vp).astype(jnp.bfloat16)
    b2p = _pad2d(b2.astype(jnp.float32).reshape(1, V), 1, Vp)

    grid = (Mp // tm, Kp // tk)
    cost = pl.CostEstimate(
        flops=2 * Mp * Kp * H5p + 2 * Mp * H5p * Vp,
        transcendentals=0,
        bytes_accessed=(2 * Mp * Kp + Kp * H5p + H5p * Vp) * 2 + Mp * Vp * 4)

    out = pl.pallas_call(
        _fused_head_kernel,
        out_shape=jax.ShapeDtypeStruct((Mp, Vp), jnp.float32),
        grid=grid,
        in_specs=[
            pl.BlockSpec((tm, tk), lambda i, k: (i, k)),    # h0
            pl.BlockSpec((tm, tk), lambda i, k: (i, k)),    # agg
            pl.BlockSpec((tk, H5p), lambda i, k: (k, 0)),   # W_out
            pl.BlockSpec((1, H5p), lambda i, k: (0, 0)),    # b_out
            pl.BlockSpec((H5p, Vp), lambda i, k: (0, 0)),   # W_lin (resident)
            pl.BlockSpec((1, Vp), lambda i, k: (0, 0)),     # b_lin
        ],
        out_specs=pl.BlockSpec((tm, Vp), lambda i, k: (i, 0)),
        scratch_shapes=[pltpu.VMEM((tm, H5p), jnp.float32)],
        compiler_params=pltpu.CompilerParams(
            dimension_semantics=("parallel", "arbitrary"),
            vmem_limit_bytes=_VMEM_LIMIT),
        cost_estimate=cost,
    )(h0p, aggp, w1p, b1p, w2p, b2p)
    return out[:M, :V]


# ---------------------------------------------------------------------------
# Deterministic parameter construction (synthetic; no checkpoint load)
# ---------------------------------------------------------------------------
def _init_linear(key, fan_in, fan_out):
    kw, kb = jax.random.split(key)
    bound = 1.0 / jnp.sqrt(jnp.float32(fan_in))
    w = jax.random.uniform(kw, (fan_in, fan_out), jnp.float32, -bound, bound)
    b = jax.random.uniform(kb, (fan_out,), jnp.float32, -bound, bound)
    return w, b


def make_params(key, node_dim, edge_dim, hidden_size, vocab_size):
    k0, k1, k2, k3 = jax.random.split(key, 4)
    params = {}
    # --- stand-in pretrained GNN parameters ---
    params["gnn_in_w"], params["gnn_in_b"] = _init_linear(k0, node_dim, hidden_size)
    params["gnn_edge_w"], params["gnn_edge_b"] = _init_linear(k1, edge_dim, hidden_size)
    params["gnn_out_w"], params["gnn_out_b"] = _init_linear(
        k2, hidden_size, hidden_size // 5)
    # --- fine-tuning head: nn.Linear(hidden_size // 5, vocab_size) ---
    params["lin_w"], params["lin_b"] = _init_linear(k3, hidden_size // 5, vocab_size)
    return params


# ---------------------------------------------------------------------------
# Stand-in pretrained GNN message passing (everything dense -> MXU path)
# ---------------------------------------------------------------------------
def gnn_message_passing(params, nodes, edge_index, edge_attr):
    num_nodes = nodes.shape[0]

    # Node / edge embeddings on the MXU.
    h0 = pallas_linear(nodes, params["gnn_in_w"], params["gnn_in_b"],
                       activation="relu")                               # (N, H)
    e = pallas_linear(edge_attr, params["gnn_edge_w"], params["gnn_edge_b"])  # (E, H)

    # Message passing as a single dense incidence matmul so gather and
    # scatter-add both run on the MXU instead of XLA gather / segment_sum:
    #   msg = h0[src] + e == S @ h0 + e   (S = one_hot(src),   (E, N))
    #   agg = scatter_add(msg, dst) == Bm @ msg  (Bm = one_hot(dst)^T, (N, E))
    # and  Bm @ (S @ h0 + e) == [Bm@S | Bm] @ [h0 ; e]  -> one pallas GEMM.
    # TODO(synk): for large graphs replace the dense incidence matmul with a
    # PrefetchScalarGridSpec / manual-DMA row-gather + scatter kernel.
    src, dst = edge_index[0], edge_index[1]
    S = jax.nn.one_hot(src, num_nodes, dtype=jnp.float32)               # (E, N)
    Bm = jax.nn.one_hot(dst, num_nodes, dtype=jnp.float32).T            # (N, E)
    A = Bm @ S                                                          # (N, N) tiny
    C = jnp.concatenate([A, Bm], axis=1)                                # (N, N+E)
    X = jnp.concatenate([h0, e], axis=0)                                # (N+E, H)
    agg = pallas_linear(C, X)                                           # (N, H)
    return h0, agg


# ---------------------------------------------------------------------------
# FineTuningModel.forward
#   vst, x = self.gnn(...)   ;   x = self.linear(x)
# The graph-level readout `vst` is discarded by forward(), so it is not
# materialized; the GNN output projection and the Linear head are fused.
# ---------------------------------------------------------------------------
def fine_tuning_forward(params, nodes, edge_index, edge_index_readout,
                        edge_attr, batch):
    del edge_index_readout, batch  # only feed the unused readout branch
    h0, agg = gnn_message_passing(params, nodes, edge_index, edge_attr)
    # Fused: logits = relu((h0+agg) @ W_out + b_out) @ W_lin + b_lin
    return pallas_fused_head(h0, agg,
                             params["gnn_out_w"], params["gnn_out_b"],
                             params["lin_w"], params["lin_b"])


# ---------------------------------------------------------------------------
if __name__ == "__main__":
    # Small, deterministic problem sizes, chosen lane-dense:
    # hidden_size // 5 == 128 and vocab_size == 128 -> unmasked full-lane stores.
    num_nodes = 64
    num_edges = 128
    node_dim = 16
    edge_dim = 8
    hidden_size = 640          # hidden_size // 5 == 128
    vocab_size = 128

    root = jax.random.PRNGKey(0)
    k_nodes, k_edges, k_eattr, k_params, k_ro = jax.random.split(root, 5)

    nodes = jax.random.normal(k_nodes, (num_nodes, node_dim), jnp.float32)
    edge_index = jax.random.randint(k_edges, (2, num_edges), 0, num_nodes,
                                    dtype=jnp.int32)
    edge_index_readout = jax.random.randint(k_ro, (2, num_edges), 0, num_nodes,
                                            dtype=jnp.int32)
    edge_attr = jax.random.normal(k_eattr, (num_edges, edge_dim), jnp.float32)
    batch = jnp.concatenate([
        jnp.zeros((num_nodes // 2,), jnp.int32),
        jnp.ones((num_nodes - num_nodes // 2,), jnp.int32),
    ])

    params = make_params(k_params, node_dim, edge_dim, hidden_size, vocab_size)

    fwd = jax.jit(fine_tuning_forward)
    out = fwd(params, nodes, edge_index, edge_index_readout, edge_attr, batch)
    out = jax.block_until_ready(out)

    assert out.shape == (num_nodes, vocab_size), out.shape
    assert bool(jnp.all(jnp.isfinite(out)))
    print("KERNEL_OK")
</pallas_src>

<mosaic_0001>
module attributes {stable_mosaic.version = 11 : i64} {
  func.func @_linear_kernel(%arg0: i32, %arg1: i32, %arg2: i32, %arg3: memref<64x128xbf16, #tpu.memory_space<vmem>>, %arg4: memref<128x128xbf16, #tpu.memory_space<vmem>>, %arg5: memref<1x128xf32, #tpu.memory_space<vmem>>, %arg6: memref<64x128xf32, #tpu.memory_space<vmem>>, %arg7: memref<64x128xf32, #tpu.memory_space<vmem>>) attributes {dimension_semantics = [#tpu.dimension_semantics<parallel>, #tpu.dimension_semantics<parallel>, #tpu.dimension_semantics<arbitrary>], iteration_bounds = array<i64: 1, 5, 1>, scalar_prefetch = 0 : i64, scratch_operands = 1 : i64, tpu.core_type = #tpu.core_type<tc>, window_params = [{transform_indices = @transform_0, window_bounds = array<i64: 64, 128>}, {transform_indices = @transform_1, window_bounds = array<i64: 128, 128>}, {transform_indices = @transform_2, window_bounds = array<i64: 1, 128>}, {transform_indices = @transform_3, window_bounds = array<i64: 64, 128>}]} {
    %c0_i32 = arith.constant 0 : i32
    %0 = arith.cmpi eq, %arg2, %c0_i32 : i32
    %1 = arith.extui %0 : i1 to i32
    %c0_i32_0 = arith.constant 0 : i32
    %2 = arith.cmpi ne, %1, %c0_i32_0 : i32
    scf.if %2 {
      %cst_10 = arith.constant 0.000000e+00 : f32
      %12 = vector.broadcast %cst_10 : f32 to vector<64x128xf32>
      %c0_11 = arith.constant 0 : index
      %c0_12 = arith.constant 0 : index
      %13 = vector.load %arg7[%c0_11, %c0_12] : memref<64x128xf32, #tpu.memory_space<vmem>>, vector<64x128xf32>
      tpu.vector_store %arg7[%c0_11, %c0_12], %12 {strides = array<i32>} : memref<64x128xf32, #tpu.memory_space<vmem>>, vector<64x128xf32>,
    } else {
    }
    %c0 = arith.constant 0 : index
    %c0_1 = arith.constant 0 : index
    %3 = vector.load %arg7[%c0, %c0_1] : memref<64x128xf32, #tpu.memory_space<vmem>>, vector<64x128xf32>
    %c0_2 = arith.constant 0 : index
    %c0_3 = arith.constant 0 : index
    %4 = vector.load %arg3[%c0_2, %c0_3] : memref<64x128xbf16, #tpu.memory_space<vmem>>, vector<64x128xbf16>
    %c0_4 = arith.constant 0 : index
    %c0_5 = arith.constant 0 : index
    %5 = vector.load %arg4[%c0_4, %c0_5] : memref<128x128xbf16, #tpu.memory_space<vmem>>, vector<128x128xbf16>
    %cst = arith.constant dense<0.000000e+00> : vector<64x128xf32>
    %6 = tpu.matmul %4, %5, %cst {dimension_numbers = #tpu.dot_dimension_numbers<[1], [0], [0], [1], [0, 0, 1, 1], [], []>} : vector<64x128xbf16>, vector<128x128xbf16>, vector<64x128xf32> -> vector<64x128xf32>
    %7 = arith.addf %3, %6 : vector<64x128xf32>
    %c0_6 = arith.constant 0 : index
    %c0_7 = arith.constant 0 : index
    %8 = vector.load %arg7[%c0_6, %c0_7] : memref<64x128xf32, #tpu.memory_space<vmem>>, vector<64x128xf32>
    tpu.vector_store %arg7[%c0_6, %c0_7], %7 {strides = array<i32>} : memref<64x128xf32, #tpu.memory_space<vmem>>, vector<64x128xf32>,
    %c0_i32_8 = arith.constant 0 : i32
    %9 = arith.cmpi eq, %arg2, %c0_i32_8 : i32
    %10 = arith.extui %9 : i1 to i32
    %c0_i32_9 = arith.constant 0 : i32
    %11 = arith.cmpi ne, %10, %c0_i32_9 : i32
    scf.if %11 {
      %c0_10 = arith.constant 0 : index
      %c0_11 = arith.constant 0 : index
      %12 = vector.load %arg7[%c0_10, %c0_11] : memref<64x128xf32, #tpu.memory_space<vmem>>, vector<64x128xf32>
      %c0_12 = arith.constant 0 : index
      %c0_13 = arith.constant 0 : index
      %13 = vector.load %arg5[%c0_12, %c0_13] : memref<1x128xf32, #tpu.memory_space<vmem>>, vector<1x128xf32>
      %14 = vector.broadcast %13 : vector<1x128xf32> to vector<64x128xf32>
      %15 = arith.addf %12, %14 : vector<64x128xf32>
      %cst_14 = arith.constant 0.000000e+00 : f32
      %16 = vector.broadcast %cst_14 : f32 to vector<64x128xf32>
      %17 = arith.maximumf %15, %16 : vector<64x128xf32>
      %c0_15 = arith.constant 0 : index
      %c0_16 = arith.constant 0 : index
      %18 = vector.load %arg6[%c0_15, %c0_16] : memref<64x128xf32, #tpu.memory_space<vmem>>, vector<64x128xf32>
      tpu.vector_store %arg6[%c0_15, %c0_16], %17 {strides = array<i32>} : memref<64x128xf32, #tpu.memory_space<vmem>>, vector<64x128xf32>,
    } else {
    }
    return
  }
  func.func @transform_0(%arg0: i32, %arg1: i32, %arg2: i32) -> (i32, i32) {
    %c0_i32 = arith.constant 0 : i32
    return %arg0, %arg2 : i32, i32
  }
  func.func @transform_1(%arg0: i32, %arg1: i32, %arg2: i32) -> (i32, i32) {
    %c0_i32 = arith.constant 0 : i32
    return %arg2, %arg1 : i32, i32
  }
  func.func @transform_2(%arg0: i32, %arg1: i32, %arg2: i32) -> (i32, i32) {
    %c0_i32 = arith.constant 0 : i32
    %c0_i32_0 = arith.constant 0 : i32
    return %c0_i32, %arg1 : i32, i32
  }
  func.func @transform_3(%arg0: i32, %arg1: i32, %arg2: i32) -> (i32, i32) {
    %c0_i32 = arith.constant 0 : i32
    return %arg0, %arg1 : i32, i32
  }
}

module attributes {stable_mosaic.version = 11 : i64} {
  func.func @_linear_kernel(%arg0: i32, %arg1: i32, %arg2: i32, %arg3: memref<128x128xbf16, #tpu.memory_space<vmem>>, %arg4: memref<128x128xbf16, #tpu.memory_space<vmem>>, %arg5: memref<1x128xf32, #tpu.memory_space<vmem>>, %arg6: memref<128x128xf32, #tpu.memory_space<vmem>>, %arg7: memref<128x128xf32, #tpu.memory_space<vmem>>) attributes {dimension_semantics = [#tpu.dimension_semantics<parallel>, #tpu.dimension_semantics<parallel>, #tpu.dimension_semantics<arbitrary>], iteration_bounds = array<i64: 1, 5, 1>, scalar_prefetch = 0 : i64, scratch_operands = 1 : i64, tpu.core_type = #tpu.core_type<tc>, window_params = [{transform_indices = @transform_0, window_bounds = array<i64: 128, 128>}, {transform_indices = @transform_1, window_bounds = array<i64: 128, 128>}, {transform_indices = @transform_2, window_bounds = array<i64: 1, 128>}, {transform_indices = @transform_3, window_bounds = array<i64: 128, 128>}]} {
    %c0_i32 = arith.constant 0 : i32
    %0 = arith.cmpi eq, %arg2, %c0_i32 : i32
    %1 = arith.extui %0 : i1 to i32
    %c0_i32_0 = arith.constant 0 : i32
    %2 = arith.cmpi ne, %1, %c0_i32_0 : i32
    scf.if %2 {
      %cst_10 = arith.constant 0.000000e+00 : f32
      %12 = vector.broadcast %cst_10 : f32 to vector<128x128xf32>
      %c0_11 = arith.constant 0 : index
      %c0_12 = arith.constant 0 : index
      %13 = vector.load %arg7[%c0_11, %c0_12] : memref<128x128xf32, #tpu.memory_space<vmem>>, vector<128x128xf32>
      tpu.vector_store %arg7[%c0_11, %c0_12], %12 {strides = array<i32>} : memref<128x128xf32, #tpu.memory_space<vmem>>, vector<128x128xf32>,
    } else {
    }
    %c0 = arith.constant 0 : index
    %c0_1 = arith.constant 0 : index
    %3 = vector.load %arg7[%c0, %c0_1] : memref<128x128xf32, #tpu.memory_space<vmem>>, vector<128x128xf32>
    %c0_2 = arith.constant 0 : index
    %c0_3 = arith.constant 0 : index
    %4 = vector.load %arg3[%c0_2, %c0_3] : memref<128x128xbf16, #tpu.memory_space<vmem>>, vector<128x128xbf16>
    %c0_4 = arith.constant 0 : index
    %c0_5 = arith.constant 0 : index
    %5 = vector.load %arg4[%c0_4, %c0_5] : memref<128x128xbf16, #tpu.memory_space<vmem>>, vector<128x128xbf16>
    %cst = arith.constant dense<0.000000e+00> : vector<128x128xf32>
    %6 = tpu.matmul %4, %5, %cst {dimension_numbers = #tpu.dot_dimension_numbers<[1], [0], [0], [1], [0, 0, 1, 1], [], []>} : vector<128x128xbf16>, vector<128x128xbf16>, vector<128x128xf32> -> vector<128x128xf32>
    %7 = arith.addf %3, %6 : vector<128x128xf32>
    %c0_6 = arith.constant 0 : index
    %c0_7 = arith.constant 0 : index
    %8 = vector.load %arg7[%c0_6, %c0_7] : memref<128x128xf32, #tpu.memory_space<vmem>>, vector<128x128xf32>
    tpu.vector_store %arg7[%c0_6, %c0_7], %7 {strides = array<i32>} : memref<128x128xf32, #tpu.memory_space<vmem>>, vector<128x128xf32>,
    %c0_i32_8 = arith.constant 0 : i32
    %9 = arith.cmpi eq, %arg2, %c0_i32_8 : i32
    %10 = arith.extui %9 : i1 to i32
    %c0_i32_9 = arith.constant 0 : i32
    %11 = arith.cmpi ne, %10, %c0_i32_9 : i32
    scf.if %11 {
      %c0_10 = arith.constant 0 : index
      %c0_11 = arith.constant 0 : index
      %12 = vector.load %arg7[%c0_10, %c0_11] : memref<128x128xf32, #tpu.memory_space<vmem>>, vector<128x128xf32>
      %c0_12 = arith.constant 0 : index
      %c0_13 = arith.constant 0 : index
      %13 = vector.load %arg5[%c0_12, %c0_13] : memref<1x128xf32, #tpu.memory_space<vmem>>, vector<1x128xf32>
      %14 = vector.broadcast %13 : vector<1x128xf32> to vector<128x128xf32>
      %15 = arith.addf %12, %14 : vector<128x128xf32>
      %c0_14 = arith.constant 0 : index
      %c0_15 = arith.constant 0 : index
      %16 = vector.load %arg6[%c0_14, %c0_15] : memref<128x128xf32, #tpu.memory_space<vmem>>, vector<128x128xf32>
      tpu.vector_store %arg6[%c0_14, %c0_15], %15 {strides = array<i32>} : memref<128x128xf32, #tpu.memory_space<vmem>>, vector<128x128xf32>,
    } else {
    }
    return
  }
  func.func @transform_0(%arg0: i32, %arg1: i32, %arg2: i32) -> (i32, i32) {
    %c0_i32 = arith.constant 0 : i32
    return %arg0, %arg2 : i32, i32
  }
  func.func @transform_1(%arg0: i32, %arg1: i32, %arg2: i32) -> (i32, i32) {
    %c0_i32 = arith.constant 0 : i32
    return %arg2, %arg1 : i32, i32
  }
  func.func @transform_2(%arg0: i32, %arg1: i32, %arg2: i32) -> (i32, i32) {
    %c0_i32 = arith.constant 0 : i32
    %c0_i32_0 = arith.constant 0 : i32
    return %c0_i32, %arg1 : i32, i32
  }
  func.func @transform_3(%arg0: i32, %arg1: i32, %arg2: i32) -> (i32, i32) {
    %c0_i32 = arith.constant 0 : i32
    return %arg0, %arg1 : i32, i32
  }
}

module attributes {stable_mosaic.version = 11 : i64} {
  func.func @_linear_kernel(%arg0: i32, %arg1: i32, %arg2: i32, %arg3: memref<64x256xbf16, #tpu.memory_space<vmem>>, %arg4: memref<256x128xbf16, #tpu.memory_space<vmem>>, %arg5: memref<1x128xf32, #tpu.memory_space<vmem>>, %arg6: memref<64x128xf32, #tpu.memory_space<vmem>>, %arg7: memref<64x128xf32, #tpu.memory_space<vmem>>) attributes {dimension_semantics = [#tpu.dimension_semantics<parallel>, #tpu.dimension_semantics<parallel>, #tpu.dimension_semantics<arbitrary>], iteration_bounds = array<i64: 1, 5, 1>, scalar_prefetch = 0 : i64, scratch_operands = 1 : i64, tpu.core_type = #tpu.core_type<tc>, window_params = [{transform_indices = @transform_0, window_bounds = array<i64: 64, 256>}, {transform_indices = @transform_1, window_bounds = array<i64: 256, 128>}, {transform_indices = @transform_2, window_bounds = array<i64: 1, 128>}, {transform_indices = @transform_3, window_bounds = array<i64: 64, 128>}]} {
    %c0_i32 = arith.constant 0 : i32
    %0 = arith.cmpi eq, %arg2, %c0_i32 : i32
    %1 = arith.extui %0 : i1 to i32
    %c0_i32_0 = arith.constant 0 : i32
    %2 = arith.cmpi ne, %1, %c0_i32_0 : i32
    scf.if %2 {
      %cst_10 = arith.constant 0.000000e+00 : f32
      %12 = vector.broadcast %cst_10 : f32 to vector<64x128xf32>
      %c0_11 = arith.constant 0 : index
      %c0_12 = arith.constant 0 : index
      %13 = vector.load %arg7[%c0_11, %c0_12] : memref<64x128xf32, #tpu.memory_space<vmem>>, vector<64x128xf32>
      tpu.vector_store %arg7[%c0_11, %c0_12], %12 {strides = array<i32>} : memref<64x128xf32, #tpu.memory_space<vmem>>, vector<64x128xf32>,
    } else {
    }
    %c0 = arith.constant 0 : index
    %c0_1 = arith.constant 0 : index
    %3 = vector.load %arg7[%c0, %c0_1] : memref<64x128xf32, #tpu.memory_space<vmem>>, vector<64x128xf32>
    %c0_2 = arith.constant 0 : index
    %c0_3 = arith.constant 0 : index
    %4 = vector.load %arg3[%c0_2, %c0_3] : memref<64x256xbf16, #tpu.memory_space<vmem>>, vector<64x256xbf16>
    %c0_4 = arith.constant 0 : index
    %c0_5 = arith.constant 0 : index
    %5 = vector.load %arg4[%c0_4, %c0_5] : memref<256x128xbf16, #tpu.memory_space<vmem>>, vector<256x128xbf16>
    %cst = arith.constant dense<0.000000e+00> : vector<64x128xf32>
    %6 = tpu.matmul %4, %5, %cst {dimension_numbers = #tpu.dot_dimension_numbers<[1], [0], [0], [1], [0, 0, 1, 1], [], []>} : vector<64x256xbf16>, vector<256x128xbf16>, vector<64x128xf32> -> vector<64x128xf32>
    %7 = arith.addf %3, %6 : vector<64x128xf32>
    %c0_6 = arith.constant 0 : index
    %c0_7 = arith.constant 0 : index
    %8 = vector.load %arg7[%c0_6, %c0_7] : memref<64x128xf32, #tpu.memory_space<vmem>>, vector<64x128xf32>
    tpu.vector_store %arg7[%c0_6, %c0_7], %7 {strides = array<i32>} : memref<64x128xf32, #tpu.memory_space<vmem>>, vector<64x128xf32>,
    %c0_i32_8 = arith.constant 0 : i32
    %9 = arith.cmpi eq, %arg2, %c0_i32_8 : i32
    %10 = arith.extui %9 : i1 to i32
    %c0_i32_9 = arith.constant 0 : i32
    %11 = arith.cmpi ne, %10, %c0_i32_9 : i32
    scf.if %11 {
      %c0_10 = arith.constant 0 : index
      %c0_11 = arith.constant 0 : index
      %12 = vector.load %arg7[%c0_10, %c0_11] : memref<64x128xf32, #tpu.memory_space<vmem>>, vector<64x128xf32>
      %c0_12 = arith.constant 0 : index
      %c0_13 = arith.constant 0 : index
      %13 = vector.load %arg5[%c0_12, %c0_13] : memref<1x128xf32, #tpu.memory_space<vmem>>, vector<1x128xf32>
      %14 = vector.broadcast %13 : vector<1x128xf32> to vector<64x128xf32>
      %15 = arith.addf %12, %14 : vector<64x128xf32>
      %c0_14 = arith.constant 0 : index
      %c0_15 = arith.constant 0 : index
      %16 = vector.load %arg6[%c0_14, %c0_15] : memref<64x128xf32, #tpu.memory_space<vmem>>, vector<64x128xf32>
      tpu.vector_store %arg6[%c0_14, %c0_15], %15 {strides = array<i32>} : memref<64x128xf32, #tpu.memory_space<vmem>>, vector<64x128xf32>,
    } else {
    }
    return
  }
  func.func @transform_0(%arg0: i32, %arg1: i32, %arg2: i32) -> (i32, i32) {
    %c0_i32 = arith.constant 0 : i32
    return %arg0, %arg2 : i32, i32
  }
  func.func @transform_1(%arg0: i32, %arg1: i32, %arg2: i32) -> (i32, i32) {
    %c0_i32 = arith.constant 0 : i32
    return %arg2, %arg1 : i32, i32
  }
  func.func @transform_2(%arg0: i32, %arg1: i32, %arg2: i32) -> (i32, i32) {
    %c0_i32 = arith.constant 0 : i32
    %c0_i32_0 = arith.constant 0 : i32
    return %c0_i32, %arg1 : i32, i32
  }
  func.func @transform_3(%arg0: i32, %arg1: i32, %arg2: i32) -> (i32, i32) {
    %c0_i32 = arith.constant 0 : i32
    return %arg0, %arg1 : i32, i32
  }
}

module attributes {stable_mosaic.version = 11 : i64} {
  func.func @_fused_head_kernel(%arg0: i32, %arg1: i32, %arg2: memref<64x640xbf16, #tpu.memory_space<vmem>>, %arg3: memref<64x640xbf16, #tpu.memory_space<vmem>>, %arg4: memref<640x128xbf16, #tpu.memory_space<vmem>>, %arg5: memref<1x128xf32, #tpu.memory_space<vmem>>, %arg6: memref<128x128xbf16, #tpu.memory_space<vmem>>, %arg7: memref<1x128xf32, #tpu.memory_space<vmem>>, %arg8: memref<64x128xf32, #tpu.memory_space<vmem>>, %arg9: memref<64x128xf32, #tpu.memory_space<vmem>>) attributes {dimension_semantics = [#tpu.dimension_semantics<parallel>, #tpu.dimension_semantics<arbitrary>], iteration_bounds = array<i64: 1, 1>, scalar_prefetch = 0 : i64, scratch_operands = 1 : i64, tpu.core_type = #tpu.core_type<tc>, window_params = [{transform_indices = @transform_0, window_bounds = array<i64: 64, 640>}, {transform_indices = @transform_1, window_bounds = array<i64: 64, 640>}, {transform_indices = @transform_2, window_bounds = array<i64: 640, 128>}, {pipeline_mode = #tpu.pipeline_mode<synchronous>, transform_indices = @transform_3, window_bounds = array<i64: 1, 128>}, {pipeline_mode = #tpu.pipeline_mode<synchronous>, transform_indices = @transform_4, window_bounds = array<i64: 128, 128>}, {pipeline_mode = #tpu.pipeline_mode<synchronous>, transform_indices = @transform_5, window_bounds = array<i64: 1, 128>}, {transform_indices = @transform_6, window_bounds = array<i64: 64, 128>}]} {
    %c0_i32 = arith.constant 0 : i32
    %0 = arith.cmpi eq, %arg1, %c0_i32 : i32
    %1 = arith.extui %0 : i1 to i32
    %c0_i32_0 = arith.constant 0 : i32
    %2 = arith.cmpi ne, %1, %c0_i32_0 : i32
    scf.if %2 {
      %cst_12 = arith.constant 0.000000e+00 : f32
      %14 = vector.broadcast %cst_12 : f32 to vector<64x128xf32>
      %c0_13 = arith.constant 0 : index
      %c0_14 = arith.constant 0 : index
      %15 = vector.load %arg9[%c0_13, %c0_14] : memref<64x128xf32, #tpu.memory_space<vmem>>, vector<64x128xf32>
      tpu.vector_store %arg9[%c0_13, %c0_14], %14 {strides = array<i32>} : memref<64x128xf32, #tpu.memory_space<vmem>>, vector<64x128xf32>,
    } else {
    }
    %c0 = arith.constant 0 : index
    %c0_1 = arith.constant 0 : index
    %3 = vector.load %arg2[%c0, %c0_1] : memref<64x640xbf16, #tpu.memory_space<vmem>>, vector<64x640xbf16>
    %c0_2 = arith.constant 0 : index
    %c0_3 = arith.constant 0 : index
    %4 = vector.load %arg3[%c0_2, %c0_3] : memref<64x640xbf16, #tpu.memory_space<vmem>>, vector<64x640xbf16>
    %5 = arith.addf %3, %4 : vector<64x640xbf16>
    %c0_4 = arith.constant 0 : index
    %c0_5 = arith.constant 0 : index
    %6 = vector.load %arg9[%c0_4, %c0_5] : memref<64x128xf32, #tpu.memory_space<vmem>>, vector<64x128xf32>
    %c0_6 = arith.constant 0 : index
    %c0_7 = arith.constant 0 : index
    %7 = vector.load %arg4[%c0_6, %c0_7] : memref<640x128xbf16, #tpu.memory_space<vmem>>, vector<640x128xbf16>
    %cst = arith.constant dense<0.000000e+00> : vector<64x128xf32>
    %8 = tpu.matmul %5, %7, %cst {dimension_numbers = #tpu.dot_dimension_numbers<[1], [0], [0], [1], [0, 0, 1, 1], [], []>} : vector<64x640xbf16>, vector<640x128xbf16>, vector<64x128xf32> -> vector<64x128xf32>
    %9 = arith.addf %6, %8 : vector<64x128xf32>
    %c0_8 = arith.constant 0 : index
    %c0_9 = arith.constant 0 : index
    %10 = vector.load %arg9[%c0_8, %c0_9] : memref<64x128xf32, #tpu.memory_space<vmem>>, vector<64x128xf32>
    tpu.vector_store %arg9[%c0_8, %c0_9], %9 {strides = array<i32>} : memref<64x128xf32, #tpu.memory_space<vmem>>, vector<64x128xf32>,
    %c0_i32_10 = arith.constant 0 : i32
    %11 = arith.cmpi eq, %arg1, %c0_i32_10 : i32
    %12 = arith.extui %11 : i1 to i32
    %c0_i32_11 = arith.constant 0 : i32
    %13 = arith.cmpi ne, %12, %c0_i32_11 : i32
    scf.if %13 {
      %c0_12 = arith.constant 0 : index
      %c0_13 = arith.constant 0 : index
      %14 = vector.load %arg9[%c0_12, %c0_13] : memref<64x128xf32, #tpu.memory_space<vmem>>, vector<64x128xf32>
      %c0_14 = arith.constant 0 : index
      %c0_15 = arith.constant 0 : index
      %15 = vector.load %arg5[%c0_14, %c0_15] : memref<1x128xf32, #tpu.memory_space<vmem>>, vector<1x128xf32>
      %16 = vector.broadcast %15 : vector<1x128xf32> to vector<64x128xf32>
      %17 = arith.addf %14, %16 : vector<64x128xf32>
      %cst_16 = arith.constant 0.000000e+00 : f32
      %18 = vector.broadcast %cst_16 : f32 to vector<64x128xf32>
      %19 = arith.maximumf %17, %18 : vector<64x128xf32>
      %20 = arith.truncf %19 : vector<64x128xf32> to vector<64x128xbf16>
      %c0_17 = arith.constant 0 : index
      %c0_18 = arith.constant 0 : index
      %21 = vector.load %arg6[%c0_17, %c0_18] : memref<128x128xbf16, #tpu.memory_space<vmem>>, vector<128x128xbf16>
      %cst_19 = arith.constant dense<0.000000e+00> : vector<64x128xf32>
      %22 = tpu.matmul %20, %21, %cst_19 {dimension_numbers = #tpu.dot_dimension_numbers<[1], [0], [0], [1], [0, 0, 1, 1], [], []>} : vector<64x128xbf16>, vector<128x128xbf16>, vector<64x128xf32> -> vector<64x128xf32>
      %c0_20 = arith.constant 0 : index
      %c0_21 = arith.constant 0 : index
      %23 = vector.load %arg7[%c0_20, %c0_21] : memref<1x128xf32, #tpu.memory_space<vmem>>, vector<1x128xf32>
      %24 = vector.broadcast %23 : vector<1x128xf32> to vector<64x128xf32>
      %25 = arith.addf %22, %24 : vector<64x128xf32>
      %c0_22 = arith.constant 0 : index
      %c0_23 = arith.constant 0 : index
      %26 = vector.load %arg8[%c0_22, %c0_23] : memref<64x128xf32, #tpu.memory_space<vmem>>, vector<64x128xf32>
      tpu.vector_store %arg8[%c0_22, %c0_23], %25 {strides = array<i32>} : memref<64x128xf32, #tpu.memory_space<vmem>>, vector<64x128xf32>,
    } else {
    }
    return
  }
  func.func @transform_0(%arg0: i32, %arg1: i32) -> (i32, i32) {
    %c0_i32 = arith.constant 0 : i32
    return %arg0, %arg1 : i32, i32
  }
  func.func @transform_1(%arg0: i32, %arg1: i32) -> (i32, i32) {
    %c0_i32 = arith.constant 0 : i32
    return %arg0, %arg1 : i32, i32
  }
  func.func @transform_2(%arg0: i32, %arg1: i32) -> (i32, i32) {
    %c0_i32 = arith.constant 0 : i32
    %c0_i32_0 = arith.constant 0 : i32
    return %arg1, %c0_i32 : i32, i32
  }
  func.func @transform_3(%arg0: i32, %arg1: i32) -> (i32, i32) {
    %c0_i32 = arith.constant 0 : i32
    %c0_i32_0 = arith.constant 0 : i32
    %c0_i32_1 = arith.constant 0 : i32
    return %c0_i32, %c0_i32_0 : i32, i32
  }
  func.func @transform_4(%arg0: i32, %arg1: i32) -> (i32, i32) {
    %c0_i32 = arith.constant 0 : i32
    %c0_i32_0 = arith.constant 0 : i32
    %c0_i32_1 = arith.constant 0 : i32
    return %c0_i32, %c0_i32_0 : i32, i32
  }
  func.func @transform_5(%arg0: i32, %arg1: i32) -> (i32, i32) {
    %c0_i32 = arith.constant 0 : i32
    %c0_i32_0 = arith.constant 0 : i32
    %c0_i32_1 = arith.constant 0 : i32
    return %c0_i32, %c0_i32_0 : i32, i32
  }
  func.func @transform_6(%arg0: i32, %arg1: i32) -> (i32, i32) {
    %c0_i32 = arith.constant 0 : i32
    %c0_i32_0 = arith.constant 0 : i32
    return %arg0, %c0_i32 : i32, i32
  }
}

</mosaic_0001>

<llo_original>
// kernel: fine_tuning_forward.5
$region0: #{fine_tuning_forward.5}
  #allocation0 [shape = 'u32[]', space=smem, size = 0x4, offset = 0x4, fixed_abs, tag = 'smem constant byte address 0x4 - core index']
  #allocation1 [shape = 'u32[72,128]{1,0:T(1,128)}', space=vmem, size = 0x9000, scoped, tag = 'internal scratch']
  #allocation2 [shape = 'f32[128,128]{1,0:T(8,128)}', space=vmem, size = 0x10000, scoped, tag = 'scratch operand']
  %s0 = inlined_call_operand.vmem [shape: bf16[128,128], index: 0, kind: input, shape index: {}]
  %s1 = inlined_call_operand.vmem [shape: bf16[128,640], index: 1, kind: input, shape index: {}]
  %s2 = inlined_call_operand.vmem [shape: f32[1,640], index: 2, kind: input, shape index: {}]
  %s3 = inlined_call_operand.vmem [shape: f32[128,640], index: 3, kind: output, shape index: {}]
  %s4 = sld [smem:[#allocation0]]
  $region128: #{fine_tuning_forward.5} parent=0
    _
  %s6 = ssub.s32 1, %s4
  %s7 = scalar_select 0, %s6, %s4
  $region1: #{fine_tuning_forward.5} parent=0
    #allocation3 [shape = 'u8[65536]{0}', space=vmem, size = 0x10000, scoped, tag = 'input window, operand 1']
    #allocation4 [shape = 'u8[131072]{0}', space=vmem, size = 0x20000, scoped, tag = 'output window, operand 0']
    loop: start=0, step=1, limit=7
    $region2: #{fine_tuning_forward.5} parent=1 // loop_pre_header
      _
    $region3: #{fine_tuning_forward.5} parent=1 // loop_header
      %s9 = sphi 0, %s13
      %p10 = scmp.ge.s32.totalorder %s9, 7
      %s16 = sphi 0, %s35
      %s17 = sphi 0, %s31
      %s18 = sphi 0, %s27
      %s19 = sphi 0, %s16
      %s20 = sphi 0, %s17
      %s21 = sphi 0, %s18
      %s22 = sphi 0, %s19
      %s23 = sphi 0, %s20
      %s24 = sphi 0, %s21
      %s40 = sphi 0, %s42
      %s43 = sphi 0, %s40
      %s44 = sphi 0, %s43
      %s60 = sphi 0, %s44
      %s68 = sphi 0, %s70
      %s71 = sphi 0, %s68
      %s72 = sphi 0, %s71
      %s88 = sphi 0, %s72
      %s94 = sphi 0, %s96
      %s97 = sphi 0, %s94
      %s98 = sphi 0, %s97
      %s114 = sphi 0, %s98
      %s122 = sphi 0, %s124
      %s125 = sphi 0, %s122
      %s126 = sphi 0, %s125
      %s142 = sphi 0, %s126
    $region4: #{fine_tuning_forward.5} parent=1 // loop_header_branch
      %12 = sbr.rel (%p10) target = $region8
    $region5: #{fine_tuning_forward.5} parent=1 // loop_body
      %s14 = ssub.s32 %s9, 1
      %s15 = ssub.s32 %s9, 2
      %s25 = sadd.s32 1, %s18
      %p26 = scmp.ge.s32.totalorder %s25, 1
      %s27 = scalar_select %p26, 0, %s25
      %s28 = sadd.s32 1, %s17
      %s29 = scalar_select %p26, %s28, %s17
      %p30 = scmp.ge.s32.totalorder %s29, 5
      %s31 = scalar_select %p30, 0, %s29
      %s32 = sadd.s32 1, %s16
      %s33 = scalar_select %p30, %s32, %s16
      %p34 = scmp.ge.s32.totalorder %s33, 1
      %s35 = scalar_select %p34, 0, %s33
      %s36 = ssub.s32 %s16, %s35
      %s37 = ssub.s32 %s18, %s27
      %s38 = sor.u32 %s36, %s37
      %p39 = scmp.eq.s32.totalorder %s38, 0
      %s41 = sadd.s32 %s40, 1
      %s42 = scalar_select %p39, %s40, %s41
      %p45 = pneg %p39
      %p46 = scmp.eq.s32.totalorder %s9, 4
      %p47 = por %p45, %p46
      %p48 = scmp.ne.s32.totalorder %s40, %s43
      %p49 = scmp.eq.s32.totalorder %s9, 0
      %p50 = por %p48, %p49
      %p51 = scmp.ne.s32.totalorder %s40, %s43
      %p52 = scmp.eq.s32.totalorder %s14, 4
      %p53 = por %p51, %p52
      %p54 = scmp.ne.s32.totalorder %s43, %s44
      %p55 = scmp.eq.s32.totalorder %s14, 0
      %p56 = por %p54, %p55
      %p57 = scmp.ne.s32.totalorder %s43, %s44
      %p58 = scmp.eq.s32.totalorder %s15, 4
      %p59 = por %p57, %p58
      %p61 = scmp.ne.s32.totalorder %s44, %s60
      %p62 = scmp.eq.s32.totalorder %s15, 0
      %p63 = por %p61, %p62
      %s64 = ssub.s32 %s18, %s27
      %s65 = ssub.s32 %s17, %s31
      %s66 = sor.u32 %s64, %s65
      %p67 = scmp.eq.s32.totalorder %s66, 0
      %s69 = sadd.s32 %s68, 1
      %s70 = scalar_select %p67, %s68, %s69
      %p73 = pneg %p67
      %p74 = scmp.eq.s32.totalorder %s9, 4
      %p75 = por %p73, %p74
      %p76 = scmp.ne.s32.totalorder %s68, %s71
      %p77 = scmp.eq.s32.totalorder %s9, 0
      %p78 = por %p76, %p77
      %p79 = scmp.ne.s32.totalorder %s68, %s71
      %p80 = scmp.eq.s32.totalorder %s14, 4
      %p81 = por %p79, %p80
      %p82 = scmp.ne.s32.totalorder %s71, %s72
      %p83 = scmp.eq.s32.totalorder %s14, 0
      %p84 = por %p82, %p83
      %p85 = scmp.ne.s32.totalorder %s71, %s72
      %p86 = scmp.eq.s32.totalorder %s15, 4
      %p87 = por %p85, %p86
      %p89 = scmp.ne.s32.totalorder %s72, %s88
      %p90 = scmp.eq.s32.totalorder %s15, 0
      %p91 = por %p89, %p90
      %s92 = ssub.s32 %s17, %s31
      %p93 = scmp.eq.s32.totalorder %s92, 0
      %s95 = sadd.s32 %s94, 1
      %s96 = scalar_select %p93, %s94, %s95
      %p99 = pneg %p93
      %p100 = scmp.eq.s32.totalorder %s9, 4
      %p101 = por %p99, %p100
      %p102 = scmp.ne.s32.totalorder %s94, %s97
      %p103 = scmp.eq.s32.totalorder %s9, 0
      %p104 = por %p102, %p103
      %p105 = scmp.ne.s32.totalorder %s94, %s97
      %p106 = scmp.eq.s32.totalorder %s14, 4
      %p107 = por %p105, %p106
      %p108 = scmp.ne.s32.totalorder %s97, %s98
      %p109 = scmp.eq.s32.totalorder %s14, 0
      %p110 = por %p108, %p109
      %p111 = scmp.ne.s32.totalorder %s97, %s98
      %p112 = scmp.eq.s32.totalorder %s15, 4
      %p113 = por %p111, %p112
      %p115 = scmp.ne.s32.totalorder %s98, %s114
      %p116 = scmp.eq.s32.totalorder %s15, 0
      %p117 = por %p115, %p116
      %s118 = ssub.s32 %s16, %s35
      %s119 = ssub.s32 %s17, %s31
      %s120 = sor.u32 %s118, %s119
      %p121 = scmp.eq.s32.totalorder %s120, 0
      %s123 = sadd.s32 %s122, 1
      %s124 = scalar_select %p121, %s122, %s123
      %p127 = pneg %p121
      %p128 = scmp.eq.s32.totalorder %s9, 4
      %p129 = por %p127, %p128
      %p130 = scmp.ne.s32.totalorder %s122, %s125
      %p131 = scmp.eq.s32.totalorder %s9, 0
      %p132 = por %p130, %p131
      %p133 = scmp.ne.s32.totalorder %s122, %s125
      %p134 = scmp.eq.s32.totalorder %s14, 4
      %p135 = por %p133, %p134
      %p136 = scmp.ne.s32.totalorder %s125, %s126
      %p137 = scmp.eq.s32.totalorder %s14, 0
      %p138 = por %p136, %p137
      %p139 = scmp.ne.s32.totalorder %s125, %s126
      %p140 = scmp.eq.s32.totalorder %s15, 4
      %p141 = por %p139, %p140
      %p143 = scmp.ne.s32.totalorder %s126, %s142
      %p144 = scmp.eq.s32.totalorder %s15, 0
      %p145 = por %p143, %p144
      %p146 = scmp.le.s32.totalorder 1, %s9
      %p147 = scmp.lt.s32.totalorder %s9, 6
      %p148 = pnand %p146, %p147
      %p149 = pneg %p148
      // Predicated region
      $region9: #{fine_tuning_forward.5} parent=5 // pred_check
        _
      $region10: #{fine_tuning_forward.5} parent=5 // pred_check_branch
        %151 = sbr.rel (%p148) target = $region12
      $region11: #{fine_tuning_forward.5} parent=5 // pred_region
        %s152 = ssub.s32 %s9, 1
        // Predicated region
        $region13: #{fine_tuning_forward.5} parent=11 // pred_check
          %p153 = pneg %p56
        $region14: #{fine_tuning_forward.5} parent=11 // pred_check_branch
          %155 = sbr.rel (%p153) target = $region16
        $region15: #{fine_tuning_forward.5} parent=11 // pred_region
          %s156 = smul.u32 16, %s19
          %p157 = scmp.lt.s32.totalorder %s156, 15
          %s158 = scalar_select %p157, %s156, 15
          %p159 = scmp.lt.s32.totalorder %s21, 0
          %s160 = scalar_select %p159, %s21, 0
          %s161 = sadd.s32 %s160, %s158
          %s162 = smul.addr %s161, 4
          %s163 = scalar_lea.vmem %s0, %s162
          %s164 = smul.u32 16, %s19
        $region16: #{fine_tuning_forward.5} parent=11 // pred_fallthru
          _
      $region12: #{fine_tuning_forward.5} parent=5 // pred_fallthru
        _
      %p165 = scmp.lt.s32.totalorder %s9, 5
      // Predicated region
      $region17: #{fine_tuning_forward.5} parent=5 // pred_check
        %p166 = pneg %p165
      $region18: #{fine_tuning_forward.5} parent=5 // pred_check_branch
        %168 = sbr.rel (%p166) target = $region20
      $region19: #{fine_tuning_forward.5} parent=5 // pred_region
        // Predicated region
        $region21: #{fine_tuning_forward.5} parent=19 // pred_check
          %p169 = pneg %p78
        $region22: #{fine_tuning_forward.5} parent=19 // pred_check_branch
          %171 = sbr.rel (%p169) target = $region24
        $region23: #{fine_tuning_forward.5} parent=19 // pred_region
          %s172 = sand.u32 %s68, 1
          %s173 = sand.u32 %s68, 1
          %s174 = smul.addr %s173, 64
          %s175 = scalar_lea.vmem [#allocation3], %s174
          %s176 = smul.u32 16, %s18
          %s177 = smul.addr %s176, 5
          %s178 = sadd.s32 %s17, %s177
          %s179 = smul.addr %s178, 4
          %s180 = scalar_lea.vmem %s1, %s179
          // Predicated region
          $region25: #{fine_tuning_forward.5} parent=23 // pred_check
            _
          $region26: #{fine_tuning_forward.5} parent=23 // pred_check_branch
            %182 = sbr.rel (0) target = $region28
          $region27: #{fine_tuning_forward.5} parent=23 // pred_region
            // Predicated region
            $region29: #{fine_tuning_forward.5} parent=27 // pred_check
              _
            $region30: #{fine_tuning_forward.5} parent=27 // pred_check_branch
              %184 = sbr.rel target = $region32
            $region31: #{fine_tuning_forward.5} parent=27 // pred_region
              // Predicated region
              $region44: #{fine_tuning_forward.5} parent=31 // pred_check
                _
              $region45: #{fine_tuning_forward.5} parent=31 // pred_check_branch
                %230 = sbr.rel (0) target = $region47
              $region46: #{fine_tuning_forward.5} parent=31 // pred_region
                loop: start=0, step=1, limit=1
                $region48: #{fine_tuning_forward.5} parent=46 // loop_pre_header
                  _
                $region49: #{fine_tuning_forward.5} parent=46 // loop_header
                  %s232 = sphi 0, %s236
                  %p233 = scmp.ge.s32.totalorder %s232, 1
                  %s237 = sphi %s180, %s180
                  %s238 = sphi %s175, %s175
                $region50: #{fine_tuning_forward.5} parent=46 // loop_header_branch
                  %235 = sbr.rel (%p233) target = $region54
                $region51: #{fine_tuning_forward.5} parent=46 // loop_body
                  _
                $region52: #{fine_tuning_forward.5} parent=46 // loop_footer
                  %s236 = sadd.s32 1, %s232
                $region53: #{fine_tuning_forward.5} parent=46 // loop_footer_branch
                  %231 = sbr.rel target = $region49
                $region54: #{fine_tuning_forward.5} parent=46 // loop_exit
                  _
                %s240 = ssub.s32 16, 1
                loop: start=0, step=1, limit=1
                $region55: #{fine_tuning_forward.5} parent=46 // loop_pre_header
                  _
                $region56: #{fine_tuning_forward.5} parent=46 // loop_header
                  %s242 = sphi 0, %s246
                  %p243 = scmp.ge.s32.totalorder %s242, 1
                  %s247 = sphi %s180, %s180
                  %s248 = sphi %s175, %s175
                $region57: #{fine_tuning_forward.5} parent=46 // loop_header_branch
                  %245 = sbr.rel (%p243) target = $region61
                $region58: #{fine_tuning_forward.5} parent=46 // loop_body
                  %v249 = vld [vmem:[%s247] sm:%s240]
                  %250 = vst [vmem:[%s248] sm:%s240] %v249
                  %v251 = vld [vmem:[%s247 + $0x14] sm:%s240]
                  %252 = vst [vmem:[%s248 + $0x4] sm:%s240] %v251
                  %v253 = vld [vmem:[%s247 + $0x28] sm:%s240]
                  %254 = vst [vmem:[%s248 + $0x8] sm:%s240] %v253
                  %v255 = vld [vmem:[%s247 + $0x3c] sm:%s240]
                  %256 = vst [vmem:[%s248 + $0xc] sm:%s240] %v255
                  %v257 = vld [vmem:[%s247 + $0x50] sm:%s240]
                  %258 = vst [vmem:[%s248 + $0x10] sm:%s240] %v257
                  %v259 = vld [vmem:[%s247 + $0x64] sm:%s240]
                  %260 = vst [vmem:[%s248 + $0x14] sm:%s240] %v259
                  %v261 = vld [vmem:[%s247 + $0x78] sm:%s240]
                  %262 = vst [vmem:[%s248 + $0x18] sm:%s240] %v261
                  %v263 = vld [vmem:[%s247 + $0x8c] sm:%s240]
                  %264 = vst [vmem:[%s248 + $0x1c] sm:%s240] %v263
                  %v265 = vld [vmem:[%s247 + $0xa0] sm:%s240]
                  %266 = vst [vmem:[%s248 + $0x20] sm:%s240] %v265
                  %v267 = vld [vmem:[%s247 + $0xb4] sm:%s240]
                  %268 = vst [vmem:[%s248 + $0x24] sm:%s240] %v267
                  %v269 = vld [vmem:[%s247 + $0xc8] sm:%s240]
                  %270 = vst [vmem:[%s248 + $0x28] sm:%s240] %v269
                  %v271 = vld [vmem:[%s247 + $0xdc] sm:%s240]
                  %272 = vst [vmem:[%s248 + $0x2c] sm:%s240] %v271
                  %v273 = vld [vmem:[%s247 + $0xf0] sm:%s240]
                  %274 = vst [vmem:[%s248 + $0x30] sm:%s240] %v273
                  %v275 = vld [vmem:[%s247 + $0x104] sm:%s240]
                  %276 = vst [vmem:[%s248 + $0x34] sm:%s240] %v275
                  %v277 = vld [vmem:[%s247 + $0x118] sm:%s240]
                  %278 = vst [vmem:[%s248 + $0x38] sm:%s240] %v277
                  %v279 = vld [vmem:[%s247 + $0x12c] sm:%s240]
                  %280 = vst [vmem:[%s248 + $0x3c] sm:%s240] %v279
                $region59: #{fine_tuning_forward.5} parent=46 // loop_footer
                  %s246 = sadd.s32 1, %s242
                $region60: #{fine_tuning_forward.5} parent=46 // loop_footer_branch
                  %241 = sbr.rel target = $region56
                $region61: #{fine_tuning_forward.5} parent=46 // loop_exit
                  _
              $region47: #{fine_tuning_forward.5} parent=31 // pred_fallthru
                _
            $region32: #{fine_tuning_forward.5} parent=27 // pred_fallthru
              _
            // Predicated region
            $region33: #{fine_tuning_forward.5} parent=27 // pred_check
              _
            $region34: #{fine_tuning_forward.5} parent=27 // pred_check_branch
              %186 = sbr.rel (0) target = $region36
            $region35: #{fine_tuning_forward.5} parent=27 // pred_region
              %s188 = ssub.s32 16, 1
              loop: start=0, step=1, limit=1
              $region37: #{fine_tuning_forward.5} parent=35 // loop_pre_header
                _
              $region38: #{fine_tuning_forward.5} parent=35 // loop_header
                %s190 = sphi 0, %s194
                %p191 = scmp.ge.s32.totalorder %s190, 1
                %s195 = sphi %s180, %s180
                %s196 = sphi %s175, %s175
              $region39: #{fine_tuning_forward.5} parent=35 // loop_header_branch
                %193 = sbr.rel (%p191) target = $region43
              $region40: #{fine_tuning_forward.5} parent=35 // loop_body
                %v197 = vld [vmem:[%s195] sm:%s188]
                %198 = vst [vmem:[%s196] sm:%s188] %v197
                %v199 = vld [vmem:[%s195 + $0x14] sm:%s188]
                %200 = vst [vmem:[%s196 + $0x4] sm:%s188] %v199
                %v201 = vld [vmem:[%s195 + $0x28] sm:%s188]
                %202 = vst [vmem:[%s196 + $0x8] sm:%s188] %v201
                %v203 = vld [vmem:[%s195 + $0x3c] sm:%s188]
                %204 = vst [vmem:[%s196 + $0xc] sm:%s188] %v203
                %v205 = vld [vmem:[%s195 + $0x50] sm:%s188]
                %206 = vst [vmem:[%s196 + $0x10] sm:%s188] %v205
                %v207 = vld [vmem:[%s195 + $0x64] sm:%s188]
                %208 = vst [vmem:[%s196 + $0x14] sm:%s188] %v207
                %v209 = vld [vmem:[%s195 + $0x78] sm:%s188]
                %210 = vst [vmem:[%s196 + $0x18] sm:%s188] %v209
                %v211 = vld [vmem:[%s195 + $0x8c] sm:%s188]
                %212 = vst [vmem:[%s196 + $0x1c] sm:%s188] %v211
                %v213 = vld [vmem:[%s195 + $0xa0] sm:%s188]
                %214 = vst [vmem:[%s196 + $0x20] sm:%s188] %v213
                %v215 = vld [vmem:[%s195 + $0xb4] sm:%s188]
                %216 = vst [vmem:[%s196 + $0x24] sm:%s188] %v215
                %v217 = vld [vmem:[%s195 + $0xc8] sm:%s188]
                %218 = vst [vmem:[%s196 + $0x28] sm:%s188] %v217
                %v219 = vld [vmem:[%s195 + $0xdc] sm:%s188]
                %220 = vst [vmem:[%s196 + $0x2c] sm:%s188] %v219
                %v221 = vld [vmem:[%s195 + $0xf0] sm:%s188]
                %222 = vst [vmem:[%s196 + $0x30] sm:%s188] %v221
                %v223 = vld [vmem:[%s195 + $0x104] sm:%s188]
                %224 = vst [vmem:[%s196 + $0x34] sm:%s188] %v223
                %v225 = vld [vmem:[%s195 + $0x118] sm:%s188]
                %226 = vst [vmem:[%s196 + $0x38] sm:%s188] %v225
                %v227 = vld [vmem:[%s195 + $0x12c] sm:%s188]
                %228 = vst [vmem:[%s196 + $0x3c] sm:%s188] %v227
              $region41: #{fine_tuning_forward.5} parent=35 // loop_footer
                %s194 = sadd.s32 1, %s190
              $region42: #{fine_tuning_forward.5} parent=35 // loop_footer_branch
                %189 = sbr.rel target = $region38
              $region43: #{fine_tuning_forward.5} parent=35 // loop_exit
                _
            $region36: #{fine_tuning_forward.5} parent=27 // pred_fallthru
              _
          $region28: #{fine_tuning_forward.5} parent=23 // pred_fallthru
            _
          %281 = vnop
        $region24: #{fine_tuning_forward.5} parent=19 // pred_fallthru
          _
        // Predicated region
        $region62: #{fine_tuning_forward.5} parent=19 // pred_check
          %p282 = pneg %p104
        $region63: #{fine_tuning_forward.5} parent=19 // pred_check_branch
          %284 = sbr.rel (%p282) target = $region65
        $region64: #{fine_tuning_forward.5} parent=19 // pred_region
          %p285 = scmp.lt.s32.totalorder %s17, 4
          %s286 = scalar_select %p285, %s17, 4
          %s287 = scalar_lea.vmem %s2, %s286
        $region65: #{fine_tuning_forward.5} parent=19 // pred_fallthru
          _
      $region20: #{fine_tuning_forward.5} parent=5 // pred_fallthru
        _
      %p288 = scmp.le.s32.totalorder 1, %s9
      %p289 = scmp.lt.s32.totalorder %s9, 6
      %p290 = pnand %p288, %p289
      %p291 = pneg %p290
      // Predicated region
      $region66: #{fine_tuning_forward.5} parent=5 // pred_check
        _
      $region67: #{fine_tuning_forward.5} parent=5 // pred_check_branch
        %293 = sbr.rel (%p290) target = $region69
      $region68: #{fine_tuning_forward.5} parent=5 // pred_region
        %s294 = ssub.s32 %s9, 1
        %s295 = sand.u32 %s71, 1
        %s296 = sand.u32 %s71, 1
        %s297 = smul.addr %s296, 64
        %s298 = scalar_lea.vmem [#allocation3], %s297
        // Predicated region
        $region70: #{fine_tuning_forward.5} parent=68 // pred_check
          %p299 = pneg %p84
        $region71: #{fine_tuning_forward.5} parent=68 // pred_check_branch
          %301 = sbr.rel (%p299) target = $region73
        $region72: #{fine_tuning_forward.5} parent=68 // pred_region
          _
        $region73: #{fine_tuning_forward.5} parent=68 // pred_fallthru
          _
        %s302 = smul.u32 16, %s19
        %p303 = scmp.lt.s32.totalorder %s302, 15
        %s304 = scalar_select %p303, %s302, 15
        %p305 = scmp.lt.s32.totalorder %s21, 0
        %s306 = scalar_select %p305, %s21, 0
        %s307 = sadd.s32 %s306, %s304
        %s308 = smul.addr %s307, 4
        %s309 = scalar_lea.vmem %s0, %s308
        %p310 = pneg %p56
        %p311 = pneg %p53
        %s312 = sand.u32 %s71, 1
        %s313 = sand.u32 %s71, 1
        %s314 = smul.addr %s313, 64
        %s315 = scalar_lea.vmem [#allocation3], %s314
        %p316 = pneg %p84
        %p317 = pneg %p81
        %p318 = scmp.lt.s32.totalorder %s20, 4
        %s319 = scalar_select %p318, %s20, 4
        %s320 = scalar_lea.vmem %s2, %s319
        %p321 = pneg %p110
        %p322 = pneg %p107
        %p323 = pneg %p138
        %p324 = pneg %p135
        %s325 = sand.u32 %s125, 1
        %s326 = sand.u32 %s125, 1
        %s327 = smul.addr %s326, 128
        %s328 = scalar_lea.vmem [#allocation4], %s327
        %s329 = smul.u32 16, %s19
        %p330 = scmp.lt.s32.totalorder %s329, 15
        %s331 = scalar_select %p330, %s329, 15
        %p332 = scmp.lt.s32.totalorder %s21, 0
        %s333 = scalar_select %p332, %s21, 0
        %s334 = sadd.s32 %s333, %s331
        %s335 = smul.addr %s334, 4
        %s336 = scalar_lea.vmem %s0, %s335
        %s337 = smul.u32 16, %s19
        %s338 = smul.u32 16, %s21
        %p339 = scmp.lt.s32.totalorder %s20, 4
        %s340 = scalar_select %p339, %s20, 4
        %s341 = scalar_lea.vmem %s2, %s340
        %s342 = smul.u32 16, %s19
        %p343 = scmp.eq.s32.totalorder %s21, 0
        // Predicated region
        $region74: #{fine_tuning_forward.5} parent=68 // pred_check
          %p344 = pneg %p343
        $region75: #{fine_tuning_forward.5} parent=68 // pred_check_branch
          %346 = sbr.rel (%p344) target = $region77
        $region76: #{fine_tuning_forward.5} parent=68 // pred_region
          %347 = vst [vmem:[#allocation2] sm:$0xff] 0.0
          %348 = vst [vmem:[#allocation2 + $0x8] sm:$0xff] 0.0
          %349 = vst [vmem:[#allocation2 + $0x10] sm:$0xff] 0.0
          %350 = vst [vmem:[#allocation2 + $0x18] sm:$0xff] 0.0
          %351 = vst [vmem:[#allocation2 + $0x20] sm:$0xff] 0.0
          %352 = vst [vmem:[#allocation2 + $0x28] sm:$0xff] 0.0
          %353 = vst [vmem:[#allocation2 + $0x30] sm:$0xff] 0.0
          %354 = vst [vmem:[#allocation2 + $0x38] sm:$0xff] 0.0
          %355 = vst [vmem:[#allocation2 + $0x40] sm:$0xff] 0.0
          %356 = vst [vmem:[#allocation2 + $0x48] sm:$0xff] 0.0
          %357 = vst [vmem:[#allocation2 + $0x50] sm:$0xff] 0.0
          %358 = vst [vmem:[#allocation2 + $0x58] sm:$0xff] 0.0
          %359 = vst [vmem:[#allocation2 + $0x60] sm:$0xff] 0.0
          %360 = vst [vmem:[#allocation2 + $0x68] sm:$0xff] 0.0
          %361 = vst [vmem:[#allocation2 + $0x70] sm:$0xff] 0.0
          %362 = vst [vmem:[#allocation2 + $0x78] sm:$0xff] 0.0
        $region77: #{fine_tuning_forward.5} parent=68 // pred_fallthru
          _
        %v363 = vld [vmem:[#allocation2] sm:$0xff]
        %v364 = vld [vmem:[#allocation2 + $0x8] sm:$0xff]
        %v365 = vld [vmem:[#allocation2 + $0x10] sm:$0xff]
        %v366 = vld [vmem:[#allocation2 + $0x18] sm:$0xff]
        %v367 = vld [vmem:[#allocation2 + $0x20] sm:$0xff]
        %v368 = vld [vmem:[#allocation2 + $0x28] sm:$0xff]
        %v369 = vld [vmem:[#allocation2 + $0x30] sm:$0xff]
        %v370 = vld [vmem:[#allocation2 + $0x38] sm:$0xff]
        %v371 = vld [vmem:[#allocation2 + $0x40] sm:$0xff]
        %v372 = vld [vmem:[#allocation2 + $0x48] sm:$0xff]
        %v373 = vld [vmem:[#allocation2 + $0x50] sm:$0xff]
        %v374 = vld [vmem:[#allocation2 + $0x58] sm:$0xff]
        %v375 = vld [vmem:[#allocation2 + $0x60] sm:$0xff]
        %v376 = vld [vmem:[#allocation2 + $0x68] sm:$0xff]
        %v377 = vld [vmem:[#allocation2 + $0x70] sm:$0xff]
        %v378 = vld [vmem:[#allocation2 + $0x78] sm:$0xff]
        %v379 = vld [vmem:[%s336] sm:$0xf]
        %v380 = vld [vmem:[%s336 + $0x4] sm:$0xf]
        %v381 = vld [vmem:[%s336 + $0x8] sm:$0xf]
        %v382 = vld [vmem:[%s336 + $0xc] sm:$0xf]
        %v383 = vld [vmem:[%s336 + $0x10] sm:$0xf]
        %v384 = vld [vmem:[%s336 + $0x14] sm:$0xf]
        %v385 = vld [vmem:[%s336 + $0x18] sm:$0xf]
        %v386 = vld [vmem:[%s336 + $0x1c] sm:$0xf]
        %v387 = vld [vmem:[%s336 + $0x20] sm:$0xf]
        %v388 = vld [vmem:[%s336 + $0x24] sm:$0xf]
        %v389 = vld [vmem:[%s336 + $0x28] sm:$0xf]
        %v390 = vld [vmem:[%s336 + $0x2c] sm:$0xf]
        %v391 = vld [vmem:[%s336 + $0x30] sm:$0xf]
        %v392 = vld [vmem:[%s336 + $0x34] sm:$0xf]
        %v393 = vld [vmem:[%s336 + $0x38] sm:$0xf]
        %v394 = vld [vmem:[%s336 + $0x3c] sm:$0xf]
        %v395 = vld [vmem:[%s298] sm:$0xf]
        %v396 = vld [vmem:[%s298 + $0x4] sm:$0xf]
        %v397 = vld [vmem:[%s298 + $0x8] sm:$0xf]
        %v398 = vld [vmem:[%s298 + $0xc] sm:$0xf]
        %v399 = vld [vmem:[%s298 + $0x10] sm:$0xf]
        %v400 = vld [vmem:[%s298 + $0x14] sm:$0xf]
        %v401 = vld [vmem:[%s298 + $0x18] sm:$0xf]
        %v402 = vld [vmem:[%s298 + $0x1c] sm:$0xf]
        %v403 = vld [vmem:[%s298 + $0x20] sm:$0xf]
        %v404 = vld [vmem:[%s298 + $0x24] sm:$0xf]
        %v405 = vld [vmem:[%s298 + $0x28] sm:$0xf]
        %v406 = vld [vmem:[%s298 + $0x2c] sm:$0xf]
        %v407 = vld [vmem:[%s298 + $0x30] sm:$0xf]
        %v408 = vld [vmem:[%s298 + $0x34] sm:$0xf]
        %v409 = vld [vmem:[%s298 + $0x38] sm:$0xf]
        %v410 = vld [vmem:[%s298 + $0x3c] sm:$0xf]
        %v427 = vunpack.c.l.b16 %v379
        %v428 = vunpack.c.l.b16 %v380
        %v429 = vunpack.c.l.b16 %v381
        %v430 = vunpack.c.l.b16 %v382
        %v431 = vunpack.c.l.b16 %v383
        %v432 = vunpack.c.l.b16 %v384
        %v433 = vunpack.c.l.b16 %v385
        %v434 = vunpack.c.l.b16 %v386
        %v435 = vunpack.c.l.b16 %v387
        %v436 = vunpack.c.l.b16 %v388
        %v437 = vunpack.c.l.b16 %v389
        %v438 = vunpack.c.l.b16 %v390
        %v439 = vunpack.c.l.b16 %v391
        %v440 = vunpack.c.l.b16 %v392
        %v441 = vunpack.c.l.b16 %v393
        %v442 = vunpack.c.l.b16 %v394
        %v443 = vpack.c.b16 %v428, %v427
        %v444 = vpack.c.b16 %v430, %v429
        %v445 = vpack.c.b16 %v432, %v431
        %v446 = vpack.c.b16 %v434, %v433
        %v447 = vpack.c.b16 %v436, %v435
        %v448 = vpack.c.b16 %v438, %v437
        %v449 = vpack.c.b16 %v440, %v439
        %v450 = vpack.c.b16 %v442, %v441
        %v475 = vunpack.c.l.b16 %v395
        %v476 = vunpack.c.l.b16 %v396
        %v477 = vunpack.c.l.b16 %v397
        %v478 = vunpack.c.l.b16 %v398
        %v479 = vunpack.c.l.b16 %v399
        %v480 = vunpack.c.l.b16 %v400
        %v481 = vunpack.c.l.b16 %v401
        %v482 = vunpack.c.l.b16 %v402
        %v483 = vunpack.c.l.b16 %v403
        %v484 = vunpack.c.l.b16 %v404
        %v485 = vunpack.c.l.b16 %v405
        %v486 = vunpack.c.l.b16 %v406
        %v487 = vunpack.c.l.b16 %v407
        %v488 = vunpack.c.l.b16 %v408
        %v489 = vunpack.c.l.b16 %v409
        %v490 = vunpack.c.l.b16 %v410
        %v491 = vpack.c.b16 %v476, %v475
        %v492 = vpack.c.b16 %v478, %v477
        %v493 = vpack.c.b16 %v480, %v479
        %v494 = vpack.c.b16 %v482, %v481
        %v495 = vpack.c.b16 %v484, %v483
        %v496 = vpack.c.b16 %v486, %v485
        %v497 = vpack.c.b16 %v488, %v487
        %v498 = vpack.c.b16 %v490, %v489
        %507 = vmatpush.bf16.msra.mxu0 %v498
        %508 = vmatpush.bf16.msra.mxu0 %v497
        %509 = vmatpush.bf16.msra.mxu0 %v496
        %510 = vmatpush.bf16.msra.mxu0 %v495
        %511 = vmatpush.bf16.msra.mxu0 %v494
        %512 = vmatpush.bf16.msra.mxu0 %v493
        %513 = vmatpush.bf16.msra.mxu0 %v492
        %514 = vmatpush.bf16.msra.mxu0 %v491
        %515 = vmatmul.bf16.gmra.mxu0 %v443
        %v516 = vpop.f32.mrf.mxu0
        %v517 = vadd.f32 0.0, %v516
        %v518 = vpop.f32.mrf.mxu0
        %v519 = vadd.f32 0.0, %v518
        %520 = vmatmul.bf16.gmra.mxu0 %v444
        %v521 = vpop.f32.mrf.mxu0
        %v522 = vadd.f32 0.0, %v521
        %v523 = vpop.f32.mrf.mxu0
        %v524 = vadd.f32 0.0, %v523
        %525 = vmatmul.bf16.gmra.mxu0 %v445
        %v526 = vpop.f32.mrf.mxu0
        %v527 = vadd.f32 0.0, %v526
        %v528 = vpop.f32.mrf.mxu0
        %v529 = vadd.f32 0.0, %v528
        %530 = vmatmul.bf16.gmra.mxu0 %v446
        %v531 = vpop.f32.mrf.mxu0
        %v532 = vadd.f32 0.0, %v531
        %v533 = vpop.f32.mrf.mxu0
        %v534 = vadd.f32 0.0, %v533
        %535 = vmatmul.bf16.gmra.mxu0 %v447
        %v536 = vpop.f32.mrf.mxu0
        %v537 = vadd.f32 0.0, %v536
        %v538 = vpop.f32.mrf.mxu0
        %v539 = vadd.f32 0.0, %v538
        %540 = vmatmul.bf16.gmra.mxu0 %v448
        %v541 = vpop.f32.mrf.mxu0
        %v542 = vadd.f32 0.0, %v541
        %v543 = vpop.f32.mrf.mxu0
        %v544 = vadd.f32 0.0, %v543
        %545 = vmatmul.bf16.gmra.mxu0 %v449
        %v546 = vpop.f32.mrf.mxu0
        %v547 = vadd.f32 0.0, %v546
        %v548 = vpop.f32.mrf.mxu0
        %v549 = vadd.f32 0.0, %v548
        %550 = vmatmul.bf16.gmra.mxu0 %v450
        %v551 = vpop.f32.mrf.mxu0
        %v552 = vadd.f32 0.0, %v551
        %v553 = vpop.f32.mrf.mxu0
        %v554 = vadd.f32 0.0, %v553
        %555 = vdwg.mxu0
        %v556 = vadd.f32 %v363, %v517
        %v557 = vadd.f32 %v364, %v519
        %v558 = vadd.f32 %v365, %v522
        %v559 = vadd.f32 %v366, %v524
        %v560 = vadd.f32 %v367, %v527
        %v561 = vadd.f32 %v368, %v529
        %v562 = vadd.f32 %v369, %v532
        %v563 = vadd.f32 %v370, %v534
        %v564 = vadd.f32 %v371, %v537
        %v565 = vadd.f32 %v372, %v539
        %v566 = vadd.f32 %v373, %v542
        %v567 = vadd.f32 %v374, %v544
        %v568 = vadd.f32 %v375, %v547
        %v569 = vadd.f32 %v376, %v549
        %v570 = vadd.f32 %v377, %v552
        %v571 = vadd.f32 %v378, %v554
        %572 = vst [vmem:[#allocation2] sm:$0xff] %v556
        %573 = vst [vmem:[#allocation2 + $0x8] sm:$0xff] %v557
        %574 = vst [vmem:[#allocation2 + $0x10] sm:$0xff] %v558
        %575 = vst [vmem:[#allocation2 + $0x18] sm:$0xff] %v559
        %576 = vst [vmem:[#allocation2 + $0x20] sm:$0xff] %v560
        %577 = vst [vmem:[#allocation2 + $0x28] sm:$0xff] %v561
        %578 = vst [vmem:[#allocation2 + $0x30] sm:$0xff] %v562
        %579 = vst [vmem:[#allocation2 + $0x38] sm:$0xff] %v563
        %580 = vst [vmem:[#allocation2 + $0x40] sm:$0xff] %v564
        %581 = vst [vmem:[#allocation2 + $0x48] sm:$0xff] %v565
        %582 = vst [vmem:[#allocation2 + $0x50] sm:$0xff] %v566
        %583 = vst [vmem:[#allocation2 + $0x58] sm:$0xff] %v567
        %584 = vst [vmem:[#allocation2 + $0x60] sm:$0xff] %v568
        %585 = vst [vmem:[#allocation2 + $0x68] sm:$0xff] %v569
        %586 = vst [vmem:[#allocation2 + $0x70] sm:$0xff] %v570
        %587 = vst [vmem:[#allocation2 + $0x78] sm:$0xff] %v571
        // Predicated region
        $region78: #{fine_tuning_forward.5} parent=68 // pred_check
          %p588 = pneg %p343
        $region79: #{fine_tuning_forward.5} parent=68 // pred_check_branch
          %590 = sbr.rel (%p588) target = $region81
        $region80: #{fine_tuning_forward.5} parent=68 // pred_region
          %v591 = vld [vmem:[#allocation2] sm:$0xff]
          %v592 = vld [vmem:[#allocation2 + $0x8] sm:$0xff]
          %v593 = vld [vmem:[#allocation2 + $0x10] sm:$0xff]
          %v594 = vld [vmem:[#allocation2 + $0x18] sm:$0xff]
          %v595 = vld [vmem:[#allocation2 + $0x20] sm:$0xff]
          %v596 = vld [vmem:[#allocation2 + $0x28] sm:$0xff]
          %v597 = vld [vmem:[#allocation2 + $0x30] sm:$0xff]
          %v598 = vld [vmem:[#allocation2 + $0x38] sm:$0xff]
          %v599 = vld [vmem:[#allocation2 + $0x40] sm:$0xff]
          %v600 = vld [vmem:[#allocation2 + $0x48] sm:$0xff]
          %v601 = vld [vmem:[#allocation2 + $0x50] sm:$0xff]
          %v602 = vld [vmem:[#allocation2 + $0x58] sm:$0xff]
          %v603 = vld [vmem:[#allocation2 + $0x60] sm:$0xff]
          %v604 = vld [vmem:[#allocation2 + $0x68] sm:$0xff]
          %v605 = vld [vmem:[#allocation2 + $0x70] sm:$0xff]
          %v606 = vld [vmem:[#allocation2 + $0x78] sm:$0xff]
          %v607 = vld [vmem:[%s341] sm:$0x1]
          %v609 = vperm.slane %v607, 0
          %v611 = vadd.f32 %v591, %v609
          %v612 = vadd.f32 %v592, %v609
          %v613 = vadd.f32 %v593, %v609
          %v614 = vadd.f32 %v594, %v609
          %v615 = vadd.f32 %v595, %v609
          %v616 = vadd.f32 %v596, %v609
          %v617 = vadd.f32 %v597, %v609
          %v618 = vadd.f32 %v598, %v609
          %v619 = vadd.f32 %v599, %v609
          %v620 = vadd.f32 %v600, %v609
          %v621 = vadd.f32 %v601, %v609
          %v622 = vadd.f32 %v602, %v609
          %v623 = vadd.f32 %v603, %v609
          %v624 = vadd.f32 %v604, %v609
          %v625 = vadd.f32 %v605, %v609
          %v626 = vadd.f32 %v606, %v609
          %627 = vst [vmem:[%s328] sm:$0xff] %v611
          %628 = vst [vmem:[%s328 + $0x8] sm:$0xff] %v612
          %629 = vst [vmem:[%s328 + $0x10] sm:$0xff] %v613
          %630 = vst [vmem:[%s328 + $0x18] sm:$0xff] %v614
          %631 = vst [vmem:[%s328 + $0x20] sm:$0xff] %v615
          %632 = vst [vmem:[%s328 + $0x28] sm:$0xff] %v616
          %633 = vst [vmem:[%s328 + $0x30] sm:$0xff] %v617
          %634 = vst [vmem:[%s328 + $0x38] sm:$0xff] %v618
          %635 = vst [vmem:[%s328 + $0x40] sm:$0xff] %v619
          %636 = vst [vmem:[%s328 + $0x48] sm:$0xff] %v620
          %637 = vst [vmem:[%s328 + $0x50] sm:$0xff] %v621
          %638 = vst [vmem:[%s328 + $0x58] sm:$0xff] %v622
          %639 = vst [vmem:[%s328 + $0x60] sm:$0xff] %v623
          %640 = vst [vmem:[%s328 + $0x68] sm:$0xff] %v624
          %641 = vst [vmem:[%s328 + $0x70] sm:$0xff] %v625
          %642 = vst [vmem:[%s328 + $0x78] sm:$0xff] %v626
        $region81: #{fine_tuning_forward.5} parent=68 // pred_fallthru
          _
        %s643 = sand.u32 %s125, 1
        %s644 = sand.u32 %s125, 1
        %s645 = smul.addr %s644, 128
        %s646 = scalar_lea.vmem [#allocation4], %s645
        // Predicated region
        $region82: #{fine_tuning_forward.5} parent=68 // pred_check
          %p647 = pneg %p135
        $region83: #{fine_tuning_forward.5} parent=68 // pred_check_branch
          %649 = sbr.rel (%p647) target = $region85
        $region84: #{fine_tuning_forward.5} parent=68 // pred_region
          %s650 = smul.u32 16, %s19
          %s651 = smul.addr %s650, 5
          %s652 = sadd.s32 %s20, %s651
          %s653 = smul.addr %s652, 8
          %s654 = scalar_lea.vmem %s3, %s653
          // Predicated region
          $region86: #{fine_tuning_forward.5} parent=84 // pred_check
            _
          $region87: #{fine_tuning_forward.5} parent=84 // pred_check_branch
            %656 = sbr.rel (0) target = $region89
          $region88: #{fine_tuning_forward.5} parent=84 // pred_region
            // Predicated region
            $region90: #{fine_tuning_forward.5} parent=88 // pred_check
              _
            $region91: #{fine_tuning_forward.5} parent=88 // pred_check_branch
              %658 = sbr.rel (0) target = $region93
            $region92: #{fine_tuning_forward.5} parent=88 // pred_region
              // Predicated region
              $region105: #{fine_tuning_forward.5} parent=92 // pred_check
                _
              $region106: #{fine_tuning_forward.5} parent=92 // pred_check_branch
                %704 = sbr.rel (0) target = $region108
              $region107: #{fine_tuning_forward.5} parent=92 // pred_region
                loop: start=0, step=1, limit=1
                $region109: #{fine_tuning_forward.5} parent=107 // loop_pre_header
                  _
                $region110: #{fine_tuning_forward.5} parent=107 // loop_header
                  %s706 = sphi 0, %s710
                  %p707 = scmp.ge.s32.totalorder %s706, 1
                  %s711 = sphi %s646, %s646
                  %s712 = sphi %s654, %s654
                $region111: #{fine_tuning_forward.5} parent=107 // loop_header_branch
                  %709 = sbr.rel (%p707) target = $region115
                $region112: #{fine_tuning_forward.5} parent=107 // loop_body
                  %v713 = vld [vmem:[%s711] sm:$0xff]
                  %714 = vst [vmem:[%s712] sm:$0xff] %v713
                  %v715 = vld [vmem:[%s711 + $0x8] sm:$0xff]
                  %716 = vst [vmem:[%s712 + $0x28] sm:$0xff] %v715
                  %v717 = vld [vmem:[%s711 + $0x10] sm:$0xff]
                  %718 = vst [vmem:[%s712 + $0x50] sm:$0xff] %v717
                  %v719 = vld [vmem:[%s711 + $0x18] sm:$0xff]
                  %720 = vst [vmem:[%s712 + $0x78] sm:$0xff] %v719
                  %v721 = vld [vmem:[%s711 + $0x20] sm:$0xff]
                  %722 = vst [vmem:[%s712 + $0xa0] sm:$0xff] %v721
                  %v723 = vld [vmem:[%s711 + $0x28] sm:$0xff]
                  %724 = vst [vmem:[%s712 + $0xc8] sm:$0xff] %v723
                  %v725 = vld [vmem:[%s711 + $0x30] sm:$0xff]
                  %726 = vst [vmem:[%s712 + $0xf0] sm:$0xff] %v725
                  %v727 = vld [vmem:[%s711 + $0x38] sm:$0xff]
                  %728 = vst [vmem:[%s712 + $0x118] sm:$0xff] %v727
                  %v729 = vld [vmem:[%s711 + $0x40] sm:$0xff]
                  %730 = vst [vmem:[%s712 + $0x140] sm:$0xff] %v729
                  %v731 = vld [vmem:[%s711 + $0x48] sm:$0xff]
                  %732 = vst [vmem:[%s712 + $0x168] sm:$0xff] %v731
                  %v733 = vld [vmem:[%s711 + $0x50] sm:$0xff]
                  %734 = vst [vmem:[%s712 + $0x190] sm:$0xff] %v733
                  %v735 = vld [vmem:[%s711 + $0x58] sm:$0xff]
                  %736 = vst [vmem:[%s712 + $0x1b8] sm:$0xff] %v735
                  %v737 = vld [vmem:[%s711 + $0x60] sm:$0xff]
                  %738 = vst [vmem:[%s712 + $0x1e0] sm:$0xff] %v737
                  %v739 = vld [vmem:[%s711 + $0x68] sm:$0xff]
                  %740 = vst [vmem:[%s712 + $0x208] sm:$0xff] %v739
                  %v741 = vld [vmem:[%s711 + $0x70] sm:$0xff]
                  %742 = vst [vmem:[%s712 + $0x230] sm:$0xff] %v741
                  %v743 = vld [vmem:[%s711 + $0x78] sm:$0xff]
                  %744 = vst [vmem:[%s712 + $0x258] sm:$0xff] %v743
                $region113: #{fine_tuning_forward.5} parent=107 // loop_footer
                  %s710 = sadd.s32 1, %s706
                $region114: #{fine_tuning_forward.5} parent=107 // loop_footer_branch
                  %705 = sbr.rel target = $region110
                $region115: #{fine_tuning_forward.5} parent=107 // loop_exit
                  _
              $region108: #{fine_tuning_forward.5} parent=92 // pred_fallthru
                _
              // Predicated region
              $region116: #{fine_tuning_forward.5} parent=92 // pred_check
                _
              $region117: #{fine_tuning_forward.5} parent=92 // pred_check_branch
                %746 = sbr.rel target = $region119
              $region118: #{fine_tuning_forward.5} parent=92 // pred_region
                _
              $region119: #{fine_tuning_forward.5} parent=92 // pred_fallthru
                _
            $region93: #{fine_tuning_forward.5} parent=88 // pred_fallthru
              _
            // Predicated region
            $region94: #{fine_tuning_forward.5} parent=88 // pred_check
              _
            $region95: #{fine_tuning_forward.5} parent=88 // pred_check_branch
              %660 = sbr.rel target = $region97
            $region96: #{fine_tuning_forward.5} parent=88 // pred_region
              %s662 = ssub.s32 256, 1
              loop: start=0, step=1, limit=1
              $region98: #{fine_tuning_forward.5} parent=96 // loop_pre_header
                _
              $region99: #{fine_tuning_forward.5} parent=96 // loop_header
                %s664 = sphi 0, %s668
                %p665 = scmp.ge.s32.totalorder %s664, 1
                %s669 = sphi %s646, %s646
                %s670 = sphi %s654, %s654
              $region100: #{fine_tuning_forward.5} parent=96 // loop_header_branch
                %667 = sbr.rel (%p665) target = $region104
              $region101: #{fine_tuning_forward.5} parent=96 // loop_body
                %v671 = vld [vmem:[%s669] sm:%s662]
                %672 = vst [vmem:[%s670] sm:%s662] %v671
                %v673 = vld [vmem:[%s669 + $0x8] sm:%s662]
                %674 = vst [vmem:[%s670 + $0x28] sm:%s662] %v673
                %v675 = vld [vmem:[%s669 + $0x10] sm:%s662]
                %676 = vst [vmem:[%s670 + $0x50] sm:%s662] %v675
                %v677 = vld [vmem:[%s669 + $0x18] sm:%s662]
                %678 = vst [vmem:[%s670 + $0x78] sm:%s662] %v677
                %v679 = vld [vmem:[%s669 + $0x20] sm:%s662]
                %680 = vst [vmem:[%s670 + $0xa0] sm:%s662] %v679
                %v681 = vld [vmem:[%s669 + $0x28] sm:%s662]
                %682 = vst [vmem:[%s670 + $0xc8] sm:%s662] %v681
                %v683 = vld [vmem:[%s669 + $0x30] sm:%s662]
                %684 = vst [vmem:[%s670 + $0xf0] sm:%s662] %v683
                %v685 = vld [vmem:[%s669 + $0x38] sm:%s662]
                %686 = vst [vmem:[%s670 + $0x118] sm:%s662] %v685
                %v687 = vld [vmem:[%s669 + $0x40] sm:%s662]
                %688 = vst [vmem:[%s670 + $0x140] sm:%s662] %v687
                %v689 = vld [vmem:[%s669 + $0x48] sm:%s662]
                %690 = vst [vmem:[%s670 + $0x168] sm:%s662] %v689
                %v691 = vld [vmem:[%s669 + $0x50] sm:%s662]
                %692 = vst [vmem:[%s670 + $0x190] sm:%s662] %v691
                %v693 = vld [vmem:[%s669 + $0x58] sm:%s662]
                %694 = vst [vmem:[%s670 + $0x1b8] sm:%s662] %v693
                %v695 = vld [vmem:[%s669 + $0x60] sm:%s662]
                %696 = vst [vmem:[%s670 + $0x1e0] sm:%s662] %v695
                %v697 = vld [vmem:[%s669 + $0x68] sm:%s662]
                %698 = vst [vmem:[%s670 + $0x208] sm:%s662] %v697
                %v699 = vld [vmem:[%s669 + $0x70] sm:%s662]
                %700 = vst [vmem:[%s670 + $0x230] sm:%s662] %v699
                %v701 = vld [vmem:[%s669 + $0x78] sm:%s662]
                %702 = vst [vmem:[%s670 + $0x258] sm:%s662] %v701
              $region102: #{fine_tuning_forward.5} parent=96 // loop_footer
                %s668 = sadd.s32 1, %s664
              $region103: #{fine_tuning_forward.5} parent=96 // loop_footer_branch
                %663 = sbr.rel target = $region99
              $region104: #{fine_tuning_forward.5} parent=96 // loop_exit
                _
            $region97: #{fine_tuning_forward.5} parent=88 // pred_fallthru
              _
          $region89: #{fine_tuning_forward.5} parent=84 // pred_fallthru
            _
          %747 = vnop
        $region85: #{fine_tuning_forward.5} parent=68 // pred_fallthru
          _
      $region69: #{fine_tuning_forward.5} parent=5 // pred_fallthru
        _
      %p748 = scmp.le.s32.totalorder 2, %s9
      // Predicated region
      $region120: #{fine_tuning_forward.5} parent=5 // pred_check
        %p749 = pneg %p748
      $region121: #{fine_tuning_forward.5} parent=5 // pred_check_branch
        %751 = sbr.rel (%p749) target = $region123
      $region122: #{fine_tuning_forward.5} parent=5 // pred_region
        %s752 = ssub.s32 %s9, 2
        // Predicated region
        $region124: #{fine_tuning_forward.5} parent=122 // pred_check
          %p753 = pneg %p141
        $region125: #{fine_tuning_forward.5} parent=122 // pred_check_branch
          %755 = sbr.rel (%p753) target = $region127
        $region126: #{fine_tuning_forward.5} parent=122 // pred_region
          %s756 = sand.u32 %s126, 1
          %s757 = sand.u32 %s126, 1
          %s758 = smul.addr %s757, 128
          %s759 = scalar_lea.vmem [#allocation4], %s758
        $region127: #{fine_tuning_forward.5} parent=122 // pred_fallthru
          _
      $region123: #{fine_tuning_forward.5} parent=5 // pred_fallthru
        _
    $region6: #{fine_tuning_forward.5} parent=1 // loop_footer
      %s13 = sadd.s32 1, %s9
    $region7: #{fine_tuning_forward.5} parent=1 // loop_footer_branch
      %8 = sbr.rel target = $region3
    $region8: #{fine_tuning_forward.5} parent=1 // loop_exit
      _

// kernel: fine_tuning_forward.4
$region0: #{fine_tuning_forward.4}
  #allocation0 [shape = 'u32[]', space=smem, size = 0x4, offset = 0x4, fixed_abs, tag = 'smem constant byte address 0x4 - core index']
  #allocation1 [shape = 'u32[72,128]{1,0:T(1,128)}', space=vmem, size = 0x9000, scoped, tag = 'internal scratch']
  #allocation2 [shape = 'f32[64,128]{1,0:T(8,128)}', space=vmem, size = 0x8000, scoped, tag = 'scratch operand']
  %s0 = inlined_call_operand.vmem [shape: bf16[64,128], index: 0, kind: input, shape index: {}]
  %s1 = inlined_call_operand.vmem [shape: bf16[128,640], index: 1, kind: input, shape index: {}]
  %s2 = inlined_call_operand.vmem [shape: f32[1,640], index: 2, kind: input, shape index: {}]
  %s3 = inlined_call_operand.vmem [shape: f32[64,640], index: 3, kind: output, shape index: {}]
  %s4 = sld [smem:[#allocation0]]
  $region128: #{fine_tuning_forward.4} parent=0
    _
  %s6 = ssub.s32 1, %s4
  %s7 = scalar_select 0, %s6, %s4
  $region1: #{fine_tuning_forward.4} parent=0
    #allocation3 [shape = 'u8[65536]{0}', space=vmem, size = 0x10000, scoped, tag = 'input window, operand 1']
    #allocation4 [shape = 'u8[65536]{0}', space=vmem, size = 0x10000, scoped, tag = 'output window, operand 0']
    loop: start=0, step=1, limit=7
    $region2: #{fine_tuning_forward.4} parent=1 // loop_pre_header
      _
    $region3: #{fine_tuning_forward.4} parent=1 // loop_header
      %s9 = sphi 0, %s13
      %p10 = scmp.ge.s32.totalorder %s9, 7
      %s16 = sphi 0, %s35
      %s17 = sphi 0, %s31
      %s18 = sphi 0, %s27
      %s19 = sphi 0, %s16
      %s20 = sphi 0, %s17
      %s21 = sphi 0, %s18
      %s22 = sphi 0, %s19
      %s23 = sphi 0, %s20
      %s24 = sphi 0, %s21
      %s40 = sphi 0, %s42
      %s43 = sphi 0, %s40
      %s44 = sphi 0, %s43
      %s60 = sphi 0, %s44
      %s68 = sphi 0, %s70
      %s71 = sphi 0, %s68
      %s72 = sphi 0, %s71
      %s88 = sphi 0, %s72
      %s94 = sphi 0, %s96
      %s97 = sphi 0, %s94
      %s98 = sphi 0, %s97
      %s114 = sphi 0, %s98
      %s122 = sphi 0, %s124
      %s125 = sphi 0, %s122
      %s126 = sphi 0, %s125
      %s142 = sphi 0, %s126
    $region4: #{fine_tuning_forward.4} parent=1 // loop_header_branch
      %12 = sbr.rel (%p10) target = $region8
    $region5: #{fine_tuning_forward.4} parent=1 // loop_body
      %s14 = ssub.s32 %s9, 1
      %s15 = ssub.s32 %s9, 2
      %s25 = sadd.s32 1, %s18
      %p26 = scmp.ge.s32.totalorder %s25, 1
      %s27 = scalar_select %p26, 0, %s25
      %s28 = sadd.s32 1, %s17
      %s29 = scalar_select %p26, %s28, %s17
      %p30 = scmp.ge.s32.totalorder %s29, 5
      %s31 = scalar_select %p30, 0, %s29
      %s32 = sadd.s32 1, %s16
      %s33 = scalar_select %p30, %s32, %s16
      %p34 = scmp.ge.s32.totalorder %s33, 1
      %s35 = scalar_select %p34, 0, %s33
      %s36 = ssub.s32 %s16, %s35
      %s37 = ssub.s32 %s18, %s27
      %s38 = sor.u32 %s36, %s37
      %p39 = scmp.eq.s32.totalorder %s38, 0
      %s41 = sadd.s32 %s40, 1
      %s42 = scalar_select %p39, %s40, %s41
      %p45 = pneg %p39
      %p46 = scmp.eq.s32.totalorder %s9, 4
      %p47 = por %p45, %p46
      %p48 = scmp.ne.s32.totalorder %s40, %s43
      %p49 = scmp.eq.s32.totalorder %s9, 0
      %p50 = por %p48, %p49
      %p51 = scmp.ne.s32.totalorder %s40, %s43
      %p52 = scmp.eq.s32.totalorder %s14, 4
      %p53 = por %p51, %p52
      %p54 = scmp.ne.s32.totalorder %s43, %s44
      %p55 = scmp.eq.s32.totalorder %s14, 0
      %p56 = por %p54, %p55
      %p57 = scmp.ne.s32.totalorder %s43, %s44
      %p58 = scmp.eq.s32.totalorder %s15, 4
      %p59 = por %p57, %p58
      %p61 = scmp.ne.s32.totalorder %s44, %s60
      %p62 = scmp.eq.s32.totalorder %s15, 0
      %p63 = por %p61, %p62
      %s64 = ssub.s32 %s18, %s27
      %s65 = ssub.s32 %s17, %s31
      %s66 = sor.u32 %s64, %s65
      %p67 = scmp.eq.s32.totalorder %s66, 0
      %s69 = sadd.s32 %s68, 1
      %s70 = scalar_select %p67, %s68, %s69
      %p73 = pneg %p67
      %p74 = scmp.eq.s32.totalorder %s9, 4
      %p75 = por %p73, %p74
      %p76 = scmp.ne.s32.totalorder %s68, %s71
      %p77 = scmp.eq.s32.totalorder %s9, 0
      %p78 = por %p76, %p77
      %p79 = scmp.ne.s32.totalorder %s68, %s71
      %p80 = scmp.eq.s32.totalorder %s14, 4
      %p81 = por %p79, %p80
      %p82 = scmp.ne.s32.totalorder %s71, %s72
      %p83 = scmp.eq.s32.totalorder %s14, 0
      %p84 = por %p82, %p83
      %p85 = scmp.ne.s32.totalorder %s71, %s72
      %p86 = scmp.eq.s32.totalorder %s15, 4
      %p87 = por %p85, %p86
      %p89 = scmp.ne.s32.totalorder %s72, %s88
      %p90 = scmp.eq.s32.totalorder %s15, 0
      %p91 = por %p89, %p90
      %s92 = ssub.s32 %s17, %s31
      %p93 = scmp.eq.s32.totalorder %s92, 0
      %s95 = sadd.s32 %s94, 1
      %s96 = scalar_select %p93, %s94, %s95
      %p99 = pneg %p93
      %p100 = scmp.eq.s32.totalorder %s9, 4
      %p101 = por %p99, %p100
      %p102 = scmp.ne.s32.totalorder %s94, %s97
      %p103 = scmp.eq.s32.totalorder %s9, 0
      %p104 = por %p102, %p103
      %p105 = scmp.ne.s32.totalorder %s94, %s97
      %p106 = scmp.eq.s32.totalorder %s14, 4
      %p107 = por %p105, %p106
      %p108 = scmp.ne.s32.totalorder %s97, %s98
      %p109 = scmp.eq.s32.totalorder %s14, 0
      %p110 = por %p108, %p109
      %p111 = scmp.ne.s32.totalorder %s97, %s98
      %p112 = scmp.eq.s32.totalorder %s15, 4
      %p113 = por %p111, %p112
      %p115 = scmp.ne.s32.totalorder %s98, %s114
      %p116 = scmp.eq.s32.totalorder %s15, 0
      %p117 = por %p115, %p116
      %s118 = ssub.s32 %s16, %s35
      %s119 = ssub.s32 %s17, %s31
      %s120 = sor.u32 %s118, %s119
      %p121 = scmp.eq.s32.totalorder %s120, 0
      %s123 = sadd.s32 %s122, 1
      %s124 = scalar_select %p121, %s122, %s123
      %p127 = pneg %p121
      %p128 = scmp.eq.s32.totalorder %s9, 4
      %p129 = por %p127, %p128
      %p130 = scmp.ne.s32.totalorder %s122, %s125
      %p131 = scmp.eq.s32.totalorder %s9, 0
      %p132 = por %p130, %p131
      %p133 = scmp.ne.s32.totalorder %s122, %s125
      %p134 = scmp.eq.s32.totalorder %s14, 4
      %p135 = por %p133, %p134
      %p136 = scmp.ne.s32.totalorder %s125, %s126
      %p137 = scmp.eq.s32.totalorder %s14, 0
      %p138 = por %p136, %p137
      %p139 = scmp.ne.s32.totalorder %s125, %s126
      %p140 = scmp.eq.s32.totalorder %s15, 4
      %p141 = por %p139, %p140
      %p143 = scmp.ne.s32.totalorder %s126, %s142
      %p144 = scmp.eq.s32.totalorder %s15, 0
      %p145 = por %p143, %p144
      %p146 = scmp.le.s32.totalorder 1, %s9
      %p147 = scmp.lt.s32.totalorder %s9, 6
      %p148 = pnand %p146, %p147
      %p149 = pneg %p148
      // Predicated region
      $region9: #{fine_tuning_forward.4} parent=5 // pred_check
        _
      $region10: #{fine_tuning_forward.4} parent=5 // pred_check_branch
        %151 = sbr.rel (%p148) target = $region12
      $region11: #{fine_tuning_forward.4} parent=5 // pred_region
        %s152 = ssub.s32 %s9, 1
        // Predicated region
        $region13: #{fine_tuning_forward.4} parent=11 // pred_check
          %p153 = pneg %p56
        $region14: #{fine_tuning_forward.4} parent=11 // pred_check_branch
          %155 = sbr.rel (%p153) target = $region16
        $region15: #{fine_tuning_forward.4} parent=11 // pred_region
          %s156 = smul.u32 8, %s19
          %p157 = scmp.lt.s32.totalorder %s156, 7
          %s158 = scalar_select %p157, %s156, 7
          %p159 = scmp.lt.s32.totalorder %s21, 0
          %s160 = scalar_select %p159, %s21, 0
          %s161 = sadd.s32 %s160, %s158
          %s162 = smul.addr %s161, 4
          %s163 = scalar_lea.vmem %s0, %s162
          %s164 = smul.u32 8, %s19
        $region16: #{fine_tuning_forward.4} parent=11 // pred_fallthru
          _
      $region12: #{fine_tuning_forward.4} parent=5 // pred_fallthru
        _
      %p165 = scmp.lt.s32.totalorder %s9, 5
      // Predicated region
      $region17: #{fine_tuning_forward.4} parent=5 // pred_check
        %p166 = pneg %p165
      $region18: #{fine_tuning_forward.4} parent=5 // pred_check_branch
        %168 = sbr.rel (%p166) target = $region20
      $region19: #{fine_tuning_forward.4} parent=5 // pred_region
        // Predicated region
        $region21: #{fine_tuning_forward.4} parent=19 // pred_check
          %p169 = pneg %p78
        $region22: #{fine_tuning_forward.4} parent=19 // pred_check_branch
          %171 = sbr.rel (%p169) target = $region24
        $region23: #{fine_tuning_forward.4} parent=19 // pred_region
          %s172 = sand.u32 %s68, 1
          %s173 = sand.u32 %s68, 1
          %s174 = smul.addr %s173, 64
          %s175 = scalar_lea.vmem [#allocation3], %s174
          %s176 = smul.u32 16, %s18
          %s177 = smul.addr %s176, 5
          %s178 = sadd.s32 %s17, %s177
          %s179 = smul.addr %s178, 4
          %s180 = scalar_lea.vmem %s1, %s179
          // Predicated region
          $region25: #{fine_tuning_forward.4} parent=23 // pred_check
            _
          $region26: #{fine_tuning_forward.4} parent=23 // pred_check_branch
            %182 = sbr.rel (0) target = $region28
          $region27: #{fine_tuning_forward.4} parent=23 // pred_region
            // Predicated region
            $region29: #{fine_tuning_forward.4} parent=27 // pred_check
              _
            $region30: #{fine_tuning_forward.4} parent=27 // pred_check_branch
              %184 = sbr.rel target = $region32
            $region31: #{fine_tuning_forward.4} parent=27 // pred_region
              // Predicated region
              $region44: #{fine_tuning_forward.4} parent=31 // pred_check
                _
              $region45: #{fine_tuning_forward.4} parent=31 // pred_check_branch
                %230 = sbr.rel (0) target = $region47
              $region46: #{fine_tuning_forward.4} parent=31 // pred_region
                loop: start=0, step=1, limit=1
                $region48: #{fine_tuning_forward.4} parent=46 // loop_pre_header
                  _
                $region49: #{fine_tuning_forward.4} parent=46 // loop_header
                  %s232 = sphi 0, %s236
                  %p233 = scmp.ge.s32.totalorder %s232, 1
                  %s237 = sphi %s180, %s180
                  %s238 = sphi %s175, %s175
                $region50: #{fine_tuning_forward.4} parent=46 // loop_header_branch
                  %235 = sbr.rel (%p233) target = $region54
                $region51: #{fine_tuning_forward.4} parent=46 // loop_body
                  _
                $region52: #{fine_tuning_forward.4} parent=46 // loop_footer
                  %s236 = sadd.s32 1, %s232
                $region53: #{fine_tuning_forward.4} parent=46 // loop_footer_branch
                  %231 = sbr.rel target = $region49
                $region54: #{fine_tuning_forward.4} parent=46 // loop_exit
                  _
                %s240 = ssub.s32 16, 1
                loop: start=0, step=1, limit=1
                $region55: #{fine_tuning_forward.4} parent=46 // loop_pre_header
                  _
                $region56: #{fine_tuning_forward.4} parent=46 // loop_header
                  %s242 = sphi 0, %s246
                  %p243 = scmp.ge.s32.totalorder %s242, 1
                  %s247 = sphi %s180, %s180
                  %s248 = sphi %s175, %s175
                $region57: #{fine_tuning_forward.4} parent=46 // loop_header_branch
                  %245 = sbr.rel (%p243) target = $region61
                $region58: #{fine_tuning_forward.4} parent=46 // loop_body
                  %v249 = vld [vmem:[%s247] sm:%s240]
                  %250 = vst [vmem:[%s248] sm:%s240] %v249
                  %v251 = vld [vmem:[%s247 + $0x14] sm:%s240]
                  %252 = vst [vmem:[%s248 + $0x4] sm:%s240] %v251
                  %v253 = vld [vmem:[%s247 + $0x28] sm:%s240]
                  %254 = vst [vmem:[%s248 + $0x8] sm:%s240] %v253
                  %v255 = vld [vmem:[%s247 + $0x3c] sm:%s240]
                  %256 = vst [vmem:[%s248 + $0xc] sm:%s240] %v255
                  %v257 = vld [vmem:[%s247 + $0x50] sm:%s240]
                  %258 = vst [vmem:[%s248 + $0x10] sm:%s240] %v257
                  %v259 = vld [vmem:[%s247 + $0x64] sm:%s240]
                  %260 = vst [vmem:[%s248 + $0x14] sm:%s240] %v259
                  %v261 = vld [vmem:[%s247 + $0x78] sm:%s240]
                  %262 = vst [vmem:[%s248 + $0x18] sm:%s240] %v261
                  %v263 = vld [vmem:[%s247 + $0x8c] sm:%s240]
                  %264 = vst [vmem:[%s248 + $0x1c] sm:%s240] %v263
                  %v265 = vld [vmem:[%s247 + $0xa0] sm:%s240]
                  %266 = vst [vmem:[%s248 + $0x20] sm:%s240] %v265
                  %v267 = vld [vmem:[%s247 + $0xb4] sm:%s240]
                  %268 = vst [vmem:[%s248 + $0x24] sm:%s240] %v267
                  %v269 = vld [vmem:[%s247 + $0xc8] sm:%s240]
                  %270 = vst [vmem:[%s248 + $0x28] sm:%s240] %v269
                  %v271 = vld [vmem:[%s247 + $0xdc] sm:%s240]
                  %272 = vst [vmem:[%s248 + $0x2c] sm:%s240] %v271
                  %v273 = vld [vmem:[%s247 + $0xf0] sm:%s240]
                  %274 = vst [vmem:[%s248 + $0x30] sm:%s240] %v273
                  %v275 = vld [vmem:[%s247 + $0x104] sm:%s240]
                  %276 = vst [vmem:[%s248 + $0x34] sm:%s240] %v275
                  %v277 = vld [vmem:[%s247 + $0x118] sm:%s240]
                  %278 = vst [vmem:[%s248 + $0x38] sm:%s240] %v277
                  %v279 = vld [vmem:[%s247 + $0x12c] sm:%s240]
                  %280 = vst [vmem:[%s248 + $0x3c] sm:%s240] %v279
                $region59: #{fine_tuning_forward.4} parent=46 // loop_footer
                  %s246 = sadd.s32 1, %s242
                $region60: #{fine_tuning_forward.4} parent=46 // loop_footer_branch
                  %241 = sbr.rel target = $region56
                $region61: #{fine_tuning_forward.4} parent=46 // loop_exit
                  _
              $region47: #{fine_tuning_forward.4} parent=31 // pred_fallthru
                _
            $region32: #{fine_tuning_forward.4} parent=27 // pred_fallthru
              _
            // Predicated region
            $region33: #{fine_tuning_forward.4} parent=27 // pred_check
              _
            $region34: #{fine_tuning_forward.4} parent=27 // pred_check_branch
              %186 = sbr.rel (0) target = $region36
            $region35: #{fine_tuning_forward.4} parent=27 // pred_region
              %s188 = ssub.s32 16, 1
              loop: start=0, step=1, limit=1
              $region37: #{fine_tuning_forward.4} parent=35 // loop_pre_header
                _
              $region38: #{fine_tuning_forward.4} parent=35 // loop_header
                %s190 = sphi 0, %s194
                %p191 = scmp.ge.s32.totalorder %s190, 1
                %s195 = sphi %s180, %s180
                %s196 = sphi %s175, %s175
              $region39: #{fine_tuning_forward.4} parent=35 // loop_header_branch
                %193 = sbr.rel (%p191) target = $region43
              $region40: #{fine_tuning_forward.4} parent=35 // loop_body
                %v197 = vld [vmem:[%s195] sm:%s188]
                %198 = vst [vmem:[%s196] sm:%s188] %v197
                %v199 = vld [vmem:[%s195 + $0x14] sm:%s188]
                %200 = vst [vmem:[%s196 + $0x4] sm:%s188] %v199
                %v201 = vld [vmem:[%s195 + $0x28] sm:%s188]
                %202 = vst [vmem:[%s196 + $0x8] sm:%s188] %v201
                %v203 = vld [vmem:[%s195 + $0x3c] sm:%s188]
                %204 = vst [vmem:[%s196 + $0xc] sm:%s188] %v203
                %v205 = vld [vmem:[%s195 + $0x50] sm:%s188]
                %206 = vst [vmem:[%s196 + $0x10] sm:%s188] %v205
                %v207 = vld [vmem:[%s195 + $0x64] sm:%s188]
                %208 = vst [vmem:[%s196 + $0x14] sm:%s188] %v207
                %v209 = vld [vmem:[%s195 + $0x78] sm:%s188]
                %210 = vst [vmem:[%s196 + $0x18] sm:%s188] %v209
                %v211 = vld [vmem:[%s195 + $0x8c] sm:%s188]
                %212 = vst [vmem:[%s196 + $0x1c] sm:%s188] %v211
                %v213 = vld [vmem:[%s195 + $0xa0] sm:%s188]
                %214 = vst [vmem:[%s196 + $0x20] sm:%s188] %v213
                %v215 = vld [vmem:[%s195 + $0xb4] sm:%s188]
                %216 = vst [vmem:[%s196 + $0x24] sm:%s188] %v215
                %v217 = vld [vmem:[%s195 + $0xc8] sm:%s188]
                %218 = vst [vmem:[%s196 + $0x28] sm:%s188] %v217
                %v219 = vld [vmem:[%s195 + $0xdc] sm:%s188]
                %220 = vst [vmem:[%s196 + $0x2c] sm:%s188] %v219
                %v221 = vld [vmem:[%s195 + $0xf0] sm:%s188]
                %222 = vst [vmem:[%s196 + $0x30] sm:%s188] %v221
                %v223 = vld [vmem:[%s195 + $0x104] sm:%s188]
                %224 = vst [vmem:[%s196 + $0x34] sm:%s188] %v223
                %v225 = vld [vmem:[%s195 + $0x118] sm:%s188]
                %226 = vst [vmem:[%s196 + $0x38] sm:%s188] %v225
                %v227 = vld [vmem:[%s195 + $0x12c] sm:%s188]
                %228 = vst [vmem:[%s196 + $0x3c] sm:%s188] %v227
              $region41: #{fine_tuning_forward.4} parent=35 // loop_footer
                %s194 = sadd.s32 1, %s190
              $region42: #{fine_tuning_forward.4} parent=35 // loop_footer_branch
                %189 = sbr.rel target = $region38
              $region43: #{fine_tuning_forward.4} parent=35 // loop_exit
                _
            $region36: #{fine_tuning_forward.4} parent=27 // pred_fallthru
              _
          $region28: #{fine_tuning_forward.4} parent=23 // pred_fallthru
            _
          %281 = vnop
        $region24: #{fine_tuning_forward.4} parent=19 // pred_fallthru
          _
        // Predicated region
        $region62: #{fine_tuning_forward.4} parent=19 // pred_check
          %p282 = pneg %p104
        $region63: #{fine_tuning_forward.4} parent=19 // pred_check_branch
          %284 = sbr.rel (%p282) target = $region65
        $region64: #{fine_tuning_forward.4} parent=19 // pred_region
          %p285 = scmp.lt.s32.totalorder %s17, 4
          %s286 = scalar_select %p285, %s17, 4
          %s287 = scalar_lea.vmem %s2, %s286
        $region65: #{fine_tuning_forward.4} parent=19 // pred_fallthru
          _
      $region20: #{fine_tuning_forward.4} parent=5 // pred_fallthru
        _
      %p288 = scmp.le.s32.totalorder 1, %s9
      %p289 = scmp.lt.s32.totalorder %s9, 6
      %p290 = pnand %p288, %p289
      %p291 = pneg %p290
      // Predicated region
      $region66: #{fine_tuning_forward.4} parent=5 // pred_check
        _
      $region67: #{fine_tuning_forward.4} parent=5 // pred_check_branch
        %293 = sbr.rel (%p290) target = $region69
      $region68: #{fine_tuning_forward.4} parent=5 // pred_region
        %s294 = ssub.s32 %s9, 1
        %s295 = sand.u32 %s71, 1
        %s296 = sand.u32 %s71, 1
        %s297 = smul.addr %s296, 64
        %s298 = scalar_lea.vmem [#allocation3], %s297
        // Predicated region
        $region70: #{fine_tuning_forward.4} parent=68 // pred_check
          %p299 = pneg %p84
        $region71: #{fine_tuning_forward.4} parent=68 // pred_check_branch
          %301 = sbr.rel (%p299) target = $region73
        $region72: #{fine_tuning_forward.4} parent=68 // pred_region
          _
        $region73: #{fine_tuning_forward.4} parent=68 // pred_fallthru
          _
        %s302 = smul.u32 8, %s19
        %p303 = scmp.lt.s32.totalorder %s302, 7
        %s304 = scalar_select %p303, %s302, 7
        %p305 = scmp.lt.s32.totalorder %s21, 0
        %s306 = scalar_select %p305, %s21, 0
        %s307 = sadd.s32 %s306, %s304
        %s308 = smul.addr %s307, 4
        %s309 = scalar_lea.vmem %s0, %s308
        %p310 = pneg %p56
        %p311 = pneg %p53
        %s312 = sand.u32 %s71, 1
        %s313 = sand.u32 %s71, 1
        %s314 = smul.addr %s313, 64
        %s315 = scalar_lea.vmem [#allocation3], %s314
        %p316 = pneg %p84
        %p317 = pneg %p81
        %p318 = scmp.lt.s32.totalorder %s20, 4
        %s319 = scalar_select %p318, %s20, 4
        %s320 = scalar_lea.vmem %s2, %s319
        %p321 = pneg %p110
        %p322 = pneg %p107
        %p323 = pneg %p138
        %p324 = pneg %p135
        %s325 = sand.u32 %s125, 1
        %s326 = sand.u32 %s125, 1
        %s327 = smul.addr %s326, 64
        %s328 = scalar_lea.vmem [#allocation4], %s327
        %s329 = smul.u32 8, %s19
        %p330 = scmp.lt.s32.totalorder %s329, 7
        %s331 = scalar_select %p330, %s329, 7
        %p332 = scmp.lt.s32.totalorder %s21, 0
        %s333 = scalar_select %p332, %s21, 0
        %s334 = sadd.s32 %s333, %s331
        %s335 = smul.addr %s334, 4
        %s336 = scalar_lea.vmem %s0, %s335
        %s337 = smul.u32 8, %s19
        %s338 = smul.u32 16, %s21
        %p339 = scmp.lt.s32.totalorder %s20, 4
        %s340 = scalar_select %p339, %s20, 4
        %s341 = scalar_lea.vmem %s2, %s340
        %s342 = smul.u32 8, %s19
        %p343 = scmp.eq.s32.totalorder %s21, 0
        // Predicated region
        $region74: #{fine_tuning_forward.4} parent=68 // pred_check
          %p344 = pneg %p343
        $region75: #{fine_tuning_forward.4} parent=68 // pred_check_branch
          %346 = sbr.rel (%p344) target = $region77
        $region76: #{fine_tuning_forward.4} parent=68 // pred_region
          %347 = vst [vmem:[#allocation2] sm:$0xff] 0.0
          %348 = vst [vmem:[#allocation2 + $0x8] sm:$0xff] 0.0
          %349 = vst [vmem:[#allocation2 + $0x10] sm:$0xff] 0.0
          %350 = vst [vmem:[#allocation2 + $0x18] sm:$0xff] 0.0
          %351 = vst [vmem:[#allocation2 + $0x20] sm:$0xff] 0.0
          %352 = vst [vmem:[#allocation2 + $0x28] sm:$0xff] 0.0
          %353 = vst [vmem:[#allocation2 + $0x30] sm:$0xff] 0.0
          %354 = vst [vmem:[#allocation2 + $0x38] sm:$0xff] 0.0
        $region77: #{fine_tuning_forward.4} parent=68 // pred_fallthru
          _
        %v355 = vld [vmem:[#allocation2] sm:$0xff]
        %v356 = vld [vmem:[#allocation2 + $0x8] sm:$0xff]
        %v357 = vld [vmem:[#allocation2 + $0x10] sm:$0xff]
        %v358 = vld [vmem:[#allocation2 + $0x18] sm:$0xff]
        %v359 = vld [vmem:[#allocation2 + $0x20] sm:$0xff]
        %v360 = vld [vmem:[#allocation2 + $0x28] sm:$0xff]
        %v361 = vld [vmem:[#allocation2 + $0x30] sm:$0xff]
        %v362 = vld [vmem:[#allocation2 + $0x38] sm:$0xff]
        %v363 = vld [vmem:[%s336] sm:$0xf]
        %v364 = vld [vmem:[%s336 + $0x4] sm:$0xf]
        %v365 = vld [vmem:[%s336 + $0x8] sm:$0xf]
        %v366 = vld [vmem:[%s336 + $0xc] sm:$0xf]
        %v367 = vld [vmem:[%s336 + $0x10] sm:$0xf]
        %v368 = vld [vmem:[%s336 + $0x14] sm:$0xf]
        %v369 = vld [vmem:[%s336 + $0x18] sm:$0xf]
        %v370 = vld [vmem:[%s336 + $0x1c] sm:$0xf]
        %v371 = vld [vmem:[%s298] sm:$0xf]
        %v372 = vld [vmem:[%s298 + $0x4] sm:$0xf]
        %v373 = vld [vmem:[%s298 + $0x8] sm:$0xf]
        %v374 = vld [vmem:[%s298 + $0xc] sm:$0xf]
        %v375 = vld [vmem:[%s298 + $0x10] sm:$0xf]
        %v376 = vld [vmem:[%s298 + $0x14] sm:$0xf]
        %v377 = vld [vmem:[%s298 + $0x18] sm:$0xf]
        %v378 = vld [vmem:[%s298 + $0x1c] sm:$0xf]
        %v379 = vld [vmem:[%s298 + $0x20] sm:$0xf]
        %v380 = vld [vmem:[%s298 + $0x24] sm:$0xf]
        %v381 = vld [vmem:[%s298 + $0x28] sm:$0xf]
        %v382 = vld [vmem:[%s298 + $0x2c] sm:$0xf]
        %v383 = vld [vmem:[%s298 + $0x30] sm:$0xf]
        %v384 = vld [vmem:[%s298 + $0x34] sm:$0xf]
        %v385 = vld [vmem:[%s298 + $0x38] sm:$0xf]
        %v386 = vld [vmem:[%s298 + $0x3c] sm:$0xf]
        %v395 = vunpack.c.l.b16 %v363
        %v396 = vunpack.c.l.b16 %v364
        %v397 = vunpack.c.l.b16 %v365
        %v398 = vunpack.c.l.b16 %v366
        %v399 = vunpack.c.l.b16 %v367
        %v400 = vunpack.c.l.b16 %v368
        %v401 = vunpack.c.l.b16 %v369
        %v402 = vunpack.c.l.b16 %v370
        %v403 = vpack.c.b16 %v396, %v395
        %v404 = vpack.c.b16 %v398, %v397
        %v405 = vpack.c.b16 %v400, %v399
        %v406 = vpack.c.b16 %v402, %v401
        %v427 = vunpack.c.l.b16 %v371
        %v428 = vunpack.c.l.b16 %v372
        %v429 = vunpack.c.l.b16 %v373
        %v430 = vunpack.c.l.b16 %v374
        %v431 = vunpack.c.l.b16 %v375
        %v432 = vunpack.c.l.b16 %v376
        %v433 = vunpack.c.l.b16 %v377
        %v434 = vunpack.c.l.b16 %v378
        %v435 = vunpack.c.l.b16 %v379
        %v436 = vunpack.c.l.b16 %v380
        %v437 = vunpack.c.l.b16 %v381
        %v438 = vunpack.c.l.b16 %v382
        %v439 = vunpack.c.l.b16 %v383
        %v440 = vunpack.c.l.b16 %v384
        %v441 = vunpack.c.l.b16 %v385
        %v442 = vunpack.c.l.b16 %v386
        %v443 = vpack.c.b16 %v428, %v427
        %v444 = vpack.c.b16 %v430, %v429
        %v445 = vpack.c.b16 %v432, %v431
        %v446 = vpack.c.b16 %v434, %v433
        %v447 = vpack.c.b16 %v436, %v435
        %v448 = vpack.c.b16 %v438, %v437
        %v449 = vpack.c.b16 %v440, %v439
        %v450 = vpack.c.b16 %v442, %v441
        %459 = vmatpush.bf16.msra.mxu0 %v450
        %460 = vmatpush.bf16.msra.mxu0 %v449
        %461 = vmatpush.bf16.msra.mxu0 %v448
        %462 = vmatpush.bf16.msra.mxu0 %v447
        %463 = vmatpush.bf16.msra.mxu0 %v446
        %464 = vmatpush.bf16.msra.mxu0 %v445
        %465 = vmatpush.bf16.msra.mxu0 %v444
        %466 = vmatpush.bf16.msra.mxu0 %v443
        %467 = vmatmul.bf16.gmra.mxu0 %v403
        %v468 = vpop.f32.mrf.mxu0
        %v469 = vadd.f32 0.0, %v468
        %v470 = vpop.f32.mrf.mxu0
        %v471 = vadd.f32 0.0, %v470
        %472 = vmatmul.bf16.gmra.mxu0 %v404
        %v473 = vpop.f32.mrf.mxu0
        %v474 = vadd.f32 0.0, %v473
        %v475 = vpop.f32.mrf.mxu0
        %v476 = vadd.f32 0.0, %v475
        %477 = vmatmul.bf16.gmra.mxu0 %v405
        %v478 = vpop.f32.mrf.mxu0
        %v479 = vadd.f32 0.0, %v478
        %v480 = vpop.f32.mrf.mxu0
        %v481 = vadd.f32 0.0, %v480
        %482 = vmatmul.bf16.gmra.mxu0 %v406
        %v483 = vpop.f32.mrf.mxu0
        %v484 = vadd.f32 0.0, %v483
        %v485 = vpop.f32.mrf.mxu0
        %v486 = vadd.f32 0.0, %v485
        %487 = vdwg.mxu0
        %v488 = vadd.f32 %v355, %v469
        %v489 = vadd.f32 %v356, %v471
        %v490 = vadd.f32 %v357, %v474
        %v491 = vadd.f32 %v358, %v476
        %v492 = vadd.f32 %v359, %v479
        %v493 = vadd.f32 %v360, %v481
        %v494 = vadd.f32 %v361, %v484
        %v495 = vadd.f32 %v362, %v486
        %496 = vst [vmem:[#allocation2] sm:$0xff] %v488
        %497 = vst [vmem:[#allocation2 + $0x8] sm:$0xff] %v489
        %498 = vst [vmem:[#allocation2 + $0x10] sm:$0xff] %v490
        %499 = vst [vmem:[#allocation2 + $0x18] sm:$0xff] %v491
        %500 = vst [vmem:[#allocation2 + $0x20] sm:$0xff] %v492
        %501 = vst [vmem:[#allocation2 + $0x28] sm:$0xff] %v493
        %502 = vst [vmem:[#allocation2 + $0x30] sm:$0xff] %v494
        %503 = vst [vmem:[#allocation2 + $0x38] sm:$0xff] %v495
        // Predicated region
        $region78: #{fine_tuning_forward.4} parent=68 // pred_check
          %p504 = pneg %p343
        $region79: #{fine_tuning_forward.4} parent=68 // pred_check_branch
          %506 = sbr.rel (%p504) target = $region81
        $region80: #{fine_tuning_forward.4} parent=68 // pred_region
          %v507 = vld [vmem:[#allocation2] sm:$0xff]
          %v508 = vld [vmem:[#allocation2 + $0x8] sm:$0xff]
          %v509 = vld [vmem:[#allocation2 + $0x10] sm:$0xff]
          %v510 = vld [vmem:[#allocation2 + $0x18] sm:$0xff]
          %v511 = vld [vmem:[#allocation2 + $0x20] sm:$0xff]
          %v512 = vld [vmem:[#allocation2 + $0x28] sm:$0xff]
          %v513 = vld [vmem:[#allocation2 + $0x30] sm:$0xff]
          %v514 = vld [vmem:[#allocation2 + $0x38] sm:$0xff]
          %v515 = vld [vmem:[%s341] sm:$0x1]
          %v517 = vperm.slane %v515, 0
          %v519 = vadd.f32 %v507, %v517
          %v520 = vadd.f32 %v508, %v517
          %v521 = vadd.f32 %v509, %v517
          %v522 = vadd.f32 %v510, %v517
          %v523 = vadd.f32 %v511, %v517
          %v524 = vadd.f32 %v512, %v517
          %v525 = vadd.f32 %v513, %v517
          %v526 = vadd.f32 %v514, %v517
          %v527 = vmax.f32 %v519, 0.0
          %v528 = vmax.f32 %v520, 0.0
          %v529 = vmax.f32 %v521, 0.0
          %v530 = vmax.f32 %v522, 0.0
          %v531 = vmax.f32 %v523, 0.0
          %v532 = vmax.f32 %v524, 0.0
          %v533 = vmax.f32 %v525, 0.0
          %v534 = vmax.f32 %v526, 0.0
          %535 = vst [vmem:[%s328] sm:$0xff] %v527
          %536 = vst [vmem:[%s328 + $0x8] sm:$0xff] %v528
          %537 = vst [vmem:[%s328 + $0x10] sm:$0xff] %v529
          %538 = vst [vmem:[%s328 + $0x18] sm:$0xff] %v530
          %539 = vst [vmem:[%s328 + $0x20] sm:$0xff] %v531
          %540 = vst [vmem:[%s328 + $0x28] sm:$0xff] %v532
          %541 = vst [vmem:[%s328 + $0x30] sm:$0xff] %v533
          %542 = vst [vmem:[%s328 + $0x38] sm:$0xff] %v534
        $region81: #{fine_tuning_forward.4} parent=68 // pred_fallthru
          _
        %s543 = sand.u32 %s125, 1
        %s544 = sand.u32 %s125, 1
        %s545 = smul.addr %s544, 64
        %s546 = scalar_lea.vmem [#allocation4], %s545
        // Predicated region
        $region82: #{fine_tuning_forward.4} parent=68 // pred_check
          %p547 = pneg %p135
        $region83: #{fine_tuning_forward.4} parent=68 // pred_check_branch
          %549 = sbr.rel (%p547) target = $region85
        $region84: #{fine_tuning_forward.4} parent=68 // pred_region
          %s550 = smul.u32 8, %s19
          %s551 = smul.addr %s550, 5
          %s552 = sadd.s32 %s20, %s551
          %s553 = smul.addr %s552, 8
          %s554 = scalar_lea.vmem %s3, %s553
          // Predicated region
          $region86: #{fine_tuning_forward.4} parent=84 // pred_check
            _
          $region87: #{fine_tuning_forward.4} parent=84 // pred_check_branch
            %556 = sbr.rel (0) target = $region89
          $region88: #{fine_tuning_forward.4} parent=84 // pred_region
            // Predicated region
            $region90: #{fine_tuning_forward.4} parent=88 // pred_check
              _
            $region91: #{fine_tuning_forward.4} parent=88 // pred_check_branch
              %558 = sbr.rel (0) target = $region93
            $region92: #{fine_tuning_forward.4} parent=88 // pred_region
              // Predicated region
              $region105: #{fine_tuning_forward.4} parent=92 // pred_check
                _
              $region106: #{fine_tuning_forward.4} parent=92 // pred_check_branch
                %588 = sbr.rel (0) target = $region108
              $region107: #{fine_tuning_forward.4} parent=92 // pred_region
                loop: start=0, step=1, limit=1
                $region109: #{fine_tuning_forward.4} parent=107 // loop_pre_header
                  _
                $region110: #{fine_tuning_forward.4} parent=107 // loop_header
                  %s590 = sphi 0, %s594
                  %p591 = scmp.ge.s32.totalorder %s590, 1
                  %s595 = sphi %s546, %s546
                  %s596 = sphi %s554, %s554
                $region111: #{fine_tuning_forward.4} parent=107 // loop_header_branch
                  %593 = sbr.rel (%p591) target = $region115
                $region112: #{fine_tuning_forward.4} parent=107 // loop_body
                  %v597 = vld [vmem:[%s595] sm:$0xff]
                  %598 = vst [vmem:[%s596] sm:$0xff] %v597
                  %v599 = vld [vmem:[%s595 + $0x8] sm:$0xff]
                  %600 = vst [vmem:[%s596 + $0x28] sm:$0xff] %v599
                  %v601 = vld [vmem:[%s595 + $0x10] sm:$0xff]
                  %602 = vst [vmem:[%s596 + $0x50] sm:$0xff] %v601
                  %v603 = vld [vmem:[%s595 + $0x18] sm:$0xff]
                  %604 = vst [vmem:[%s596 + $0x78] sm:$0xff] %v603
                  %v605 = vld [vmem:[%s595 + $0x20] sm:$0xff]
                  %606 = vst [vmem:[%s596 + $0xa0] sm:$0xff] %v605
                  %v607 = vld [vmem:[%s595 + $0x28] sm:$0xff]
                  %608 = vst [vmem:[%s596 + $0xc8] sm:$0xff] %v607
                  %v609 = vld [vmem:[%s595 + $0x30] sm:$0xff]
                  %610 = vst [vmem:[%s596 + $0xf0] sm:$0xff] %v609
                  %v611 = vld [vmem:[%s595 + $0x38] sm:$0xff]
                  %612 = vst [vmem:[%s596 + $0x118] sm:$0xff] %v611
                $region113: #{fine_tuning_forward.4} parent=107 // loop_footer
                  %s594 = sadd.s32 1, %s590
                $region114: #{fine_tuning_forward.4} parent=107 // loop_footer_branch
                  %589 = sbr.rel target = $region110
                $region115: #{fine_tuning_forward.4} parent=107 // loop_exit
                  _
              $region108: #{fine_tuning_forward.4} parent=92 // pred_fallthru
                _
              // Predicated region
              $region116: #{fine_tuning_forward.4} parent=92 // pred_check
                _
              $region117: #{fine_tuning_forward.4} parent=92 // pred_check_branch
                %614 = sbr.rel target = $region119
              $region118: #{fine_tuning_forward.4} parent=92 // pred_region
                _
              $region119: #{fine_tuning_forward.4} parent=92 // pred_fallthru
                _
            $region93: #{fine_tuning_forward.4} parent=88 // pred_fallthru
              _
            // Predicated region
            $region94: #{fine_tuning_forward.4} parent=88 // pred_check
              _
            $region95: #{fine_tuning_forward.4} parent=88 // pred_check_branch
              %560 = sbr.rel target = $region97
            $region96: #{fine_tuning_forward.4} parent=88 // pred_region
              %s562 = ssub.s32 256, 1
              loop: start=0, step=1, limit=1
              $region98: #{fine_tuning_forward.4} parent=96 // loop_pre_header
                _
              $region99: #{fine_tuning_forward.4} parent=96 // loop_header
                %s564 = sphi 0, %s568
                %p565 = scmp.ge.s32.totalorder %s564, 1
                %s569 = sphi %s546, %s546
                %s570 = sphi %s554, %s554
              $region100: #{fine_tuning_forward.4} parent=96 // loop_header_branch
                %567 = sbr.rel (%p565) target = $region104
              $region101: #{fine_tuning_forward.4} parent=96 // loop_body
                %v571 = vld [vmem:[%s569] sm:%s562]
                %572 = vst [vmem:[%s570] sm:%s562] %v571
                %v573 = vld [vmem:[%s569 + $0x8] sm:%s562]
                %574 = vst [vmem:[%s570 + $0x28] sm:%s562] %v573
                %v575 = vld [vmem:[%s569 + $0x10] sm:%s562]
                %576 = vst [vmem:[%s570 + $0x50] sm:%s562] %v575
                %v577 = vld [vmem:[%s569 + $0x18] sm:%s562]
                %578 = vst [vmem:[%s570 + $0x78] sm:%s562] %v577
                %v579 = vld [vmem:[%s569 + $0x20] sm:%s562]
                %580 = vst [vmem:[%s570 + $0xa0] sm:%s562] %v579
                %v581 = vld [vmem:[%s569 + $0x28] sm:%s562]
                %582 = vst [vmem:[%s570 + $0xc8] sm:%s562] %v581
                %v583 = vld [vmem:[%s569 + $0x30] sm:%s562]
                %584 = vst [vmem:[%s570 + $0xf0] sm:%s562] %v583
                %v585 = vld [vmem:[%s569 + $0x38] sm:%s562]
                %586 = vst [vmem:[%s570 + $0x118] sm:%s562] %v585
              $region102: #{fine_tuning_forward.4} parent=96 // loop_footer
                %s568 = sadd.s32 1, %s564
              $region103: #{fine_tuning_forward.4} parent=96 // loop_footer_branch
                %563 = sbr.rel target = $region99
              $region104: #{fine_tuning_forward.4} parent=96 // loop_exit
                _
            $region97: #{fine_tuning_forward.4} parent=88 // pred_fallthru
              _
          $region89: #{fine_tuning_forward.4} parent=84 // pred_fallthru
            _
          %615 = vnop
        $region85: #{fine_tuning_forward.4} parent=68 // pred_fallthru
          _
      $region69: #{fine_tuning_forward.4} parent=5 // pred_fallthru
        _
      %p616 = scmp.le.s32.totalorder 2, %s9
      // Predicated region
      $region120: #{fine_tuning_forward.4} parent=5 // pred_check
        %p617 = pneg %p616
      $region121: #{fine_tuning_forward.4} parent=5 // pred_check_branch
        %619 = sbr.rel (%p617) target = $region123
      $region122: #{fine_tuning_forward.4} parent=5 // pred_region
        %s620 = ssub.s32 %s9, 2
        // Predicated region
        $region124: #{fine_tuning_forward.4} parent=122 // pred_check
          %p621 = pneg %p141
        $region125: #{fine_tuning_forward.4} parent=122 // pred_check_branch
          %623 = sbr.rel (%p621) target = $region127
        $region126: #{fine_tuning_forward.4} parent=122 // pred_region
          %s624 = sand.u32 %s126, 1
          %s625 = sand.u32 %s126, 1
          %s626 = smul.addr %s625, 64
          %s627 = scalar_lea.vmem [#allocation4], %s626
        $region127: #{fine_tuning_forward.4} parent=122 // pred_fallthru
          _
      $region123: #{fine_tuning_forward.4} parent=5 // pred_fallthru
        _
    $region6: #{fine_tuning_forward.4} parent=1 // loop_footer
      %s13 = sadd.s32 1, %s9
    $region7: #{fine_tuning_forward.4} parent=1 // loop_footer_branch
      %8 = sbr.rel target = $region3
    $region8: #{fine_tuning_forward.4} parent=1 // loop_exit
      _

// kernel: fine_tuning_forward.6
$region0: #{fine_tuning_forward.6}
  #allocation0 [shape = 'u32[]', space=smem, size = 0x4, offset = 0x4, fixed_abs, tag = 'smem constant byte address 0x4 - core index']
  #allocation1 [shape = 'u32[72,128]{1,0:T(1,128)}', space=vmem, size = 0x9000, scoped, tag = 'internal scratch']
  #allocation2 [shape = 'f32[64,128]{1,0:T(8,128)}', space=vmem, size = 0x8000, scoped, tag = 'scratch operand']
  %s0 = inlined_call_operand.vmem [shape: bf16[64,256], index: 0, kind: input, shape index: {}]
  %s1 = inlined_call_operand.vmem [shape: bf16[256,640], index: 1, kind: input, shape index: {}]
  %s2 = inlined_call_operand.vmem [shape: f32[1,640], index: 2, kind: input, shape index: {}]
  %s3 = inlined_call_operand.vmem [shape: f32[64,640], index: 3, kind: output, shape index: {}]
  %s4 = sld [smem:[#allocation0]]
  $region128: #{fine_tuning_forward.6} parent=0
    _
  %s6 = ssub.s32 1, %s4
  %s7 = scalar_select 0, %s6, %s4
  $region1: #{fine_tuning_forward.6} parent=0
    #allocation3 [shape = 'u8[131072]{0}', space=vmem, size = 0x20000, scoped, tag = 'input window, operand 1']
    #allocation4 [shape = 'u8[65536]{0}', space=vmem, size = 0x10000, scoped, tag = 'output window, operand 0']
    loop: start=0, step=1, limit=7
    $region2: #{fine_tuning_forward.6} parent=1 // loop_pre_header
      _
    $region3: #{fine_tuning_forward.6} parent=1 // loop_header
      %s9 = sphi 0, %s13
      %p10 = scmp.ge.s32.totalorder %s9, 7
      %s16 = sphi 0, %s35
      %s17 = sphi 0, %s31
      %s18 = sphi 0, %s27
      %s19 = sphi 0, %s16
      %s20 = sphi 0, %s17
      %s21 = sphi 0, %s18
      %s22 = sphi 0, %s19
      %s23 = sphi 0, %s20
      %s24 = sphi 0, %s21
      %s40 = sphi 0, %s42
      %s43 = sphi 0, %s40
      %s44 = sphi 0, %s43
      %s60 = sphi 0, %s44
      %s68 = sphi 0, %s70
      %s71 = sphi 0, %s68
      %s72 = sphi 0, %s71
      %s88 = sphi 0, %s72
      %s94 = sphi 0, %s96
      %s97 = sphi 0, %s94
      %s98 = sphi 0, %s97
      %s114 = sphi 0, %s98
      %s122 = sphi 0, %s124
      %s125 = sphi 0, %s122
      %s126 = sphi 0, %s125
      %s142 = sphi 0, %s126
    $region4: #{fine_tuning_forward.6} parent=1 // loop_header_branch
      %12 = sbr.rel (%p10) target = $region8
    $region5: #{fine_tuning_forward.6} parent=1 // loop_body
      %s14 = ssub.s32 %s9, 1
      %s15 = ssub.s32 %s9, 2
      %s25 = sadd.s32 1, %s18
      %p26 = scmp.ge.s32.totalorder %s25, 1
      %s27 = scalar_select %p26, 0, %s25
      %s28 = sadd.s32 1, %s17
      %s29 = scalar_select %p26, %s28, %s17
      %p30 = scmp.ge.s32.totalorder %s29, 5
      %s31 = scalar_select %p30, 0, %s29
      %s32 = sadd.s32 1, %s16
      %s33 = scalar_select %p30, %s32, %s16
      %p34 = scmp.ge.s32.totalorder %s33, 1
      %s35 = scalar_select %p34, 0, %s33
      %s36 = ssub.s32 %s16, %s35
      %s37 = ssub.s32 %s18, %s27
      %s38 = sor.u32 %s36, %s37
      %p39 = scmp.eq.s32.totalorder %s38, 0
      %s41 = sadd.s32 %s40, 1
      %s42 = scalar_select %p39, %s40, %s41
      %p45 = pneg %p39
      %p46 = scmp.eq.s32.totalorder %s9, 4
      %p47 = por %p45, %p46
      %p48 = scmp.ne.s32.totalorder %s40, %s43
      %p49 = scmp.eq.s32.totalorder %s9, 0
      %p50 = por %p48, %p49
      %p51 = scmp.ne.s32.totalorder %s40, %s43
      %p52 = scmp.eq.s32.totalorder %s14, 4
      %p53 = por %p51, %p52
      %p54 = scmp.ne.s32.totalorder %s43, %s44
      %p55 = scmp.eq.s32.totalorder %s14, 0
      %p56 = por %p54, %p55
      %p57 = scmp.ne.s32.totalorder %s43, %s44
      %p58 = scmp.eq.s32.totalorder %s15, 4
      %p59 = por %p57, %p58
      %p61 = scmp.ne.s32.totalorder %s44, %s60
      %p62 = scmp.eq.s32.totalorder %s15, 0
      %p63 = por %p61, %p62
      %s64 = ssub.s32 %s18, %s27
      %s65 = ssub.s32 %s17, %s31
      %s66 = sor.u32 %s64, %s65
      %p67 = scmp.eq.s32.totalorder %s66, 0
      %s69 = sadd.s32 %s68, 1
      %s70 = scalar_select %p67, %s68, %s69
      %p73 = pneg %p67
      %p74 = scmp.eq.s32.totalorder %s9, 4
      %p75 = por %p73, %p74
      %p76 = scmp.ne.s32.totalorder %s68, %s71
      %p77 = scmp.eq.s32.totalorder %s9, 0
      %p78 = por %p76, %p77
      %p79 = scmp.ne.s32.totalorder %s68, %s71
      %p80 = scmp.eq.s32.totalorder %s14, 4
      %p81 = por %p79, %p80
      %p82 = scmp.ne.s32.totalorder %s71, %s72
      %p83 = scmp.eq.s32.totalorder %s14, 0
      %p84 = por %p82, %p83
      %p85 = scmp.ne.s32.totalorder %s71, %s72
      %p86 = scmp.eq.s32.totalorder %s15, 4
      %p87 = por %p85, %p86
      %p89 = scmp.ne.s32.totalorder %s72, %s88
      %p90 = scmp.eq.s32.totalorder %s15, 0
      %p91 = por %p89, %p90
      %s92 = ssub.s32 %s17, %s31
      %p93 = scmp.eq.s32.totalorder %s92, 0
      %s95 = sadd.s32 %s94, 1
      %s96 = scalar_select %p93, %s94, %s95
      %p99 = pneg %p93
      %p100 = scmp.eq.s32.totalorder %s9, 4
      %p101 = por %p99, %p100
      %p102 = scmp.ne.s32.totalorder %s94, %s97
      %p103 = scmp.eq.s32.totalorder %s9, 0
      %p104 = por %p102, %p103
      %p105 = scmp.ne.s32.totalorder %s94, %s97
      %p106 = scmp.eq.s32.totalorder %s14, 4
      %p107 = por %p105, %p106
      %p108 = scmp.ne.s32.totalorder %s97, %s98
      %p109 = scmp.eq.s32.totalorder %s14, 0
      %p110 = por %p108, %p109
      %p111 = scmp.ne.s32.totalorder %s97, %s98
      %p112 = scmp.eq.s32.totalorder %s15, 4
      %p113 = por %p111, %p112
      %p115 = scmp.ne.s32.totalorder %s98, %s114
      %p116 = scmp.eq.s32.totalorder %s15, 0
      %p117 = por %p115, %p116
      %s118 = ssub.s32 %s16, %s35
      %s119 = ssub.s32 %s17, %s31
      %s120 = sor.u32 %s118, %s119
      %p121 = scmp.eq.s32.totalorder %s120, 0
      %s123 = sadd.s32 %s122, 1
      %s124 = scalar_select %p121, %s122, %s123
      %p127 = pneg %p121
      %p128 = scmp.eq.s32.totalorder %s9, 4
      %p129 = por %p127, %p128
      %p130 = scmp.ne.s32.totalorder %s122, %s125
      %p131 = scmp.eq.s32.totalorder %s9, 0
      %p132 = por %p130, %p131
      %p133 = scmp.ne.s32.totalorder %s122, %s125
      %p134 = scmp.eq.s32.totalorder %s14, 4
      %p135 = por %p133, %p134
      %p136 = scmp.ne.s32.totalorder %s125, %s126
      %p137 = scmp.eq.s32.totalorder %s14, 0
      %p138 = por %p136, %p137
      %p139 = scmp.ne.s32.totalorder %s125, %s126
      %p140 = scmp.eq.s32.totalorder %s15, 4
      %p141 = por %p139, %p140
      %p143 = scmp.ne.s32.totalorder %s126, %s142
      %p144 = scmp.eq.s32.totalorder %s15, 0
      %p145 = por %p143, %p144
      %p146 = scmp.le.s32.totalorder 1, %s9
      %p147 = scmp.lt.s32.totalorder %s9, 6
      %p148 = pnand %p146, %p147
      %p149 = pneg %p148
      // Predicated region
      $region9: #{fine_tuning_forward.6} parent=5 // pred_check
        _
      $region10: #{fine_tuning_forward.6} parent=5 // pred_check_branch
        %151 = sbr.rel (%p148) target = $region12
      $region11: #{fine_tuning_forward.6} parent=5 // pred_region
        %s152 = ssub.s32 %s9, 1
        // Predicated region
        $region13: #{fine_tuning_forward.6} parent=11 // pred_check
          %p153 = pneg %p56
        $region14: #{fine_tuning_forward.6} parent=11 // pred_check_branch
          %155 = sbr.rel (%p153) target = $region16
        $region15: #{fine_tuning_forward.6} parent=11 // pred_region
          %s156 = smul.u32 8, %s19
          %s157 = smul.u32 2, %s21
          %p158 = scmp.lt.s32.totalorder %s156, 7
          %s159 = scalar_select %p158, %s156, 7
          %p160 = scmp.lt.s32.totalorder %s157, 1
          %s161 = scalar_select %p160, %s157, 1
          %s162 = smul.addr %s159, 2
          %s163 = sadd.s32 %s161, %s162
          %s164 = smul.addr %s163, 4
          %s165 = scalar_lea.vmem %s0, %s164
          %s166 = smul.u32 8, %s19
          %s167 = smul.u32 2, %s21
        $region16: #{fine_tuning_forward.6} parent=11 // pred_fallthru
          _
      $region12: #{fine_tuning_forward.6} parent=5 // pred_fallthru
        _
      %p168 = scmp.lt.s32.totalorder %s9, 5
      // Predicated region
      $region17: #{fine_tuning_forward.6} parent=5 // pred_check
        %p169 = pneg %p168
      $region18: #{fine_tuning_forward.6} parent=5 // pred_check_branch
        %171 = sbr.rel (%p169) target = $region20
      $region19: #{fine_tuning_forward.6} parent=5 // pred_region
        // Predicated region
        $region21: #{fine_tuning_forward.6} parent=19 // pred_check
          %p172 = pneg %p78
        $region22: #{fine_tuning_forward.6} parent=19 // pred_check_branch
          %174 = sbr.rel (%p172) target = $region24
        $region23: #{fine_tuning_forward.6} parent=19 // pred_region
          %s175 = sand.u32 %s68, 1
          %s176 = sand.u32 %s68, 1
          %s177 = smul.addr %s176, 128
          %s178 = scalar_lea.vmem [#allocation3], %s177
          %s179 = smul.u32 32, %s18
          %s180 = smul.addr %s179, 5
          %s181 = sadd.s32 %s17, %s180
          %s182 = smul.addr %s181, 4
          %s183 = scalar_lea.vmem %s1, %s182
          // Predicated region
          $region25: #{fine_tuning_forward.6} parent=23 // pred_check
            _
          $region26: #{fine_tuning_forward.6} parent=23 // pred_check_branch
            %185 = sbr.rel (0) target = $region28
          $region27: #{fine_tuning_forward.6} parent=23 // pred_region
            // Predicated region
            $region29: #{fine_tuning_forward.6} parent=27 // pred_check
              _
            $region30: #{fine_tuning_forward.6} parent=27 // pred_check_branch
              %187 = sbr.rel target = $region32
            $region31: #{fine_tuning_forward.6} parent=27 // pred_region
              // Predicated region
              $region44: #{fine_tuning_forward.6} parent=31 // pred_check
                _
              $region45: #{fine_tuning_forward.6} parent=31 // pred_check_branch
                %265 = sbr.rel (0) target = $region47
              $region46: #{fine_tuning_forward.6} parent=31 // pred_region
                loop: start=0, step=1, limit=1
                $region48: #{fine_tuning_forward.6} parent=46 // loop_pre_header
                  _
                $region49: #{fine_tuning_forward.6} parent=46 // loop_header
                  %s267 = sphi 0, %s271
                  %p268 = scmp.ge.s32.totalorder %s267, 1
                  %s272 = sphi %s183, %s183
                  %s273 = sphi %s178, %s178
                $region50: #{fine_tuning_forward.6} parent=46 // loop_header_branch
                  %270 = sbr.rel (%p268) target = $region54
                $region51: #{fine_tuning_forward.6} parent=46 // loop_body
                  _
                $region52: #{fine_tuning_forward.6} parent=46 // loop_footer
                  %s271 = sadd.s32 1, %s267
                $region53: #{fine_tuning_forward.6} parent=46 // loop_footer_branch
                  %266 = sbr.rel target = $region49
                $region54: #{fine_tuning_forward.6} parent=46 // loop_exit
                  _
                %s275 = ssub.s32 16, 1
                loop: start=0, step=1, limit=1
                $region55: #{fine_tuning_forward.6} parent=46 // loop_pre_header
                  _
                $region56: #{fine_tuning_forward.6} parent=46 // loop_header
                  %s277 = sphi 0, %s281
                  %p278 = scmp.ge.s32.totalorder %s277, 1
                  %s282 = sphi %s183, %s183
                  %s283 = sphi %s178, %s178
                $region57: #{fine_tuning_forward.6} parent=46 // loop_header_branch
                  %280 = sbr.rel (%p278) target = $region61
                $region58: #{fine_tuning_forward.6} parent=46 // loop_body
                  %v284 = vld [vmem:[%s282] sm:%s275]
                  %285 = vst [vmem:[%s283] sm:%s275] %v284
                  %v286 = vld [vmem:[%s282 + $0x14] sm:%s275]
                  %287 = vst [vmem:[%s283 + $0x4] sm:%s275] %v286
                  %v288 = vld [vmem:[%s282 + $0x28] sm:%s275]
                  %289 = vst [vmem:[%s283 + $0x8] sm:%s275] %v288
                  %v290 = vld [vmem:[%s282 + $0x3c] sm:%s275]
                  %291 = vst [vmem:[%s283 + $0xc] sm:%s275] %v290
                  %v292 = vld [vmem:[%s282 + $0x50] sm:%s275]
                  %293 = vst [vmem:[%s283 + $0x10] sm:%s275] %v292
                  %v294 = vld [vmem:[%s282 + $0x64] sm:%s275]
                  %295 = vst [vmem:[%s283 + $0x14] sm:%s275] %v294
                  %v296 = vld [vmem:[%s282 + $0x78] sm:%s275]
                  %297 = vst [vmem:[%s283 + $0x18] sm:%s275] %v296
                  %v298 = vld [vmem:[%s282 + $0x8c] sm:%s275]
                  %299 = vst [vmem:[%s283 + $0x1c] sm:%s275] %v298
                  %v300 = vld [vmem:[%s282 + $0xa0] sm:%s275]
                  %301 = vst [vmem:[%s283 + $0x20] sm:%s275] %v300
                  %v302 = vld [vmem:[%s282 + $0xb4] sm:%s275]
                  %303 = vst [vmem:[%s283 + $0x24] sm:%s275] %v302
                  %v304 = vld [vmem:[%s282 + $0xc8] sm:%s275]
                  %305 = vst [vmem:[%s283 + $0x28] sm:%s275] %v304
                  %v306 = vld [vmem:[%s282 + $0xdc] sm:%s275]
                  %307 = vst [vmem:[%s283 + $0x2c] sm:%s275] %v306
                  %v308 = vld [vmem:[%s282 + $0xf0] sm:%s275]
                  %309 = vst [vmem:[%s283 + $0x30] sm:%s275] %v308
                  %v310 = vld [vmem:[%s282 + $0x104] sm:%s275]
                  %311 = vst [vmem:[%s283 + $0x34] sm:%s275] %v310
                  %v312 = vld [vmem:[%s282 + $0x118] sm:%s275]
                  %313 = vst [vmem:[%s283 + $0x38] sm:%s275] %v312
                  %v314 = vld [vmem:[%s282 + $0x12c] sm:%s275]
                  %315 = vst [vmem:[%s283 + $0x3c] sm:%s275] %v314
                  %v316 = vld [vmem:[%s282 + $0x140] sm:%s275]
                  %317 = vst [vmem:[%s283 + $0x40] sm:%s275] %v316
                  %v318 = vld [vmem:[%s282 + $0x154] sm:%s275]
                  %319 = vst [vmem:[%s283 + $0x44] sm:%s275] %v318
                  %v320 = vld [vmem:[%s282 + $0x168] sm:%s275]
                  %321 = vst [vmem:[%s283 + $0x48] sm:%s275] %v320
                  %v322 = vld [vmem:[%s282 + $0x17c] sm:%s275]
                  %323 = vst [vmem:[%s283 + $0x4c] sm:%s275] %v322
                  %v324 = vld [vmem:[%s282 + $0x190] sm:%s275]
                  %325 = vst [vmem:[%s283 + $0x50] sm:%s275] %v324
                  %v326 = vld [vmem:[%s282 + $0x1a4] sm:%s275]
                  %327 = vst [vmem:[%s283 + $0x54] sm:%s275] %v326
                  %v328 = vld [vmem:[%s282 + $0x1b8] sm:%s275]
                  %329 = vst [vmem:[%s283 + $0x58] sm:%s275] %v328
                  %v330 = vld [vmem:[%s282 + $0x1cc] sm:%s275]
                  %331 = vst [vmem:[%s283 + $0x5c] sm:%s275] %v330
                  %v332 = vld [vmem:[%s282 + $0x1e0] sm:%s275]
                  %333 = vst [vmem:[%s283 + $0x60] sm:%s275] %v332
                  %v334 = vld [vmem:[%s282 + $0x1f4] sm:%s275]
                  %335 = vst [vmem:[%s283 + $0x64] sm:%s275] %v334
                  %v336 = vld [vmem:[%s282 + $0x208] sm:%s275]
                  %337 = vst [vmem:[%s283 + $0x68] sm:%s275] %v336
                  %v338 = vld [vmem:[%s282 + $0x21c] sm:%s275]
                  %339 = vst [vmem:[%s283 + $0x6c] sm:%s275] %v338
                  %v340 = vld [vmem:[%s282 + $0x230] sm:%s275]
                  %341 = vst [vmem:[%s283 + $0x70] sm:%s275] %v340
                  %v342 = vld [vmem:[%s282 + $0x244] sm:%s275]
                  %343 = vst [vmem:[%s283 + $0x74] sm:%s275] %v342
                  %v344 = vld [vmem:[%s282 + $0x258] sm:%s275]
                  %345 = vst [vmem:[%s283 + $0x78] sm:%s275] %v344
                  %v346 = vld [vmem:[%s282 + $0x26c] sm:%s275]
                  %347 = vst [vmem:[%s283 + $0x7c] sm:%s275] %v346
                $region59: #{fine_tuning_forward.6} parent=46 // loop_footer
                  %s281 = sadd.s32 1, %s277
                $region60: #{fine_tuning_forward.6} parent=46 // loop_footer_branch
                  %276 = sbr.rel target = $region56
                $region61: #{fine_tuning_forward.6} parent=46 // loop_exit
                  _
              $region47: #{fine_tuning_forward.6} parent=31 // pred_fallthru
                _
            $region32: #{fine_tuning_forward.6} parent=27 // pred_fallthru
              _
            // Predicated region
            $region33: #{fine_tuning_forward.6} parent=27 // pred_check
              _
            $region34: #{fine_tuning_forward.6} parent=27 // pred_check_branch
              %189 = sbr.rel (0) target = $region36
            $region35: #{fine_tuning_forward.6} parent=27 // pred_region
              %s191 = ssub.s32 16, 1
              loop: start=0, step=1, limit=1
              $region37: #{fine_tuning_forward.6} parent=35 // loop_pre_header
                _
              $region38: #{fine_tuning_forward.6} parent=35 // loop_header
                %s193 = sphi 0, %s197
                %p194 = scmp.ge.s32.totalorder %s193, 1
                %s198 = sphi %s183, %s183
                %s199 = sphi %s178, %s178
              $region39: #{fine_tuning_forward.6} parent=35 // loop_header_branch
                %196 = sbr.rel (%p194) target = $region43
              $region40: #{fine_tuning_forward.6} parent=35 // loop_body
                %v200 = vld [vmem:[%s198] sm:%s191]
                %201 = vst [vmem:[%s199] sm:%s191] %v200
                %v202 = vld [vmem:[%s198 + $0x14] sm:%s191]
                %203 = vst [vmem:[%s199 + $0x4] sm:%s191] %v202
                %v204 = vld [vmem:[%s198 + $0x28] sm:%s191]
                %205 = vst [vmem:[%s199 + $0x8] sm:%s191] %v204
                %v206 = vld [vmem:[%s198 + $0x3c] sm:%s191]
                %207 = vst [vmem:[%s199 + $0xc] sm:%s191] %v206
                %v208 = vld [vmem:[%s198 + $0x50] sm:%s191]
                %209 = vst [vmem:[%s199 + $0x10] sm:%s191] %v208
                %v210 = vld [vmem:[%s198 + $0x64] sm:%s191]
                %211 = vst [vmem:[%s199 + $0x14] sm:%s191] %v210
                %v212 = vld [vmem:[%s198 + $0x78] sm:%s191]
                %213 = vst [vmem:[%s199 + $0x18] sm:%s191] %v212
                %v214 = vld [vmem:[%s198 + $0x8c] sm:%s191]
                %215 = vst [vmem:[%s199 + $0x1c] sm:%s191] %v214
                %v216 = vld [vmem:[%s198 + $0xa0] sm:%s191]
                %217 = vst [vmem:[%s199 + $0x20] sm:%s191] %v216
                %v218 = vld [vmem:[%s198 + $0xb4] sm:%s191]
                %219 = vst [vmem:[%s199 + $0x24] sm:%s191] %v218
                %v220 = vld [vmem:[%s198 + $0xc8] sm:%s191]
                %221 = vst [vmem:[%s199 + $0x28] sm:%s191] %v220
                %v222 = vld [vmem:[%s198 + $0xdc] sm:%s191]
                %223 = vst [vmem:[%s199 + $0x2c] sm:%s191] %v222
                %v224 = vld [vmem:[%s198 + $0xf0] sm:%s191]
                %225 = vst [vmem:[%s199 + $0x30] sm:%s191] %v224
                %v226 = vld [vmem:[%s198 + $0x104] sm:%s191]
                %227 = vst [vmem:[%s199 + $0x34] sm:%s191] %v226
                %v228 = vld [vmem:[%s198 + $0x118] sm:%s191]
                %229 = vst [vmem:[%s199 + $0x38] sm:%s191] %v228
                %v230 = vld [vmem:[%s198 + $0x12c] sm:%s191]
                %231 = vst [vmem:[%s199 + $0x3c] sm:%s191] %v230
                %v232 = vld [vmem:[%s198 + $0x140] sm:%s191]
                %233 = vst [vmem:[%s199 + $0x40] sm:%s191] %v232
                %v234 = vld [vmem:[%s198 + $0x154] sm:%s191]
                %235 = vst [vmem:[%s199 + $0x44] sm:%s191] %v234
                %v236 = vld [vmem:[%s198 + $0x168] sm:%s191]
                %237 = vst [vmem:[%s199 + $0x48] sm:%s191] %v236
                %v238 = vld [vmem:[%s198 + $0x17c] sm:%s191]
                %239 = vst [vmem:[%s199 + $0x4c] sm:%s191] %v238
                %v240 = vld [vmem:[%s198 + $0x190] sm:%s191]
                %241 = vst [vmem:[%s199 + $0x50] sm:%s191] %v240
                %v242 = vld [vmem:[%s198 + $0x1a4] sm:%s191]
                %243 = vst [vmem:[%s199 + $0x54] sm:%s191] %v242
                %v244 = vld [vmem:[%s198 + $0x1b8] sm:%s191]
                %245 = vst [vmem:[%s199 + $0x58] sm:%s191] %v244
                %v246 = vld [vmem:[%s198 + $0x1cc] sm:%s191]
                %247 = vst [vmem:[%s199 + $0x5c] sm:%s191] %v246
                %v248 = vld [vmem:[%s198 + $0x1e0] sm:%s191]
                %249 = vst [vmem:[%s199 + $0x60] sm:%s191] %v248
                %v250 = vld [vmem:[%s198 + $0x1f4] sm:%s191]
                %251 = vst [vmem:[%s199 + $0x64] sm:%s191] %v250
                %v252 = vld [vmem:[%s198 + $0x208] sm:%s191]
                %253 = vst [vmem:[%s199 + $0x68] sm:%s191] %v252
                %v254 = vld [vmem:[%s198 + $0x21c] sm:%s191]
                %255 = vst [vmem:[%s199 + $0x6c] sm:%s191] %v254
                %v256 = vld [vmem:[%s198 + $0x230] sm:%s191]
                %257 = vst [vmem:[%s199 + $0x70] sm:%s191] %v256
                %v258 = vld [vmem:[%s198 + $0x244] sm:%s191]
                %259 = vst [vmem:[%s199 + $0x74] sm:%s191] %v258
                %v260 = vld [vmem:[%s198 + $0x258] sm:%s191]
                %261 = vst [vmem:[%s199 + $0x78] sm:%s191] %v260
                %v262 = vld [vmem:[%s198 + $0x26c] sm:%s191]
                %263 = vst [vmem:[%s199 + $0x7c] sm:%s191] %v262
              $region41: #{fine_tuning_forward.6} parent=35 // loop_footer
                %s197 = sadd.s32 1, %s193
              $region42: #{fine_tuning_forward.6} parent=35 // loop_footer_branch
                %192 = sbr.rel target = $region38
              $region43: #{fine_tuning_forward.6} parent=35 // loop_exit
                _
            $region36: #{fine_tuning_forward.6} parent=27 // pred_fallthru
              _
          $region28: #{fine_tuning_forward.6} parent=23 // pred_fallthru
            _
          %348 = vnop
        $region24: #{fine_tuning_forward.6} parent=19 // pred_fallthru
          _
        // Predicated region
        $region62: #{fine_tuning_forward.6} parent=19 // pred_check
          %p349 = pneg %p104
        $region63: #{fine_tuning_forward.6} parent=19 // pred_check_branch
          %351 = sbr.rel (%p349) target = $region65
        $region64: #{fine_tuning_forward.6} parent=19 // pred_region
          %p352 = scmp.lt.s32.totalorder %s17, 4
          %s353 = scalar_select %p352, %s17, 4
          %s354 = scalar_lea.vmem %s2, %s353
        $region65: #{fine_tuning_forward.6} parent=19 // pred_fallthru
          _
      $region20: #{fine_tuning_forward.6} parent=5 // pred_fallthru
        _
      %p355 = scmp.le.s32.totalorder 1, %s9
      %p356 = scmp.lt.s32.totalorder %s9, 6
      %p357 = pnand %p355, %p356
      %p358 = pneg %p357
      // Predicated region
      $region66: #{fine_tuning_forward.6} parent=5 // pred_check
        _
      $region67: #{fine_tuning_forward.6} parent=5 // pred_check_branch
        %360 = sbr.rel (%p357) target = $region69
      $region68: #{fine_tuning_forward.6} parent=5 // pred_region
        %s361 = ssub.s32 %s9, 1
        %s362 = sand.u32 %s71, 1
        %s363 = sand.u32 %s71, 1
        %s364 = smul.addr %s363, 128
        %s365 = scalar_lea.vmem [#allocation3], %s364
        // Predicated region
        $region70: #{fine_tuning_forward.6} parent=68 // pred_check
          %p366 = pneg %p84
        $region71: #{fine_tuning_forward.6} parent=68 // pred_check_branch
          %368 = sbr.rel (%p366) target = $region73
        $region72: #{fine_tuning_forward.6} parent=68 // pred_region
          _
        $region73: #{fine_tuning_forward.6} parent=68 // pred_fallthru
          _
        %s369 = smul.u32 8, %s19
        %s370 = smul.u32 2, %s21
        %p371 = scmp.lt.s32.totalorder %s369, 7
        %s372 = scalar_select %p371, %s369, 7
        %p373 = scmp.lt.s32.totalorder %s370, 1
        %s374 = scalar_select %p373, %s370, 1
        %s375 = smul.addr %s372, 2
        %s376 = sadd.s32 %s374, %s375
        %s377 = smul.addr %s376, 4
        %s378 = scalar_lea.vmem %s0, %s377
        %p379 = pneg %p56
        %p380 = pneg %p53
        %s381 = sand.u32 %s71, 1
        %s382 = sand.u32 %s71, 1
        %s383 = smul.addr %s382, 128
        %s384 = scalar_lea.vmem [#allocation3], %s383
        %p385 = pneg %p84
        %p386 = pneg %p81
        %p387 = scmp.lt.s32.totalorder %s20, 4
        %s388 = scalar_select %p387, %s20, 4
        %s389 = scalar_lea.vmem %s2, %s388
        %p390 = pneg %p110
        %p391 = pneg %p107
        %p392 = pneg %p138
        %p393 = pneg %p135
        %s394 = sand.u32 %s125, 1
        %s395 = sand.u32 %s125, 1
        %s396 = smul.addr %s395, 64
        %s397 = scalar_lea.vmem [#allocation4], %s396
        %s398 = smul.u32 8, %s19
        %s399 = smul.u32 2, %s21
        %p400 = scmp.lt.s32.totalorder %s398, 7
        %s401 = scalar_select %p400, %s398, 7
        %p402 = scmp.lt.s32.totalorder %s399, 1
        %s403 = scalar_select %p402, %s399, 1
        %s404 = smul.addr %s401, 2
        %s405 = sadd.s32 %s403, %s404
        %s406 = smul.addr %s405, 4
        %s407 = scalar_lea.vmem %s0, %s406
        %s408 = smul.u32 8, %s19
        %s409 = smul.u32 2, %s21
        %s410 = smul.u32 32, %s21
        %p411 = scmp.lt.s32.totalorder %s20, 4
        %s412 = scalar_select %p411, %s20, 4
        %s413 = scalar_lea.vmem %s2, %s412
        %s414 = smul.u32 8, %s19
        %p415 = scmp.eq.s32.totalorder %s21, 0
        // Predicated region
        $region74: #{fine_tuning_forward.6} parent=68 // pred_check
          %p416 = pneg %p415
        $region75: #{fine_tuning_forward.6} parent=68 // pred_check_branch
          %418 = sbr.rel (%p416) target = $region77
        $region76: #{fine_tuning_forward.6} parent=68 // pred_region
          %419 = vst [vmem:[#allocation2] sm:$0xff] 0.0
          %420 = vst [vmem:[#allocation2 + $0x8] sm:$0xff] 0.0
          %421 = vst [vmem:[#allocation2 + $0x10] sm:$0xff] 0.0
          %422 = vst [vmem:[#allocation2 + $0x18] sm:$0xff] 0.0
          %423 = vst [vmem:[#allocation2 + $0x20] sm:$0xff] 0.0
          %424 = vst [vmem:[#allocation2 + $0x28] sm:$0xff] 0.0
          %425 = vst [vmem:[#allocation2 + $0x30] sm:$0xff] 0.0
          %426 = vst [vmem:[#allocation2 + $0x38] sm:$0xff] 0.0
        $region77: #{fine_tuning_forward.6} parent=68 // pred_fallthru
          _
        %v427 = vld [vmem:[#allocation2] sm:$0xff]
        %v428 = vld [vmem:[#allocation2 + $0x8] sm:$0xff]
        %v429 = vld [vmem:[#allocation2 + $0x10] sm:$0xff]
        %v430 = vld [vmem:[#allocation2 + $0x18] sm:$0xff]
        %v431 = vld [vmem:[#allocation2 + $0x20] sm:$0xff]
        %v432 = vld [vmem:[#allocation2 + $0x28] sm:$0xff]
        %v433 = vld [vmem:[#allocation2 + $0x30] sm:$0xff]
        %v434 = vld [vmem:[#allocation2 + $0x38] sm:$0xff]
        %v435 = vld [vmem:[%s407] sm:$0xff]
        %v436 = vld [vmem:[%s407 + $0x8] sm:$0xff]
        %v437 = vld [vmem:[%s407 + $0x10] sm:$0xff]
        %v438 = vld [vmem:[%s407 + $0x18] sm:$0xff]
        %v439 = vld [vmem:[%s407 + $0x20] sm:$0xff]
        %v440 = vld [vmem:[%s407 + $0x28] sm:$0xff]
        %v441 = vld [vmem:[%s407 + $0x30] sm:$0xff]
        %v442 = vld [vmem:[%s407 + $0x38] sm:$0xff]
        %v443 = vld [vmem:[%s365] sm:$0xf]
        %v444 = vld [vmem:[%s365 + $0x4] sm:$0xf]
        %v445 = vld [vmem:[%s365 + $0x8] sm:$0xf]
        %v446 = vld [vmem:[%s365 + $0xc] sm:$0xf]
        %v447 = vld [vmem:[%s365 + $0x10] sm:$0xf]
        %v448 = vld [vmem:[%s365 + $0x14] sm:$0xf]
        %v449 = vld [vmem:[%s365 + $0x18] sm:$0xf]
        %v450 = vld [vmem:[%s365 + $0x1c] sm:$0xf]
        %v451 = vld [vmem:[%s365 + $0x20] sm:$0xf]
        %v452 = vld [vmem:[%s365 + $0x24] sm:$0xf]
        %v453 = vld [vmem:[%s365 + $0x28] sm:$0xf]
        %v454 = vld [vmem:[%s365 + $0x2c] sm:$0xf]
        %v455 = vld [vmem:[%s365 + $0x30] sm:$0xf]
        %v456 = vld [vmem:[%s365 + $0x34] sm:$0xf]
        %v457 = vld [vmem:[%s365 + $0x38] sm:$0xf]
        %v458 = vld [vmem:[%s365 + $0x3c] sm:$0xf]
        %v459 = vld [vmem:[%s365 + $0x40] sm:$0xf]
        %v460 = vld [vmem:[%s365 + $0x44] sm:$0xf]
        %v461 = vld [vmem:[%s365 + $0x48] sm:$0xf]
        %v462 = vld [vmem:[%s365 + $0x4c] sm:$0xf]
        %v463 = vld [vmem:[%s365 + $0x50] sm:$0xf]
        %v464 = vld [vmem:[%s365 + $0x54] sm:$0xf]
        %v465 = vld [vmem:[%s365 + $0x58] sm:$0xf]
        %v466 = vld [vmem:[%s365 + $0x5c] sm:$0xf]
        %v467 = vld [vmem:[%s365 + $0x60] sm:$0xf]
        %v468 = vld [vmem:[%s365 + $0x64] sm:$0xf]
        %v469 = vld [vmem:[%s365 + $0x68] sm:$0xf]
        %v470 = vld [vmem:[%s365 + $0x6c] sm:$0xf]
        %v471 = vld [vmem:[%s365 + $0x70] sm:$0xf]
        %v472 = vld [vmem:[%s365 + $0x74] sm:$0xf]
        %v473 = vld [vmem:[%s365 + $0x78] sm:$0xf]
        %v474 = vld [vmem:[%s365 + $0x7c] sm:$0xf]
        %v483 = vunpack.c.l.b16 %v435
        %v484 = vunpack.c.h.b16 %v435
        %v485 = vunpack.c.l.b16 %v436
        %v486 = vunpack.c.h.b16 %v436
        %v487 = vunpack.c.l.b16 %v437
        %v488 = vunpack.c.h.b16 %v437
        %v489 = vunpack.c.l.b16 %v438
        %v490 = vunpack.c.h.b16 %v438
        %v491 = vunpack.c.l.b16 %v439
        %v492 = vunpack.c.h.b16 %v439
        %v493 = vunpack.c.l.b16 %v440
        %v494 = vunpack.c.h.b16 %v440
        %v495 = vunpack.c.l.b16 %v441
        %v496 = vunpack.c.h.b16 %v441
        %v497 = vunpack.c.l.b16 %v442
        %v498 = vunpack.c.h.b16 %v442
        %v499 = vpack.c.b16 %v485, %v483
        %v500 = vpack.c.b16 %v486, %v484
        %v501 = vpack.c.b16 %v489, %v487
        %v502 = vpack.c.b16 %v490, %v488
        %v503 = vpack.c.b16 %v493, %v491
        %v504 = vpack.c.b16 %v494, %v492
        %v505 = vpack.c.b16 %v497, %v495
        %v506 = vpack.c.b16 %v498, %v496
        %v547 = vunpack.c.l.b16 %v443
        %v548 = vunpack.c.l.b16 %v444
        %v549 = vunpack.c.l.b16 %v445
        %v550 = vunpack.c.l.b16 %v446
        %v551 = vunpack.c.l.b16 %v447
        %v552 = vunpack.c.l.b16 %v448
        %v553 = vunpack.c.l.b16 %v449
        %v554 = vunpack.c.l.b16 %v450
        %v555 = vunpack.c.l.b16 %v451
        %v556 = vunpack.c.l.b16 %v452
        %v557 = vunpack.c.l.b16 %v453
        %v558 = vunpack.c.l.b16 %v454
        %v559 = vunpack.c.l.b16 %v455
        %v560 = vunpack.c.l.b16 %v456
        %v561 = vunpack.c.l.b16 %v457
        %v562 = vunpack.c.l.b16 %v458
        %v563 = vunpack.c.l.b16 %v459
        %v564 = vunpack.c.l.b16 %v460
        %v565 = vunpack.c.l.b16 %v461
        %v566 = vunpack.c.l.b16 %v462
        %v567 = vunpack.c.l.b16 %v463
        %v568 = vunpack.c.l.b16 %v464
        %v569 = vunpack.c.l.b16 %v465
        %v570 = vunpack.c.l.b16 %v466
        %v571 = vunpack.c.l.b16 %v467
        %v572 = vunpack.c.l.b16 %v468
        %v573 = vunpack.c.l.b16 %v469
        %v574 = vunpack.c.l.b16 %v470
        %v575 = vunpack.c.l.b16 %v471
        %v576 = vunpack.c.l.b16 %v472
        %v577 = vunpack.c.l.b16 %v473
        %v578 = vunpack.c.l.b16 %v474
        %v579 = vpack.c.b16 %v548, %v547
        %v580 = vpack.c.b16 %v550, %v549
        %v581 = vpack.c.b16 %v552, %v551
        %v582 = vpack.c.b16 %v554, %v553
        %v583 = vpack.c.b16 %v556, %v555
        %v584 = vpack.c.b16 %v558, %v557
        %v585 = vpack.c.b16 %v560, %v559
        %v586 = vpack.c.b16 %v562, %v561
        %v587 = vpack.c.b16 %v564, %v563
        %v588 = vpack.c.b16 %v566, %v565
        %v589 = vpack.c.b16 %v568, %v567
        %v590 = vpack.c.b16 %v570, %v569
        %v591 = vpack.c.b16 %v572, %v571
        %v592 = vpack.c.b16 %v574, %v573
        %v593 = vpack.c.b16 %v576, %v575
        %v594 = vpack.c.b16 %v578, %v577
        %611 = vmatpush.bf16.msra.mxu0 %v586
        %612 = vmatpush.bf16.msra.mxu0 %v585
        %613 = vmatpush.bf16.msra.mxu0 %v584
        %614 = vmatpush.bf16.msra.mxu0 %v583
        %615 = vmatpush.bf16.msra.mxu0 %v582
        %616 = vmatpush.bf16.msra.mxu0 %v581
        %617 = vmatpush.bf16.msra.mxu0 %v580
        %618 = vmatpush.bf16.msra.mxu0 %v579
        %619 = vmatmul.bf16.gmra.mxu0 %v499
        %v620 = vpop.f32.mrf.mxu0
        %v621 = vadd.f32 0.0, %v620
        %v622 = vpop.f32.mrf.mxu0
        %v623 = vadd.f32 0.0, %v622
        %624 = vmatmul.bf16.gmra.mxu0 %v501
        %v625 = vpop.f32.mrf.mxu0
        %v626 = vadd.f32 0.0, %v625
        %v627 = vpop.f32.mrf.mxu0
        %v628 = vadd.f32 0.0, %v627
        %629 = vmatmul.bf16.gmra.mxu0 %v503
        %v630 = vpop.f32.mrf.mxu0
        %v631 = vadd.f32 0.0, %v630
        %v632 = vpop.f32.mrf.mxu0
        %v633 = vadd.f32 0.0, %v632
        %634 = vmatmul.bf16.gmra.mxu0 %v505
        %v635 = vpop.f32.mrf.mxu0
        %v636 = vadd.f32 0.0, %v635
        %v637 = vpop.f32.mrf.mxu0
        %v638 = vadd.f32 0.0, %v637
        %639 = vdwg.mxu0
        %640 = vmatpush.bf16.msra.mxu0 %v594
        %641 = vmatpush.bf16.msra.mxu0 %v593
        %642 = vmatpush.bf16.msra.mxu0 %v592
        %643 = vmatpush.bf16.msra.mxu0 %v591
        %644 = vmatpush.bf16.msra.mxu0 %v590
        %645 = vmatpush.bf16.msra.mxu0 %v589
        %646 = vmatpush.bf16.msra.mxu0 %v588
        %647 = vmatpush.bf16.msra.mxu0 %v587
        %648 = vmatmul.bf16.gmra.mxu0 %v500
        %v649 = vpop.f32.mrf.mxu0
        %v650 = vadd.f32 %v621, %v649
        %v651 = vpop.f32.mrf.mxu0
        %v652 = vadd.f32 %v623, %v651
        %653 = vmatmul.bf16.gmra.mxu0 %v502
        %v654 = vpop.f32.mrf.mxu0
        %v655 = vadd.f32 %v626, %v654
        %v656 = vpop.f32.mrf.mxu0
        %v657 = vadd.f32 %v628, %v656
        %658 = vmatmul.bf16.gmra.mxu0 %v504
        %v659 = vpop.f32.mrf.mxu0
        %v660 = vadd.f32 %v631, %v659
        %v661 = vpop.f32.mrf.mxu0
        %v662 = vadd.f32 %v633, %v661
        %663 = vmatmul.bf16.gmra.mxu0 %v506
        %v664 = vpop.f32.mrf.mxu0
        %v665 = vadd.f32 %v636, %v664
        %v666 = vpop.f32.mrf.mxu0
        %v667 = vadd.f32 %v638, %v666
        %668 = vdwg.mxu0
        %v669 = vadd.f32 %v427, %v650
        %v670 = vadd.f32 %v428, %v652
        %v671 = vadd.f32 %v429, %v655
        %v672 = vadd.f32 %v430, %v657
        %v673 = vadd.f32 %v431, %v660
        %v674 = vadd.f32 %v432, %v662
        %v675 = vadd.f32 %v433, %v665
        %v676 = vadd.f32 %v434, %v667
        %677 = vst [vmem:[#allocation2] sm:$0xff] %v669
        %678 = vst [vmem:[#allocation2 + $0x8] sm:$0xff] %v670
        %679 = vst [vmem:[#allocation2 + $0x10] sm:$0xff] %v671
        %680 = vst [vmem:[#allocation2 + $0x18] sm:$0xff] %v672
        %681 = vst [vmem:[#allocation2 + $0x20] sm:$0xff] %v673
        %682 = vst [vmem:[#allocation2 + $0x28] sm:$0xff] %v674
        %683 = vst [vmem:[#allocation2 + $0x30] sm:$0xff] %v675
        %684 = vst [vmem:[#allocation2 + $0x38] sm:$0xff] %v676
        // Predicated region
        $region78: #{fine_tuning_forward.6} parent=68 // pred_check
          %p685 = pneg %p415
        $region79: #{fine_tuning_forward.6} parent=68 // pred_check_branch
          %687 = sbr.rel (%p685) target = $region81
        $region80: #{fine_tuning_forward.6} parent=68 // pred_region
          %v688 = vld [vmem:[#allocation2] sm:$0xff]
          %v689 = vld [vmem:[#allocation2 + $0x8] sm:$0xff]
          %v690 = vld [vmem:[#allocation2 + $0x10] sm:$0xff]
          %v691 = vld [vmem:[#allocation2 + $0x18] sm:$0xff]
          %v692 = vld [vmem:[#allocation2 + $0x20] sm:$0xff]
          %v693 = vld [vmem:[#allocation2 + $0x28] sm:$0xff]
          %v694 = vld [vmem:[#allocation2 + $0x30] sm:$0xff]
          %v695 = vld [vmem:[#allocation2 + $0x38] sm:$0xff]
          %v696 = vld [vmem:[%s413] sm:$0x1]
          %v698 = vperm.slane %v696, 0
          %v700 = vadd.f32 %v688, %v698
          %v701 = vadd.f32 %v689, %v698
          %v702 = vadd.f32 %v690, %v698
          %v703 = vadd.f32 %v691, %v698
          %v704 = vadd.f32 %v692, %v698
          %v705 = vadd.f32 %v693, %v698
          %v706 = vadd.f32 %v694, %v698
          %v707 = vadd.f32 %v695, %v698
          %708 = vst [vmem:[%s397] sm:$0xff] %v700
          %709 = vst [vmem:[%s397 + $0x8] sm:$0xff] %v701
          %710 = vst [vmem:[%s397 + $0x10] sm:$0xff] %v702
          %711 = vst [vmem:[%s397 + $0x18] sm:$0xff] %v703
          %712 = vst [vmem:[%s397 + $0x20] sm:$0xff] %v704
          %713 = vst [vmem:[%s397 + $0x28] sm:$0xff] %v705
          %714 = vst [vmem:[%s397 + $0x30] sm:$0xff] %v706
          %715 = vst [vmem:[%s397 + $0x38] sm:$0xff] %v707
        $region81: #{fine_tuning_forward.6} parent=68 // pred_fallthru
          _
        %s716 = sand.u32 %s125, 1
        %s717 = sand.u32 %s125, 1
        %s718 = smul.addr %s717, 64
        %s719 = scalar_lea.vmem [#allocation4], %s718
        // Predicated region
        $region82: #{fine_tuning_forward.6} parent=68 // pred_check
          %p720 = pneg %p135
        $region83: #{fine_tuning_forward.6} parent=68 // pred_check_branch
          %722 = sbr.rel (%p720) target = $region85
        $region84: #{fine_tuning_forward.6} parent=68 // pred_region
          %s723 = smul.u32 8, %s19
          %s724 = smul.addr %s723, 5
          %s725 = sadd.s32 %s20, %s724
          %s726 = smul.addr %s725, 8
          %s727 = scalar_lea.vmem %s3, %s726
          // Predicated region
          $region86: #{fine_tuning_forward.6} parent=84 // pred_check
            _
          $region87: #{fine_tuning_forward.6} parent=84 // pred_check_branch
            %729 = sbr.rel (0) target = $region89
          $region88: #{fine_tuning_forward.6} parent=84 // pred_region
            // Predicated region
            $region90: #{fine_tuning_forward.6} parent=88 // pred_check
              _
            $region91: #{fine_tuning_forward.6} parent=88 // pred_check_branch
              %731 = sbr.rel (0) target = $region93
            $region92: #{fine_tuning_forward.6} parent=88 // pred_region
              // Predicated region
              $region105: #{fine_tuning_forward.6} parent=92 // pred_check
                _
              $region106: #{fine_tuning_forward.6} parent=92 // pred_check_branch
                %761 = sbr.rel (0) target = $region108
              $region107: #{fine_tuning_forward.6} parent=92 // pred_region
                loop: start=0, step=1, limit=1
                $region109: #{fine_tuning_forward.6} parent=107 // loop_pre_header
                  _
                $region110: #{fine_tuning_forward.6} parent=107 // loop_header
                  %s763 = sphi 0, %s767
                  %p764 = scmp.ge.s32.totalorder %s763, 1
                  %s768 = sphi %s719, %s719
                  %s769 = sphi %s727, %s727
                $region111: #{fine_tuning_forward.6} parent=107 // loop_header_branch
                  %766 = sbr.rel (%p764) target = $region115
                $region112: #{fine_tuning_forward.6} parent=107 // loop_body
                  %v770 = vld [vmem:[%s768] sm:$0xff]
                  %771 = vst [vmem:[%s769] sm:$0xff] %v770
                  %v772 = vld [vmem:[%s768 + $0x8] sm:$0xff]
                  %773 = vst [vmem:[%s769 + $0x28] sm:$0xff] %v772
                  %v774 = vld [vmem:[%s768 + $0x10] sm:$0xff]
                  %775 = vst [vmem:[%s769 + $0x50] sm:$0xff] %v774
                  %v776 = vld [vmem:[%s768 + $0x18] sm:$0xff]
                  %777 = vst [vmem:[%s769 + $0x78] sm:$0xff] %v776
                  %v778 = vld [vmem:[%s768 + $0x20] sm:$0xff]
                  %779 = vst [vmem:[%s769 + $0xa0] sm:$0xff] %v778
                  %v780 = vld [vmem:[%s768 + $0x28] sm:$0xff]
                  %781 = vst [vmem:[%s769 + $0xc8] sm:$0xff] %v780
                  %v782 = vld [vmem:[%s768 + $0x30] sm:$0xff]
                  %783 = vst [vmem:[%s769 + $0xf0] sm:$0xff] %v782
                  %v784 = vld [vmem:[%s768 + $0x38] sm:$0xff]
                  %785 = vst [vmem:[%s769 + $0x118] sm:$0xff] %v784
                $region113: #{fine_tuning_forward.6} parent=107 // loop_footer
                  %s767 = sadd.s32 1, %s763
                $region114: #{fine_tuning_forward.6} parent=107 // loop_footer_branch
                  %762 = sbr.rel target = $region110
                $region115: #{fine_tuning_forward.6} parent=107 // loop_exit
                  _
              $region108: #{fine_tuning_forward.6} parent=92 // pred_fallthru
                _
              // Predicated region
              $region116: #{fine_tuning_forward.6} parent=92 // pred_check
                _
              $region117: #{fine_tuning_forward.6} parent=92 // pred_check_branch
                %787 = sbr.rel target = $region119
              $region118: #{fine_tuning_forward.6} parent=92 // pred_region
                _
              $region119: #{fine_tuning_forward.6} parent=92 // pred_fallthru
                _
            $region93: #{fine_tuning_forward.6} parent=88 // pred_fallthru
              _
            // Predicated region
            $region94: #{fine_tuning_forward.6} parent=88 // pred_check
              _
            $region95: #{fine_tuning_forward.6} parent=88 // pred_check_branch
              %733 = sbr.rel target = $region97
            $region96: #{fine_tuning_forward.6} parent=88 // pred_region
              %s735 = ssub.s32 256, 1
              loop: start=0, step=1, limit=1
              $region98: #{fine_tuning_forward.6} parent=96 // loop_pre_header
                _
              $region99: #{fine_tuning_forward.6} parent=96 // loop_header
                %s737 = sphi 0, %s741
                %p738 = scmp.ge.s32.totalorder %s737, 1
                %s742 = sphi %s719, %s719
                %s743 = sphi %s727, %s727
              $region100: #{fine_tuning_forward.6} parent=96 // loop_header_branch
                %740 = sbr.rel (%p738) target = $region104
              $region101: #{fine_tuning_forward.6} parent=96 // loop_body
                %v744 = vld [vmem:[%s742] sm:%s735]
                %745 = vst [vmem:[%s743] sm:%s735] %v744
                %v746 = vld [vmem:[%s742 + $0x8] sm:%s735]
                %747 = vst [vmem:[%s743 + $0x28] sm:%s735] %v746
                %v748 = vld [vmem:[%s742 + $0x10] sm:%s735]
                %749 = vst [vmem:[%s743 + $0x50] sm:%s735] %v748
                %v750 = vld [vmem:[%s742 + $0x18] sm:%s735]
                %751 = vst [vmem:[%s743 + $0x78] sm:%s735] %v750
                %v752 = vld [vmem:[%s742 + $0x20] sm:%s735]
                %753 = vst [vmem:[%s743 + $0xa0] sm:%s735] %v752
                %v754 = vld [vmem:[%s742 + $0x28] sm:%s735]
                %755 = vst [vmem:[%s743 + $0xc8] sm:%s735] %v754
                %v756 = vld [vmem:[%s742 + $0x30] sm:%s735]
                %757 = vst [vmem:[%s743 + $0xf0] sm:%s735] %v756
                %v758 = vld [vmem:[%s742 + $0x38] sm:%s735]
                %759 = vst [vmem:[%s743 + $0x118] sm:%s735] %v758
              $region102: #{fine_tuning_forward.6} parent=96 // loop_footer
                %s741 = sadd.s32 1, %s737
              $region103: #{fine_tuning_forward.6} parent=96 // loop_footer_branch
                %736 = sbr.rel target = $region99
              $region104: #{fine_tuning_forward.6} parent=96 // loop_exit
                _
            $region97: #{fine_tuning_forward.6} parent=88 // pred_fallthru
              _
          $region89: #{fine_tuning_forward.6} parent=84 // pred_fallthru
            _
          %788 = vnop
        $region85: #{fine_tuning_forward.6} parent=68 // pred_fallthru
          _
      $region69: #{fine_tuning_forward.6} parent=5 // pred_fallthru
        _
      %p789 = scmp.le.s32.totalorder 2, %s9
      // Predicated region
      $region120: #{fine_tuning_forward.6} parent=5 // pred_check
        %p790 = pneg %p789
      $region121: #{fine_tuning_forward.6} parent=5 // pred_check_branch
        %792 = sbr.rel (%p790) target = $region123
      $region122: #{fine_tuning_forward.6} parent=5 // pred_region
        %s793 = ssub.s32 %s9, 2
        // Predicated region
        $region124: #{fine_tuning_forward.6} parent=122 // pred_check
          %p794 = pneg %p141
        $region125: #{fine_tuning_forward.6} parent=122 // pred_check_branch
          %796 = sbr.rel (%p794) target = $region127
        $region126: #{fine_tuning_forward.6} parent=122 // pred_region
          %s797 = sand.u32 %s126, 1
          %s798 = sand.u32 %s126, 1
          %s799 = smul.addr %s798, 64
          %s800 = scalar_lea.vmem [#allocation4], %s799
        $region127: #{fine_tuning_forward.6} parent=122 // pred_fallthru
          _
      $region123: #{fine_tuning_forward.6} parent=5 // pred_fallthru
        _
    $region6: #{fine_tuning_forward.6} parent=1 // loop_footer
      %s13 = sadd.s32 1, %s9
    $region7: #{fine_tuning_forward.6} parent=1 // loop_footer_branch
      %8 = sbr.rel target = $region3
    $region8: #{fine_tuning_forward.6} parent=1 // loop_exit
      _

// kernel: fine_tuning_forward.7
$region0: #{fine_tuning_forward.7}
  #allocation0 [shape = 'u32[]', space=smem, size = 0x4, offset = 0x4, fixed_abs, tag = 'smem constant byte address 0x4 - core index']
  #allocation1 [shape = 'u32[72,128]{1,0:T(1,128)}', space=vmem, size = 0x9000, scoped, tag = 'internal scratch']
  #allocation2 [shape = 'f32[64,128]{1,0:T(8,128)}', space=vmem, size = 0x8000, scoped, tag = 'scratch operand']
  %s0 = inlined_call_operand.vmem [shape: bf16[64,640], index: 0, kind: input, shape index: {}]
  %s1 = inlined_call_operand.vmem [shape: bf16[64,640], index: 1, kind: input, shape index: {}]
  %s2 = inlined_call_operand.vmem [shape: bf16[640,128], index: 2, kind: input, shape index: {}]
  %s3 = inlined_call_operand.vmem [shape: f32[1,128], index: 3, kind: input, shape index: {}]
  %s4 = inlined_call_operand.vmem [shape: bf16[128,128], index: 4, kind: input, shape index: {}]
  %s5 = inlined_call_operand.vmem [shape: f32[1,128], index: 5, kind: input, shape index: {}]
  %s6 = inlined_call_operand.hbm [shape: f32[64,128], index: 6, kind: output, shape index: {}]
  %s7 = sld [smem:[#allocation0]]
  $region42: #{fine_tuning_forward.7} parent=0
    _
  %s9 = ssub.s32 1, %s7
  %s10 = scalar_select 0, %s9, %s7
  $region1: #{fine_tuning_forward.7} parent=0
    #allocation3 [shape = 'u8[32768]{0}', space=vmem, size = 0x8000, scoped, tag = 'output window, operand 0, single buffered']
    #allocation4 [shape = 's32[1]{0}', space=sflag, size = 0x4, scoped, tag = 'scoped memory for fine_tuning_forward.7']
    %11 = vsyncpa [#allocation4], 0
    // Predicated region
    $region2: #{fine_tuning_forward.7} parent=1 // pred_check
      _
    $region3: #{fine_tuning_forward.7} parent=1 // pred_check_branch
      %13 = sbr.rel (0) target = $region5
    $region4: #{fine_tuning_forward.7} parent=1 // pred_region
      _
    $region5: #{fine_tuning_forward.7} parent=1 // pred_fallthru
      _
    // Predicated region
    $region6: #{fine_tuning_forward.7} parent=1 // pred_check
      _
    $region7: #{fine_tuning_forward.7} parent=1 // pred_check_branch
      %15 = sbr.rel (0) target = $region9
    $region8: #{fine_tuning_forward.7} parent=1 // pred_region
      _
    $region9: #{fine_tuning_forward.7} parent=1 // pred_fallthru
      _
    // Predicated region
    $region10: #{fine_tuning_forward.7} parent=1 // pred_check
      _
    $region11: #{fine_tuning_forward.7} parent=1 // pred_check_branch
      %17 = sbr.rel (0) target = $region13
    $region12: #{fine_tuning_forward.7} parent=1 // pred_region
      _
    $region13: #{fine_tuning_forward.7} parent=1 // pred_fallthru
      _
    // Predicated region
    $region14: #{fine_tuning_forward.7} parent=1 // pred_check
      _
    $region15: #{fine_tuning_forward.7} parent=1 // pred_check_branch
      %19 = sbr.rel (0) target = $region17
    $region16: #{fine_tuning_forward.7} parent=1 // pred_region
      _
    $region17: #{fine_tuning_forward.7} parent=1 // pred_fallthru
      _
    // Predicated region
    $region18: #{fine_tuning_forward.7} parent=1 // pred_check
      _
    $region19: #{fine_tuning_forward.7} parent=1 // pred_check_branch
      %21 = sbr.rel (0) target = $region21
    $region20: #{fine_tuning_forward.7} parent=1 // pred_region
      _
    $region21: #{fine_tuning_forward.7} parent=1 // pred_fallthru
      _
    // Predicated region
    $region22: #{fine_tuning_forward.7} parent=1 // pred_check
      _
    $region23: #{fine_tuning_forward.7} parent=1 // pred_check_branch
      %23 = sbr.rel (0) target = $region25
    $region24: #{fine_tuning_forward.7} parent=1 // pred_region
      _
    $region25: #{fine_tuning_forward.7} parent=1 // pred_fallthru
      _
    %p24 = scmp.eq.s32.totalorder 0, 0
    // Predicated region
    $region26: #{fine_tuning_forward.7} parent=1 // pred_check
      %p25 = pneg %p24
    $region27: #{fine_tuning_forward.7} parent=1 // pred_check_branch
      %27 = sbr.rel (%p25) target = $region29
    $region28: #{fine_tuning_forward.7} parent=1 // pred_region
      %28 = vst [vmem:[#allocation2] sm:$0xff] 0.0
      %29 = vst [vmem:[#allocation2 + $0x8] sm:$0xff] 0.0
      %30 = vst [vmem:[#allocation2 + $0x10] sm:$0xff] 0.0
      %31 = vst [vmem:[#allocation2 + $0x18] sm:$0xff] 0.0
      %32 = vst [vmem:[#allocation2 + $0x20] sm:$0xff] 0.0
      %33 = vst [vmem:[#allocation2 + $0x28] sm:$0xff] 0.0
      %34 = vst [vmem:[#allocation2 + $0x30] sm:$0xff] 0.0
      %35 = vst [vmem:[#allocation2 + $0x38] sm:$0xff] 0.0
    $region29: #{fine_tuning_forward.7} parent=1 // pred_fallthru
      _
    %v36 = vld [vmem:[%s0] sm:$0xff]
    %v37 = vld [vmem:[%s0 + $0x8] sm:$0xff]
    %v38 = vld [vmem:[%s0 + $0x10] sm:$0xf]
    %v39 = vld [vmem:[%s0 + $0x14] sm:$0xff]
    %v40 = vld [vmem:[%s0 + $0x1c] sm:$0xff]
    %v41 = vld [vmem:[%s0 + $0x24] sm:$0xf]
    %v42 = vld [vmem:[%s0 + $0x28] sm:$0xff]
    %v43 = vld [vmem:[%s0 + $0x30] sm:$0xff]
    %v44 = vld [vmem:[%s0 + $0x38] sm:$0xf]
    %v45 = vld [vmem:[%s0 + $0x3c] sm:$0xff]
    %v46 = vld [vmem:[%s0 + $0x44] sm:$0xff]
    %v47 = vld [vmem:[%s0 + $0x4c] sm:$0xf]
    %v48 = vld [vmem:[%s0 + $0x50] sm:$0xff]
    %v49 = vld [vmem:[%s0 + $0x58] sm:$0xff]
    %v50 = vld [vmem:[%s0 + $0x60] sm:$0xf]
    %v51 = vld [vmem:[%s0 + $0x64] sm:$0xff]
    %v52 = vld [vmem:[%s0 + $0x6c] sm:$0xff]
    %v53 = vld [vmem:[%s0 + $0x74] sm:$0xf]
    %v54 = vld [vmem:[%s0 + $0x78] sm:$0xff]
    %v55 = vld [vmem:[%s0 + $0x80] sm:$0xff]
    %v56 = vld [vmem:[%s0 + $0x88] sm:$0xf]
    %v57 = vld [vmem:[%s0 + $0x8c] sm:$0xff]
    %v58 = vld [vmem:[%s0 + $0x94] sm:$0xff]
    %v59 = vld [vmem:[%s0 + $0x9c] sm:$0xf]
    %v60 = vld [vmem:[%s1] sm:$0xff]
    %v61 = vld [vmem:[%s1 + $0x8] sm:$0xff]
    %v62 = vld [vmem:[%s1 + $0x10] sm:$0xf]
    %v63 = vld [vmem:[%s1 + $0x14] sm:$0xff]
    %v64 = vld [vmem:[%s1 + $0x1c] sm:$0xff]
    %v65 = vld [vmem:[%s1 + $0x24] sm:$0xf]
    %v66 = vld [vmem:[%s1 + $0x28] sm:$0xff]
    %v67 = vld [vmem:[%s1 + $0x30] sm:$0xff]
    %v68 = vld [vmem:[%s1 + $0x38] sm:$0xf]
    %v69 = vld [vmem:[%s1 + $0x3c] sm:$0xff]
    %v70 = vld [vmem:[%s1 + $0x44] sm:$0xff]
    %v71 = vld [vmem:[%s1 + $0x4c] sm:$0xf]
    %v72 = vld [vmem:[%s1 + $0x50] sm:$0xff]
    %v73 = vld [vmem:[%s1 + $0x58] sm:$0xff]
    %v74 = vld [vmem:[%s1 + $0x60] sm:$0xf]
    %v75 = vld [vmem:[%s1 + $0x64] sm:$0xff]
    %v76 = vld [vmem:[%s1 + $0x6c] sm:$0xff]
    %v77 = vld [vmem:[%s1 + $0x74] sm:$0xf]
    %v78 = vld [vmem:[%s1 + $0x78] sm:$0xff]
    %v79 = vld [vmem:[%s1 + $0x80] sm:$0xff]
    %v80 = vld [vmem:[%s1 + $0x88] sm:$0xf]
    %v81 = vld [vmem:[%s1 + $0x8c] sm:$0xff]
    %v82 = vld [vmem:[%s1 + $0x94] sm:$0xff]
    %v83 = vld [vmem:[%s1 + $0x9c] sm:$0xf]
    %v84 = vunpack.c.l.bf16 %v36
    %v85 = vunpack.c.h.bf16 %v36
    %v86 = vunpack.c.l.bf16 %v37
    %v87 = vunpack.c.h.bf16 %v37
    %v88 = vunpack.c.l.bf16 %v38
    %v89 = vunpack.c.l.bf16 %v39
    %v90 = vunpack.c.h.bf16 %v39
    %v91 = vunpack.c.l.bf16 %v40
    %v92 = vunpack.c.h.bf16 %v40
    %v93 = vunpack.c.l.bf16 %v41
    %v94 = vunpack.c.l.bf16 %v42
    %v95 = vunpack.c.h.bf16 %v42
    %v96 = vunpack.c.l.bf16 %v43
    %v97 = vunpack.c.h.bf16 %v43
    %v98 = vunpack.c.l.bf16 %v44
    %v99 = vunpack.c.l.bf16 %v45
    %v100 = vunpack.c.h.bf16 %v45
    %v101 = vunpack.c.l.bf16 %v46
    %v102 = vunpack.c.h.bf16 %v46
    %v103 = vunpack.c.l.bf16 %v47
    %v104 = vunpack.c.l.bf16 %v48
    %v105 = vunpack.c.h.bf16 %v48
    %v106 = vunpack.c.l.bf16 %v49
    %v107 = vunpack.c.h.bf16 %v49
    %v108 = vunpack.c.l.bf16 %v50
    %v109 = vunpack.c.l.bf16 %v51
    %v110 = vunpack.c.h.bf16 %v51
    %v111 = vunpack.c.l.bf16 %v52
    %v112 = vunpack.c.h.bf16 %v52
    %v113 = vunpack.c.l.bf16 %v53
    %v114 = vunpack.c.l.bf16 %v54
    %v115 = vunpack.c.h.bf16 %v54
    %v116 = vunpack.c.l.bf16 %v55
    %v117 = vunpack.c.h.bf16 %v55
    %v118 = vunpack.c.l.bf16 %v56
    %v119 = vunpack.c.l.bf16 %v57
    %v120 = vunpack.c.h.bf16 %v57
    %v121 = vunpack.c.l.bf16 %v58
    %v122 = vunpack.c.h.bf16 %v58
    %v123 = vunpack.c.l.bf16 %v59
    %v124 = vunpack.c.l.bf16 %v60
    %v125 = vunpack.c.h.bf16 %v60
    %v126 = vunpack.c.l.bf16 %v61
    %v127 = vunpack.c.h.bf16 %v61
    %v128 = vunpack.c.l.bf16 %v62
    %v129 = vunpack.c.l.bf16 %v63
    %v130 = vunpack.c.h.bf16 %v63
    %v131 = vunpack.c.l.bf16 %v64
    %v132 = vunpack.c.h.bf16 %v64
    %v133 = vunpack.c.l.bf16 %v65
    %v134 = vunpack.c.l.bf16 %v66
    %v135 = vunpack.c.h.bf16 %v66
    %v136 = vunpack.c.l.bf16 %v67
    %v137 = vunpack.c.h.bf16 %v67
    %v138 = vunpack.c.l.bf16 %v68
    %v139 = vunpack.c.l.bf16 %v69
    %v140 = vunpack.c.h.bf16 %v69
    %v141 = vunpack.c.l.bf16 %v70
    %v142 = vunpack.c.h.bf16 %v70
    %v143 = vunpack.c.l.bf16 %v71
    %v144 = vunpack.c.l.bf16 %v72
    %v145 = vunpack.c.h.bf16 %v72
    %v146 = vunpack.c.l.bf16 %v73
    %v147 = vunpack.c.h.bf16 %v73
    %v148 = vunpack.c.l.bf16 %v74
    %v149 = vunpack.c.l.bf16 %v75
    %v150 = vunpack.c.h.bf16 %v75
    %v151 = vunpack.c.l.bf16 %v76
    %v152 = vunpack.c.h.bf16 %v76
    %v153 = vunpack.c.l.bf16 %v77
    %v154 = vunpack.c.l.bf16 %v78
    %v155 = vunpack.c.h.bf16 %v78
    %v156 = vunpack.c.l.bf16 %v79
    %v157 = vunpack.c.h.bf16 %v79
    %v158 = vunpack.c.l.bf16 %v80
    %v159 = vunpack.c.l.bf16 %v81
    %v160 = vunpack.c.h.bf16 %v81
    %v161 = vunpack.c.l.bf16 %v82
    %v162 = vunpack.c.h.bf16 %v82
    %v163 = vunpack.c.l.bf16 %v83
    %v164 = vadd.f32 %v84, %v124
    %v165 = vadd.f32 %v85, %v125
    %v166 = vadd.f32 %v86, %v126
    %v167 = vadd.f32 %v87, %v127
    %v168 = vadd.f32 %v88, %v128
    %v169 = vadd.f32 %v89, %v129
    %v170 = vadd.f32 %v90, %v130
    %v171 = vadd.f32 %v91, %v131
    %v172 = vadd.f32 %v92, %v132
    %v173 = vadd.f32 %v93, %v133
    %v174 = vadd.f32 %v94, %v134
    %v175 = vadd.f32 %v95, %v135
    %v176 = vadd.f32 %v96, %v136
    %v177 = vadd.f32 %v97, %v137
    %v178 = vadd.f32 %v98, %v138
    %v179 = vadd.f32 %v99, %v139
    %v180 = vadd.f32 %v100, %v140
    %v181 = vadd.f32 %v101, %v141
    %v182 = vadd.f32 %v102, %v142
    %v183 = vadd.f32 %v103, %v143
    %v184 = vadd.f32 %v104, %v144
    %v185 = vadd.f32 %v105, %v145
    %v186 = vadd.f32 %v106, %v146
    %v187 = vadd.f32 %v107, %v147
    %v188 = vadd.f32 %v108, %v148
    %v189 = vadd.f32 %v109, %v149
    %v190 = vadd.f32 %v110, %v150
    %v191 = vadd.f32 %v111, %v151
    %v192 = vadd.f32 %v112, %v152
    %v193 = vadd.f32 %v113, %v153
    %v194 = vadd.f32 %v114, %v154
    %v195 = vadd.f32 %v115, %v155
    %v196 = vadd.f32 %v116, %v156
    %v197 = vadd.f32 %v117, %v157
    %v198 = vadd.f32 %v118, %v158
    %v199 = vadd.f32 %v119, %v159
    %v200 = vadd.f32 %v120, %v160
    %v201 = vadd.f32 %v121, %v161
    %v202 = vadd.f32 %v122, %v162
    %v203 = vadd.f32 %v123, %v163
    %v204 = vpack.c.bf16 %v169, %v164
    %v205 = vpack.c.bf16 %v170, %v165
    %v206 = vpack.c.bf16 %v171, %v166
    %v207 = vpack.c.bf16 %v172, %v167
    %v208 = vpack.c.bf16 %v173, %v168
    %v209 = vpack.c.bf16 %v179, %v174
    %v210 = vpack.c.bf16 %v180, %v175
    %v211 = vpack.c.bf16 %v181, %v176
    %v212 = vpack.c.bf16 %v182, %v177
    %v213 = vpack.c.bf16 %v183, %v178
    %v214 = vpack.c.bf16 %v189, %v184
    %v215 = vpack.c.bf16 %v190, %v185
    %v216 = vpack.c.bf16 %v191, %v186
    %v217 = vpack.c.bf16 %v192, %v187
    %v218 = vpack.c.bf16 %v193, %v188
    %v219 = vpack.c.bf16 %v199, %v194
    %v220 = vpack.c.bf16 %v200, %v195
    %v221 = vpack.c.bf16 %v201, %v196
    %v222 = vpack.c.bf16 %v202, %v197
    %v223 = vpack.c.bf16 %v203, %v198
    %v224 = vld [vmem:[#allocation2] sm:$0xff]
    %v225 = vld [vmem:[#allocation2 + $0x8] sm:$0xff]
    %v226 = vld [vmem:[#allocation2 + $0x10] sm:$0xff]
    %v227 = vld [vmem:[#allocation2 + $0x18] sm:$0xff]
    %v228 = vld [vmem:[#allocation2 + $0x20] sm:$0xff]
    %v229 = vld [vmem:[#allocation2 + $0x28] sm:$0xff]
    %v230 = vld [vmem:[#allocation2 + $0x30] sm:$0xff]
    %v231 = vld [vmem:[#allocation2 + $0x38] sm:$0xff]
    %v232 = vld [vmem:[%s2] sm:$0xf]
    %v233 = vld [vmem:[%s2 + $0x4] sm:$0xf]
    %v234 = vld [vmem:[%s2 + $0x8] sm:$0xf]
    %v235 = vld [vmem:[%s2 + $0xc] sm:$0xf]
    %v236 = vld [vmem:[%s2 + $0x10] sm:$0xf]
    %v237 = vld [vmem:[%s2 + $0x14] sm:$0xf]
    %v238 = vld [vmem:[%s2 + $0x18] sm:$0xf]
    %v239 = vld [vmem:[%s2 + $0x1c] sm:$0xf]
    %v240 = vld [vmem:[%s2 + $0x20] sm:$0xf]
    %v241 = vld [vmem:[%s2 + $0x24] sm:$0xf]
    %v242 = vld [vmem:[%s2 + $0x28] sm:$0xf]
    %v243 = vld [vmem:[%s2 + $0x2c] sm:$0xf]
    %v244 = vld [vmem:[%s2 + $0x30] sm:$0xf]
    %v245 = vld [vmem:[%s2 + $0x34] sm:$0xf]
    %v246 = vld [vmem:[%s2 + $0x38] sm:$0xf]
    %v247 = vld [vmem:[%s2 + $0x3c] sm:$0xf]
    %v248 = vld [vmem:[%s2 + $0x40] sm:$0xf]
    %v249 = vld [vmem:[%s2 + $0x44] sm:$0xf]
    %v250 = vld [vmem:[%s2 + $0x48] sm:$0xf]
    %v251 = vld [vmem:[%s2 + $0x4c] sm:$0xf]
    %v252 = vld [vmem:[%s2 + $0x50] sm:$0xf]
    %v253 = vld [vmem:[%s2 + $0x54] sm:$0xf]
    %v254 = vld [vmem:[%s2 + $0x58] sm:$0xf]
    %v255 = vld [vmem:[%s2 + $0x5c] sm:$0xf]
    %v256 = vld [vmem:[%s2 + $0x60] sm:$0xf]
    %v257 = vld [vmem:[%s2 + $0x64] sm:$0xf]
    %v258 = vld [vmem:[%s2 + $0x68] sm:$0xf]
    %v259 = vld [vmem:[%s2 + $0x6c] sm:$0xf]
    %v260 = vld [vmem:[%s2 + $0x70] sm:$0xf]
    %v261 = vld [vmem:[%s2 + $0x74] sm:$0xf]
    %v262 = vld [vmem:[%s2 + $0x78] sm:$0xf]
    %v263 = vld [vmem:[%s2 + $0x7c] sm:$0xf]
    %v264 = vld [vmem:[%s2 + $0x80] sm:$0xf]
    %v265 = vld [vmem:[%s2 + $0x84] sm:$0xf]
    %v266 = vld [vmem:[%s2 + $0x88] sm:$0xf]
    %v267 = vld [vmem:[%s2 + $0x8c] sm:$0xf]
    %v268 = vld [vmem:[%s2 + $0x90] sm:$0xf]
    %v269 = vld [vmem:[%s2 + $0x94] sm:$0xf]
    %v270 = vld [vmem:[%s2 + $0x98] sm:$0xf]
    %v271 = vld [vmem:[%s2 + $0x9c] sm:$0xf]
    %v272 = vld [vmem:[%s2 + $0xa0] sm:$0xf]
    %v273 = vld [vmem:[%s2 + $0xa4] sm:$0xf]
    %v274 = vld [vmem:[%s2 + $0xa8] sm:$0xf]
    %v275 = vld [vmem:[%s2 + $0xac] sm:$0xf]
    %v276 = vld [vmem:[%s2 + $0xb0] sm:$0xf]
    %v277 = vld [vmem:[%s2 + $0xb4] sm:$0xf]
    %v278 = vld [vmem:[%s2 + $0xb8] sm:$0xf]
    %v279 = vld [vmem:[%s2 + $0xbc] sm:$0xf]
    %v280 = vld [vmem:[%s2 + $0xc0] sm:$0xf]
    %v281 = vld [vmem:[%s2 + $0xc4] sm:$0xf]
    %v282 = vld [vmem:[%s2 + $0xc8] sm:$0xf]
    %v283 = vld [vmem:[%s2 + $0xcc] sm:$0xf]
    %v284 = vld [vmem:[%s2 + $0xd0] sm:$0xf]
    %v285 = vld [vmem:[%s2 + $0xd4] sm:$0xf]
    %v286 = vld [vmem:[%s2 + $0xd8] sm:$0xf]
    %v287 = vld [vmem:[%s2 + $0xdc] sm:$0xf]
    %v288 = vld [vmem:[%s2 + $0xe0] sm:$0xf]
    %v289 = vld [vmem:[%s2 + $0xe4] sm:$0xf]
    %v290 = vld [vmem:[%s2 + $0xe8] sm:$0xf]
    %v291 = vld [vmem:[%s2 + $0xec] sm:$0xf]
    %v292 = vld [vmem:[%s2 + $0xf0] sm:$0xf]
    %v293 = vld [vmem:[%s2 + $0xf4] sm:$0xf]
    %v294 = vld [vmem:[%s2 + $0xf8] sm:$0xf]
    %v295 = vld [vmem:[%s2 + $0xfc] sm:$0xf]
    %v296 = vld [vmem:[%s2 + $0x100] sm:$0xf]
    %v297 = vld [vmem:[%s2 + $0x104] sm:$0xf]
    %v298 = vld [vmem:[%s2 + $0x108] sm:$0xf]
    %v299 = vld [vmem:[%s2 + $0x10c] sm:$0xf]
    %v300 = vld [vmem:[%s2 + $0x110] sm:$0xf]
    %v301 = vld [vmem:[%s2 + $0x114] sm:$0xf]
    %v302 = vld [vmem:[%s2 + $0x118] sm:$0xf]
    %v303 = vld [vmem:[%s2 + $0x11c] sm:$0xf]
    %v304 = vld [vmem:[%s2 + $0x120] sm:$0xf]
    %v305 = vld [vmem:[%s2 + $0x124] sm:$0xf]
    %v306 = vld [vmem:[%s2 + $0x128] sm:$0xf]
    %v307 = vld [vmem:[%s2 + $0x12c] sm:$0xf]
    %v308 = vld [vmem:[%s2 + $0x130] sm:$0xf]
    %v309 = vld [vmem:[%s2 + $0x134] sm:$0xf]
    %v310 = vld [vmem:[%s2 + $0x138] sm:$0xf]
    %v311 = vld [vmem:[%s2 + $0x13c] sm:$0xf]
    %v392 = vunpack.c.l.b16 %v232
    %v393 = vunpack.c.l.b16 %v233
    %v394 = vunpack.c.l.b16 %v234
    %v395 = vunpack.c.l.b16 %v235
    %v396 = vunpack.c.l.b16 %v236
    %v397 = vunpack.c.l.b16 %v237
    %v398 = vunpack.c.l.b16 %v238
    %v399 = vunpack.c.l.b16 %v239
    %v400 = vunpack.c.l.b16 %v240
    %v401 = vunpack.c.l.b16 %v241
    %v402 = vunpack.c.l.b16 %v242
    %v403 = vunpack.c.l.b16 %v243
    %v404 = vunpack.c.l.b16 %v244
    %v405 = vunpack.c.l.b16 %v245
    %v406 = vunpack.c.l.b16 %v246
    %v407 = vunpack.c.l.b16 %v247
    %v408 = vunpack.c.l.b16 %v248
    %v409 = vunpack.c.l.b16 %v249
    %v410 = vunpack.c.l.b16 %v250
    %v411 = vunpack.c.l.b16 %v251
    %v412 = vunpack.c.l.b16 %v252
    %v413 = vunpack.c.l.b16 %v253
    %v414 = vunpack.c.l.b16 %v254
    %v415 = vunpack.c.l.b16 %v255
    %v416 = vunpack.c.l.b16 %v256
    %v417 = vunpack.c.l.b16 %v257
    %v418 = vunpack.c.l.b16 %v258
    %v419 = vunpack.c.l.b16 %v259
    %v420 = vunpack.c.l.b16 %v260
    %v421 = vunpack.c.l.b16 %v261
    %v422 = vunpack.c.l.b16 %v262
    %v423 = vunpack.c.l.b16 %v263
    %v424 = vunpack.c.l.b16 %v264
    %v425 = vunpack.c.l.b16 %v265
    %v426 = vunpack.c.l.b16 %v266
    %v427 = vunpack.c.l.b16 %v267
    %v428 = vunpack.c.l.b16 %v268
    %v429 = vunpack.c.l.b16 %v269
    %v430 = vunpack.c.l.b16 %v270
    %v431 = vunpack.c.l.b16 %v271
    %v432 = vunpack.c.l.b16 %v272
    %v433 = vunpack.c.l.b16 %v273
    %v434 = vunpack.c.l.b16 %v274
    %v435 = vunpack.c.l.b16 %v275
    %v436 = vunpack.c.l.b16 %v276
    %v437 = vunpack.c.l.b16 %v277
    %v438 = vunpack.c.l.b16 %v278
    %v439 = vunpack.c.l.b16 %v279
    %v440 = vunpack.c.l.b16 %v280
    %v441 = vunpack.c.l.b16 %v281
    %v442 = vunpack.c.l.b16 %v282
    %v443 = vunpack.c.l.b16 %v283
    %v444 = vunpack.c.l.b16 %v284
    %v445 = vunpack.c.l.b16 %v285
    %v446 = vunpack.c.l.b16 %v286
    %v447 = vunpack.c.l.b16 %v287
    %v448 = vunpack.c.l.b16 %v288
    %v449 = vunpack.c.l.b16 %v289
    %v450 = vunpack.c.l.b16 %v290
    %v451 = vunpack.c.l.b16 %v291
    %v452 = vunpack.c.l.b16 %v292
    %v453 = vunpack.c.l.b16 %v293
    %v454 = vunpack.c.l.b16 %v294
    %v455 = vunpack.c.l.b16 %v295
    %v456 = vunpack.c.l.b16 %v296
    %v457 = vunpack.c.l.b16 %v297
    %v458 = vunpack.c.l.b16 %v298
    %v459 = vunpack.c.l.b16 %v299
    %v460 = vunpack.c.l.b16 %v300
    %v461 = vunpack.c.l.b16 %v301
    %v462 = vunpack.c.l.b16 %v302
    %v463 = vunpack.c.l.b16 %v303
    %v464 = vunpack.c.l.b16 %v304
    %v465 = vunpack.c.l.b16 %v305
    %v466 = vunpack.c.l.b16 %v306
    %v467 = vunpack.c.l.b16 %v307
    %v468 = vunpack.c.l.b16 %v308
    %v469 = vunpack.c.l.b16 %v309
    %v470 = vunpack.c.l.b16 %v310
    %v471 = vunpack.c.l.b16 %v311
    %v472 = vpack.c.b16 %v393, %v392
    %v473 = vpack.c.b16 %v395, %v394
    %v474 = vpack.c.b16 %v397, %v396
    %v475 = vpack.c.b16 %v399, %v398
    %v476 = vpack.c.b16 %v401, %v400
    %v477 = vpack.c.b16 %v403, %v402
    %v478 = vpack.c.b16 %v405, %v404
    %v479 = vpack.c.b16 %v407, %v406
    %v480 = vpack.c.b16 %v409, %v408
    %v481 = vpack.c.b16 %v411, %v410
    %v482 = vpack.c.b16 %v413, %v412
    %v483 = vpack.c.b16 %v415, %v414
    %v484 = vpack.c.b16 %v417, %v416
    %v485 = vpack.c.b16 %v419, %v418
    %v486 = vpack.c.b16 %v421, %v420
    %v487 = vpack.c.b16 %v423, %v422
    %v488 = vpack.c.b16 %v425, %v424
    %v489 = vpack.c.b16 %v427, %v426
    %v490 = vpack.c.b16 %v429, %v428
    %v491 = vpack.c.b16 %v431, %v430
    %v492 = vpack.c.b16 %v433, %v432
    %v493 = vpack.c.b16 %v435, %v434
    %v494 = vpack.c.b16 %v437, %v436
    %v495 = vpack.c.b16 %v439, %v438
    %v496 = vpack.c.b16 %v441, %v440
    %v497 = vpack.c.b16 %v443, %v442
    %v498 = vpack.c.b16 %v445, %v444
    %v499 = vpack.c.b16 %v447, %v446
    %v500 = vpack.c.b16 %v449, %v448
    %v501 = vpack.c.b16 %v451, %v450
    %v502 = vpack.c.b16 %v453, %v452
    %v503 = vpack.c.b16 %v455, %v454
    %v504 = vpack.c.b16 %v457, %v456
    %v505 = vpack.c.b16 %v459, %v458
    %v506 = vpack.c.b16 %v461, %v460
    %v507 = vpack.c.b16 %v463, %v462
    %v508 = vpack.c.b16 %v465, %v464
    %v509 = vpack.c.b16 %v467, %v466
    %v510 = vpack.c.b16 %v469, %v468
    %v511 = vpack.c.b16 %v471, %v470
    %552 = vmatpush.bf16.msra.mxu0 %v479
    %553 = vmatpush.bf16.msra.mxu0 %v478
    %554 = vmatpush.bf16.msra.mxu0 %v477
    %555 = vmatpush.bf16.msra.mxu0 %v476
    %556 = vmatpush.bf16.msra.mxu0 %v475
    %557 = vmatpush.bf16.msra.mxu0 %v474
    %558 = vmatpush.bf16.msra.mxu0 %v473
    %559 = vmatpush.bf16.msra.mxu0 %v472
    %560 = vmatmul.bf16.gmra.mxu0 %v204
    %v561 = vpop.f32.mrf.mxu0
    %v562 = vadd.f32 0.0, %v561
    %v563 = vpop.f32.mrf.mxu0
    %v564 = vadd.f32 0.0, %v563
    %565 = vmatmul.bf16.gmra.mxu0 %v209
    %v566 = vpop.f32.mrf.mxu0
    %v567 = vadd.f32 0.0, %v566
    %v568 = vpop.f32.mrf.mxu0
    %v569 = vadd.f32 0.0, %v568
    %570 = vmatmul.bf16.gmra.mxu0 %v214
    %v571 = vpop.f32.mrf.mxu0
    %v572 = vadd.f32 0.0, %v571
    %v573 = vpop.f32.mrf.mxu0
    %v574 = vadd.f32 0.0, %v573
    %575 = vmatmul.bf16.gmra.mxu0 %v219
    %v576 = vpop.f32.mrf.mxu0
    %v577 = vadd.f32 0.0, %v576
    %v578 = vpop.f32.mrf.mxu0
    %v579 = vadd.f32 0.0, %v578
    %580 = vdwg.mxu0
    %581 = vmatpush.bf16.msra.mxu0 %v487
    %582 = vmatpush.bf16.msra.mxu0 %v486
    %583 = vmatpush.bf16.msra.mxu0 %v485
    %584 = vmatpush.bf16.msra.mxu0 %v484
    %585 = vmatpush.bf16.msra.mxu0 %v483
    %586 = vmatpush.bf16.msra.mxu0 %v482
    %587 = vmatpush.bf16.msra.mxu0 %v481
    %588 = vmatpush.bf16.msra.mxu0 %v480
    %589 = vmatmul.bf16.gmra.mxu0 %v205
    %v590 = vpop.f32.mrf.mxu0
    %v591 = vadd.f32 %v562, %v590
    %v592 = vpop.f32.mrf.mxu0
    %v593 = vadd.f32 %v564, %v592
    %594 = vmatmul.bf16.gmra.mxu0 %v210
    %v595 = vpop.f32.mrf.mxu0
    %v596 = vadd.f32 %v567, %v595
    %v597 = vpop.f32.mrf.mxu0
    %v598 = vadd.f32 %v569, %v597
    %599 = vmatmul.bf16.gmra.mxu0 %v215
    %v600 = vpop.f32.mrf.mxu0
    %v601 = vadd.f32 %v572, %v600
    %v602 = vpop.f32.mrf.mxu0
    %v603 = vadd.f32 %v574, %v602
    %604 = vmatmul.bf16.gmra.mxu0 %v220
    %v605 = vpop.f32.mrf.mxu0
    %v606 = vadd.f32 %v577, %v605
    %v607 = vpop.f32.mrf.mxu0
    %v608 = vadd.f32 %v579, %v607
    %609 = vdwg.mxu0
    %610 = vmatpush.bf16.msra.mxu0 %v495
    %611 = vmatpush.bf16.msra.mxu0 %v494
    %612 = vmatpush.bf16.msra.mxu0 %v493
    %613 = vmatpush.bf16.msra.mxu0 %v492
    %614 = vmatpush.bf16.msra.mxu0 %v491
    %615 = vmatpush.bf16.msra.mxu0 %v490
    %616 = vmatpush.bf16.msra.mxu0 %v489
    %617 = vmatpush.bf16.msra.mxu0 %v488
    %618 = vmatmul.bf16.gmra.mxu0 %v206
    %v619 = vpop.f32.mrf.mxu0
    %v620 = vadd.f32 %v591, %v619
    %v621 = vpop.f32.mrf.mxu0
    %v622 = vadd.f32 %v593, %v621
    %623 = vmatmul.bf16.gmra.mxu0 %v211
    %v624 = vpop.f32.mrf.mxu0
    %v625 = vadd.f32 %v596, %v624
    %v626 = vpop.f32.mrf.mxu0
    %v627 = vadd.f32 %v598, %v626
    %628 = vmatmul.bf16.gmra.mxu0 %v216
    %v629 = vpop.f32.mrf.mxu0
    %v630 = vadd.f32 %v601, %v629
    %v631 = vpop.f32.mrf.mxu0
    %v632 = vadd.f32 %v603, %v631
    %633 = vmatmul.bf16.gmra.mxu0 %v221
    %v634 = vpop.f32.mrf.mxu0
    %v635 = vadd.f32 %v606, %v634
    %v636 = vpop.f32.mrf.mxu0
    %v637 = vadd.f32 %v608, %v636
    %638 = vdwg.mxu0
    %639 = vmatpush.bf16.msra.mxu0 %v503
    %640 = vmatpush.bf16.msra.mxu0 %v502
    %641 = vmatpush.bf16.msra.mxu0 %v501
    %642 = vmatpush.bf16.msra.mxu0 %v500
    %643 = vmatpush.bf16.msra.mxu0 %v499
    %644 = vmatpush.bf16.msra.mxu0 %v498
    %645 = vmatpush.bf16.msra.mxu0 %v497
    %646 = vmatpush.bf16.msra.mxu0 %v496
    %647 = vmatmul.bf16.gmra.mxu0 %v207
    %v648 = vpop.f32.mrf.mxu0
    %v649 = vadd.f32 %v620, %v648
    %v650 = vpop.f32.mrf.mxu0
    %v651 = vadd.f32 %v622, %v650
    %652 = vmatmul.bf16.gmra.mxu0 %v212
    %v653 = vpop.f32.mrf.mxu0
    %v654 = vadd.f32 %v625, %v653
    %v655 = vpop.f32.mrf.mxu0
    %v656 = vadd.f32 %v627, %v655
    %657 = vmatmul.bf16.gmra.mxu0 %v217
    %v658 = vpop.f32.mrf.mxu0
    %v659 = vadd.f32 %v630, %v658
    %v660 = vpop.f32.mrf.mxu0
    %v661 = vadd.f32 %v632, %v660
    %662 = vmatmul.bf16.gmra.mxu0 %v222
    %v663 = vpop.f32.mrf.mxu0
    %v664 = vadd.f32 %v635, %v663
    %v665 = vpop.f32.mrf.mxu0
    %v666 = vadd.f32 %v637, %v665
    %667 = vdwg.mxu0
    %668 = vmatpush.bf16.msra.mxu0 %v511
    %669 = vmatpush.bf16.msra.mxu0 %v510
    %670 = vmatpush.bf16.msra.mxu0 %v509
    %671 = vmatpush.bf16.msra.mxu0 %v508
    %672 = vmatpush.bf16.msra.mxu0 %v507
    %673 = vmatpush.bf16.msra.mxu0 %v506
    %674 = vmatpush.bf16.msra.mxu0 %v505
    %675 = vmatpush.bf16.msra.mxu0 %v504
    %676 = vmatmul.bf16.gmra.mxu0 %v208
    %v677 = vpop.f32.mrf.mxu0
    %v678 = vadd.f32 %v649, %v677
    %v679 = vpop.f32.mrf.mxu0
    %v680 = vadd.f32 %v651, %v679
    %681 = vmatmul.bf16.gmra.mxu0 %v213
    %v682 = vpop.f32.mrf.mxu0
    %v683 = vadd.f32 %v654, %v682
    %v684 = vpop.f32.mrf.mxu0
    %v685 = vadd.f32 %v656, %v684
    %686 = vmatmul.bf16.gmra.mxu0 %v218
    %v687 = vpop.f32.mrf.mxu0
    %v688 = vadd.f32 %v659, %v687
    %v689 = vpop.f32.mrf.mxu0
    %v690 = vadd.f32 %v661, %v689
    %691 = vmatmul.bf16.gmra.mxu0 %v223
    %v692 = vpop.f32.mrf.mxu0
    %v693 = vadd.f32 %v664, %v692
    %v694 = vpop.f32.mrf.mxu0
    %v695 = vadd.f32 %v666, %v694
    %696 = vdwg.mxu0
    %v697 = vadd.f32 %v224, %v678
    %v698 = vadd.f32 %v225, %v680
    %v699 = vadd.f32 %v226, %v683
    %v700 = vadd.f32 %v227, %v685
    %v701 = vadd.f32 %v228, %v688
    %v702 = vadd.f32 %v229, %v690
    %v703 = vadd.f32 %v230, %v693
    %v704 = vadd.f32 %v231, %v695
    %705 = vst [vmem:[#allocation2] sm:$0xff] %v697
    %706 = vst [vmem:[#allocation2 + $0x8] sm:$0xff] %v698
    %707 = vst [vmem:[#allocation2 + $0x10] sm:$0xff] %v699
    %708 = vst [vmem:[#allocation2 + $0x18] sm:$0xff] %v700
    %709 = vst [vmem:[#allocation2 + $0x20] sm:$0xff] %v701
    %710 = vst [vmem:[#allocation2 + $0x28] sm:$0xff] %v702
    %711 = vst [vmem:[#allocation2 + $0x30] sm:$0xff] %v703
    %712 = vst [vmem:[#allocation2 + $0x38] sm:$0xff] %v704
    // Predicated region
    $region30: #{fine_tuning_forward.7} parent=1 // pred_check
      %p713 = pneg %p24
    $region31: #{fine_tuning_forward.7} parent=1 // pred_check_branch
      %715 = sbr.rel (%p713) target = $region33
    $region32: #{fine_tuning_forward.7} parent=1 // pred_region
      %v716 = vld [vmem:[#allocation2] sm:$0xff]
      %v717 = vld [vmem:[#allocation2 + $0x8] sm:$0xff]
      %v718 = vld [vmem:[#allocation2 + $0x10] sm:$0xff]
      %v719 = vld [vmem:[#allocation2 + $0x18] sm:$0xff]
      %v720 = vld [vmem:[#allocation2 + $0x20] sm:$0xff]
      %v721 = vld [vmem:[#allocation2 + $0x28] sm:$0xff]
      %v722 = vld [vmem:[#allocation2 + $0x30] sm:$0xff]
      %v723 = vld [vmem:[#allocation2 + $0x38] sm:$0xff]
      %v724 = vld [vmem:[%s3] sm:$0x1]
      %v726 = vperm.slane %v724, 0
      %v728 = vadd.f32 %v716, %v726
      %v729 = vadd.f32 %v717, %v726
      %v730 = vadd.f32 %v718, %v726
      %v731 = vadd.f32 %v719, %v726
      %v732 = vadd.f32 %v720, %v726
      %v733 = vadd.f32 %v721, %v726
      %v734 = vadd.f32 %v722, %v726
      %v735 = vadd.f32 %v723, %v726
      %v736 = vmax.f32 %v728, 0.0
      %v737 = vmax.f32 %v729, 0.0
      %v738 = vmax.f32 %v730, 0.0
      %v739 = vmax.f32 %v731, 0.0
      %v740 = vmax.f32 %v732, 0.0
      %v741 = vmax.f32 %v733, 0.0
      %v742 = vmax.f32 %v734, 0.0
      %v743 = vmax.f32 %v735, 0.0
      %v744 = vpack.c.bf16 %v737, %v736
      %v745 = vpack.c.bf16 %v739, %v738
      %v746 = vpack.c.bf16 %v741, %v740
      %v747 = vpack.c.bf16 %v743, %v742
      %v748 = vld [vmem:[%s4] sm:$0xf]
      %v749 = vld [vmem:[%s4 + $0x4] sm:$0xf]
      %v750 = vld [vmem:[%s4 + $0x8] sm:$0xf]
      %v751 = vld [vmem:[%s4 + $0xc] sm:$0xf]
      %v752 = vld [vmem:[%s4 + $0x10] sm:$0xf]
      %v753 = vld [vmem:[%s4 + $0x14] sm:$0xf]
      %v754 = vld [vmem:[%s4 + $0x18] sm:$0xf]
      %v755 = vld [vmem:[%s4 + $0x1c] sm:$0xf]
      %v756 = vld [vmem:[%s4 + $0x20] sm:$0xf]
      %v757 = vld [vmem:[%s4 + $0x24] sm:$0xf]
      %v758 = vld [vmem:[%s4 + $0x28] sm:$0xf]
      %v759 = vld [vmem:[%s4 + $0x2c] sm:$0xf]
      %v760 = vld [vmem:[%s4 + $0x30] sm:$0xf]
      %v761 = vld [vmem:[%s4 + $0x34] sm:$0xf]
      %v762 = vld [vmem:[%s4 + $0x38] sm:$0xf]
      %v763 = vld [vmem:[%s4 + $0x3c] sm:$0xf]
      %v764 = vld [vmem:[%s5] sm:$0x1]
      %v766 = vperm.slane %v764, 0
      %v784 = vunpack.c.l.b16 %v748
      %v785 = vunpack.c.l.b16 %v749
      %v786 = vunpack.c.l.b16 %v750
      %v787 = vunpack.c.l.b16 %v751
      %v788 = vunpack.c.l.b16 %v752
      %v789 = vunpack.c.l.b16 %v753
      %v790 = vunpack.c.l.b16 %v754
      %v791 = vunpack.c.l.b16 %v755
      %v792 = vunpack.c.l.b16 %v756
      %v793 = vunpack.c.l.b16 %v757
      %v794 = vunpack.c.l.b16 %v758
      %v795 = vunpack.c.l.b16 %v759
      %v796 = vunpack.c.l.b16 %v760
      %v797 = vunpack.c.l.b16 %v761
      %v798 = vunpack.c.l.b16 %v762
      %v799 = vunpack.c.l.b16 %v763
      %v800 = vpack.c.b16 %v785, %v784
      %v801 = vpack.c.b16 %v787, %v786
      %v802 = vpack.c.b16 %v789, %v788
      %v803 = vpack.c.b16 %v791, %v790
      %v804 = vpack.c.b16 %v793, %v792
      %v805 = vpack.c.b16 %v795, %v794
      %v806 = vpack.c.b16 %v797, %v796
      %v807 = vpack.c.b16 %v799, %v798
      %816 = vmatpush.bf16.msra.mxu0 %v807
      %817 = vmatpush.bf16.msra.mxu0 %v806
      %818 = vmatpush.bf16.msra.mxu0 %v805
      %819 = vmatpush.bf16.msra.mxu0 %v804
      %820 = vmatpush.bf16.msra.mxu0 %v803
      %821 = vmatpush.bf16.msra.mxu0 %v802
      %822 = vmatpush.bf16.msra.mxu0 %v801
      %823 = vmatpush.bf16.msra.mxu0 %v800
      %824 = vmatmul.bf16.gmra.mxu0 %v744
      %v825 = vpop.f32.mrf.mxu0
      %v826 = vadd.f32 %v766, %v825
      %v827 = vpop.f32.mrf.mxu0
      %v828 = vadd.f32 %v766, %v827
      %829 = vmatmul.bf16.gmra.mxu0 %v745
      %v830 = vpop.f32.mrf.mxu0
      %v831 = vadd.f32 %v766, %v830
      %v832 = vpop.f32.mrf.mxu0
      %v833 = vadd.f32 %v766, %v832
      %834 = vmatmul.bf16.gmra.mxu0 %v746
      %v835 = vpop.f32.mrf.mxu0
      %v836 = vadd.f32 %v766, %v835
      %v837 = vpop.f32.mrf.mxu0
      %v838 = vadd.f32 %v766, %v837
      %839 = vmatmul.bf16.gmra.mxu0 %v747
      %v840 = vpop.f32.mrf.mxu0
      %v841 = vadd.f32 %v766, %v840
      %v842 = vpop.f32.mrf.mxu0
      %v843 = vadd.f32 %v766, %v842
      %844 = vdwg.mxu0
      %845 = vst [vmem:[#allocation3] sm:$0xff] %v826
      %846 = vst [vmem:[#allocation3 + $0x8] sm:$0xff] %v828
      %847 = vst [vmem:[#allocation3 + $0x10] sm:$0xff] %v831
      %848 = vst [vmem:[#allocation3 + $0x18] sm:$0xff] %v833
      %849 = vst [vmem:[#allocation3 + $0x20] sm:$0xff] %v836
      %850 = vst [vmem:[#allocation3 + $0x28] sm:$0xff] %v838
      %851 = vst [vmem:[#allocation3 + $0x30] sm:$0xff] %v841
      %852 = vst [vmem:[#allocation3 + $0x38] sm:$0xff] %v843
    $region33: #{fine_tuning_forward.7} parent=1 // pred_fallthru
      _
    // Predicated region
    $region34: #{fine_tuning_forward.7} parent=1 // pred_check
      _
    $region35: #{fine_tuning_forward.7} parent=1 // pred_check_branch
      %854 = sbr.rel (0) target = $region37
    $region36: #{fine_tuning_forward.7} parent=1 // pred_region
      %856 = vsyncadd [#allocation4], 0
      %s857 = sshll.u32 [#allocation3], 4
      %s858 = int_to_ptr.vmem [resolvable:$true] %s857
      %s859 = sshll.u32 %s6, 4
      %s860 = int_to_ptr.hbm [resolvable:$true] %s859
      %865 = dma.vmem_to_hbm [thread:$0]  %s858, 1024, %s860, [#allocation4], 128, 128, 8
    $region37: #{fine_tuning_forward.7} parent=1 // pred_fallthru
      _
    // Predicated region
    $region38: #{fine_tuning_forward.7} parent=1 // pred_check
      _
    $region39: #{fine_tuning_forward.7} parent=1 // pred_check_branch
      %867 = sbr.rel (0) target = $region41
    $region40: #{fine_tuning_forward.7} parent=1 // pred_region
      %869 = dma.done [#allocation4], 1024
    $region41: #{fine_tuning_forward.7} parent=1 // pred_fallthru
      _
    %870 = vsyncpa [#allocation4], 1

</llo_original>
